<compile_context>
chip_gen: v6e
topology: v6e:2x2x1
jax: 0.10.0
libtpu: 0.0.40
codegen_flags: <defaults>
</compile_context>

<pallas_src>
import numpy as np
import jax
import jax.numpy as jnp
from jax.experimental import pallas as pl
from jax.experimental.pallas import tpu as pltpu

# ---- synthetic (small) SMPL sizes -------------------------------------------
B = 2          # batch
V = 1900       # vertex count (real hres SMPL: 27554); not a TV multiple on purpose
TV = 1024      # vertex tile (lane-dense). Review: 1024 on v5e/v6e, 2048 on v7x.
NB = 10        # shape betas
NJ = 24        # joints
NP = 207       # pose basis = 23 * 9

SMPL_PARENTS = np.array(
    [0, 0, 0, 0, 1, 2, 3, 4, 5, 6, 7, 8, 9, 9, 9, 12, 13, 14, 16, 17, 18, 19,
     20, 21], dtype=np.int32)


# ---- pure-JAX glue (small per-joint math) -----------------------------------
def quat2mat(quat):
    norm_quat = quat / jnp.linalg.norm(quat, axis=1, keepdims=True)
    w, x, y, z = (norm_quat[:, 0], norm_quat[:, 1], norm_quat[:, 2],
                  norm_quat[:, 3])
    Bq = quat.shape[0]
    w2, x2, y2, z2 = w * w, x * x, y * y, z * z
    wx, wy, wz = w * x, w * y, w * z
    xy, xz, yz = x * y, x * z, y * z
    rot = jnp.stack([
        w2 + x2 - y2 - z2, 2 * xy - 2 * wz, 2 * wy + 2 * xz,
        2 * wz + 2 * xy, w2 - x2 + y2 - z2, 2 * yz - 2 * wx,
        2 * xz - 2 * wy, 2 * wx + 2 * yz, w2 - x2 - y2 + z2], axis=1)
    return rot.reshape(Bq, 3, 3)


def batch_rodrigues(theta):
    l1norm = jnp.sqrt(jnp.sum((theta + 1e-8) ** 2, axis=1, keepdims=True))
    normalized = theta / l1norm
    angle = l1norm * 0.5
    quat = jnp.concatenate([jnp.cos(angle), jnp.sin(angle) * normalized], axis=1)
    return quat2mat(quat)


def batch_global_rigid_transformation(Rs, Js, parent):
    N = Rs.shape[0]
    root_rotation = Rs[:, 0]
    Js = Js[..., None]                                       # (N, 24, 3, 1)

    def make_A(R, t):
        R_homo = jnp.pad(R, ((0, 0), (0, 1), (0, 0)))        # (N, 4, 3)
        t_homo = jnp.concatenate(
            [t, jnp.ones((N, 1, 1), jnp.float32)], axis=1)   # (N, 4, 1)
        return jnp.concatenate([R_homo, t_homo], axis=2)     # (N, 4, 4)

    results = [make_A(root_rotation, Js[:, 0])]
    for i in range(1, parent.shape[0]):
        j_here = Js[:, i] - Js[:, parent[i]]
        A_here = make_A(Rs[:, i], j_here)
        results.append(jnp.matmul(results[parent[i]], A_here))
    results = jnp.stack(results, axis=1)                     # (N, 24, 4, 4)
    new_J = results[:, :, :3, 3]
    Js_w0 = jnp.concatenate(
        [Js, jnp.zeros((N, NJ, 1, 1), jnp.float32)], axis=2)  # (N, 24, 4, 1)
    init_bone = jnp.matmul(results, Js_w0)                    # (N, 24, 4, 1)
    init_bone = jnp.pad(init_bone, ((0, 0), (0, 0), (0, 0), (3, 0)))
    A = results - init_bone
    return new_J, A


# ---- Pallas: fused shape blendshapes + pose blendshapes + LBS skinning ------
def _fused_kernel(beta_ref, pf_ref, at_ref, sd_ref, pd_ref, vt_ref, wt_ref,
                  vb_ref):
    beta = beta_ref[...]                       # (B, NB)      f32
    pf = pf_ref[...]                           # (B, NP)      f32
    at = at_ref[...]                           # (B*16, NJ)   f32, row = b*16+4r+c
    vt = vt_ref[...]                           # (3, TV)      f32 template
    wt = wt_ref[...]                           # (NJ, TV)     f32 weights (zero tail)

    # v_posed per coordinate, (B, TV): template + shape + pose blendshapes.
    # posedirs is stored bf16 (dominant HBM stream); upcast one coordinate slab
    # at a time so only a single (NP, TV) f32 temp is live; accumulate in f32.
    def vposed(c):
        sd_c = sd_ref[c]                                   # (NB, TV) f32
        pd_c = pd_ref[c].astype(jnp.float32)               # (NP, TV) bf16 -> f32
        return (jnp.dot(beta, sd_c, preferred_element_type=jnp.float32)
                + jnp.dot(pf, pd_c, preferred_element_type=jnp.float32)
                + vt[c])

    vpx, vpy, vpz = vposed(0), vposed(1), vposed(2)

    # Per-vertex transform T^T over the tile in one MXU push:
    # row (b*16 + 4*r + c) of Tt holds T[b, v, r, c] for every v in the tile.
    Tt = jnp.dot(at, wt, preferred_element_type=jnp.float32)   # (B*16, TV)
    Tt4 = Tt.reshape(B, 4, 4, Tt.shape[-1])                    # [b, r, c, v]

    # Vectorized LBS epilogue: full (B, 3, TV) slabs, no 1-D row slices or
    # stack-of-rows relayout; single lane-dense full-block store.
    vb_ref[...] = (Tt4[:, :3, 0, :] * vpx[:, None, :]
                   + Tt4[:, :3, 1, :] * vpy[:, None, :]
                   + Tt4[:, :3, 2, :] * vpz[:, None, :]
                   + Tt4[:, :3, 3, :])


def fused_forward_verts(beta, pose_feature, at, sd, pd, vt, wt):
    VP = sd.shape[-1]                                        # padded vertex count
    grid = (pl.cdiv(VP, TV),)
    flops = int(2 * B * (NB + NP) * 3 * VP                   # blendshape dots
                + 2 * B * 16 * NJ * VP                       # weights @ A
                + 9 * B * 3 * VP)                            # skinning elementwise
    bytes_accessed = int(4 * 3 * NB * VP                     # shapedirs  (f32)
                         + 2 * 3 * NP * VP                   # posedirs   (bf16)
                         + 4 * (3 * VP + NJ * VP + B * 3 * VP)
                         + 4 * B * (NB + NP + 16 * NJ))
    return pl.pallas_call(
        _fused_kernel,
        grid=grid,
        in_specs=[
            pl.BlockSpec((B, NB), lambda i: (0, 0)),
            pl.BlockSpec((B, NP), lambda i: (0, 0)),
            pl.BlockSpec((B * 16, NJ), lambda i: (0, 0)),
            pl.BlockSpec((3, NB, TV), lambda i: (0, 0, i)),
            pl.BlockSpec((3, NP, TV), lambda i: (0, 0, i)),
            pl.BlockSpec((3, TV), lambda i: (0, i)),
            pl.BlockSpec((NJ, TV), lambda i: (0, i)),
        ],
        out_specs=pl.BlockSpec((B, 3, TV), lambda i: (0, 0, i)),
        out_shape=jax.ShapeDtypeStruct((B, 3, VP), jnp.float32),
        compiler_params=pltpu.CompilerParams(
            dimension_semantics=("parallel",)),
        cost_estimate=pl.CostEstimate(
            flops=flops, transcendentals=0, bytes_accessed=bytes_accessed),
    )(beta, pose_feature, at, sd, pd, vt, wt)


# ---- full forward (garment_class=None path of TorchSMPL4Garment.forward) ----
@jax.jit
def smpl_forward(theta, beta, params):
    # joints from the folded regressor (tiny dense math, plain JAX)
    J = jnp.einsum("bn,njc->bjc", beta, params["J_dirs"]) + params["J_template"][None]
    Rs = batch_rodrigues(theta.reshape(-1, 3)).reshape(B, NJ, 3, 3)
    pose_feature = (Rs[:, 1:, :, :] - jnp.eye(3, dtype=jnp.float32)).reshape(B, NP)
    _, A = batch_global_rigid_transformation(Rs, J, SMPL_PARENTS)
    # A^T flattened so one dot gives T[b, v, r, c] at row b*16 + 4r + c
    at = A.reshape(B, NJ, 16).transpose(0, 2, 1).reshape(B * 16, NJ)
    vb = fused_forward_verts(beta, pose_feature, at,
                             params["sd"], params["pd"],
                             params["vt"], params["wt"])
    return vb[:, :, :V].transpose(0, 2, 1)                   # (B, V, 3)


# ---- pure-JAX reference for correctness check -------------------------------
def reference_forward(theta, beta, p, posedirs):
    v_shaped = jnp.einsum("bn,vcn->bvc", beta, p["shapedirs"]) + p["v_template"][None]
    J = jnp.einsum("bvc,vj->bjc", v_shaped, p["jreg"])
    Rs = batch_rodrigues(theta.reshape(-1, 3)).reshape(B, NJ, 3, 3)
    pose_feature = (Rs[:, 1:, :, :] - jnp.eye(3, dtype=jnp.float32)).reshape(B, NP)
    v_posed = jnp.einsum("bp,vcp->bvc", pose_feature, posedirs) + v_shaped
    _, A = batch_global_rigid_transformation(Rs, J, SMPL_PARENTS)
    T = jnp.einsum("vj,bjk->bvk", p["weights"], A.reshape(B, NJ, 16)).reshape(B, V, 4, 4)
    v_posed_homo = jnp.concatenate(
        [v_posed, jnp.ones((B, V, 1), jnp.float32)], axis=2)
    v_homo = jnp.einsum("bvrc,bvc->bvr", T, v_posed_homo)
    return v_homo[:, :, :3]


def build_params(key):
    ks = jax.random.split(key, 5)
    v_template = jax.random.normal(ks[0], (V, 3), jnp.float32) * 0.5
    shapedirs = jax.random.normal(ks[1], (V, 3, NB), jnp.float32) * 0.01
    posedirs = jax.random.normal(ks[2], (V, 3, NP), jnp.float32) * 0.01
    jraw = jax.random.uniform(ks[3], (V, NJ), jnp.float32) + 1e-3
    jreg = jraw / jnp.sum(jraw, axis=0, keepdims=True)
    wraw = jax.random.uniform(ks[4], (V, NJ), jnp.float32) + 1e-3
    weights = wraw / jnp.sum(wraw, axis=1, keepdims=True)

    # folded joint regressor: J = beta @ J_dirs + J_template  (host-side constants)
    J_dirs = jnp.einsum("vcn,vj->njc", shapedirs, jreg)       # (NB, NJ, 3)
    J_template = jnp.einsum("vc,vj->jc", v_template, jreg)    # (NJ, 3)

    # bf16 storage of posedirs (dominant HBM stream); dequantized copy used by
    # the tight reference check so only fp-order differences remain.
    posedirs_deq = posedirs.astype(jnp.bfloat16).astype(jnp.float32)

    # kernel-layout copies: vertex axis last (lane-dense), padded to TV multiple
    VP = pl.cdiv(V, TV) * TV
    pad = VP - V

    def lane_pack(x_vck):                                     # (V, 3, K) -> (3, K, VP)
        y = jnp.transpose(x_vck, (1, 2, 0))
        return jnp.pad(y, ((0, 0), (0, 0), (0, pad)))

    return {
        # reference-layout copies
        "v_template": v_template, "shapedirs": shapedirs,
        "posedirs": posedirs, "posedirs_deq": posedirs_deq,
        "jreg": jreg, "weights": weights,
        # folded joint regressor
        "J_dirs": J_dirs, "J_template": J_template,
        # kernel-layout, packed + padded (padded verts get zero weights -> zero out)
        "sd": lane_pack(shapedirs),                           # (3, NB, VP) f32
        "pd": lane_pack(posedirs).astype(jnp.bfloat16),       # (3, NP, VP) bf16
        "vt": jnp.pad(v_template.T, ((0, 0), (0, pad))),      # (3, VP)     f32
        "wt": jnp.pad(weights.T, ((0, 0), (0, pad))),         # (NJ, VP)    f32
    }


if __name__ == "__main__":
    key = jax.random.PRNGKey(0)
    kp, kt, kb = jax.random.split(key, 3)
    params = build_params(kp)
    theta = jax.random.normal(kt, (B, 72), jnp.float32) * 0.3
    beta = jax.random.normal(kb, (B, NB), jnp.float32)

    v_body = jax.block_until_ready(smpl_forward(theta, beta, params))

    # tight check: reference uses the same bf16-quantized posedirs values, so
    # only accumulation-order differences remain
    v_ref_q = jax.block_until_ready(
        reference_forward(theta, beta, params, params["posedirs_deq"]))
    np.testing.assert_allclose(np.asarray(v_body), np.asarray(v_ref_q),
                               rtol=1e-4, atol=1e-4)

    # loose check: bounds the bf16-posedirs approximation vs the exact f32 module
    v_ref = jax.block_until_ready(
        reference_forward(theta, beta, params, params["posedirs"]))
    np.testing.assert_allclose(np.asarray(v_body), np.asarray(v_ref),
                               rtol=5e-3, atol=5e-3)

    assert v_body.shape == (B, V, 3) and v_body.dtype == jnp.float32
    print("KERNEL_OK")
</pallas_src>

<mosaic_0001>
module attributes {stable_mosaic.version = 11 : i64} {
  func.func @_fused_kernel(%arg0: i32, %arg1: memref<2x10xf32, #tpu.memory_space<vmem>>, %arg2: memref<2x207xf32, #tpu.memory_space<vmem>>, %arg3: memref<32x24xf32, #tpu.memory_space<vmem>>, %arg4: memref<3x10x1024xf32, #tpu.memory_space<vmem>>, %arg5: memref<3x207x1024xbf16, #tpu.memory_space<vmem>>, %arg6: memref<3x1024xf32, #tpu.memory_space<vmem>>, %arg7: memref<24x1024xf32, #tpu.memory_space<vmem>>, %arg8: memref<2x3x1024xf32, #tpu.memory_space<vmem>>) attributes {dimension_semantics = [#tpu.dimension_semantics<parallel>], iteration_bounds = array<i64: 2>, scalar_prefetch = 0 : i64, scratch_operands = 0 : i64, tpu.core_type = #tpu.core_type<tc>, window_params = [{pipeline_mode = #tpu.pipeline_mode<synchronous>, transform_indices = @transform_0, window_bounds = array<i64: 2, 10>}, {pipeline_mode = #tpu.pipeline_mode<synchronous>, transform_indices = @transform_1, window_bounds = array<i64: 2, 207>}, {pipeline_mode = #tpu.pipeline_mode<synchronous>, transform_indices = @transform_2, window_bounds = array<i64: 32, 24>}, {transform_indices = @transform_3, window_bounds = array<i64: 3, 10, 1024>}, {transform_indices = @transform_4, window_bounds = array<i64: 3, 207, 1024>}, {transform_indices = @transform_5, window_bounds = array<i64: 3, 1024>}, {transform_indices = @transform_6, window_bounds = array<i64: 24, 1024>}, {transform_indices = @transform_7, window_bounds = array<i64: 2, 3, 1024>}]} {
    %c0 = arith.constant 0 : index
    %c0_0 = arith.constant 0 : index
    %0 = vector.load %arg1[%c0, %c0_0] : memref<2x10xf32, #tpu.memory_space<vmem>>, vector<2x10xf32>
    %c0_1 = arith.constant 0 : index
    %c0_2 = arith.constant 0 : index
    %1 = vector.load %arg2[%c0_1, %c0_2] : memref<2x207xf32, #tpu.memory_space<vmem>>, vector<2x207xf32>
    %c0_3 = arith.constant 0 : index
    %c0_4 = arith.constant 0 : index
    %2 = vector.load %arg3[%c0_3, %c0_4] : memref<32x24xf32, #tpu.memory_space<vmem>>, vector<32x24xf32>
    %c0_5 = arith.constant 0 : index
    %c0_6 = arith.constant 0 : index
    %3 = vector.load %arg6[%c0_5, %c0_6] : memref<3x1024xf32, #tpu.memory_space<vmem>>, vector<3x1024xf32>
    %c0_7 = arith.constant 0 : index
    %c0_8 = arith.constant 0 : index
    %4 = vector.load %arg7[%c0_7, %c0_8] : memref<24x1024xf32, #tpu.memory_space<vmem>>, vector<24x1024xf32>
    %c0_9 = arith.constant 0 : index
    %c0_10 = arith.constant 0 : index
    %c0_11 = arith.constant 0 : index
    %5 = vector.load %arg4[%c0_9, %c0_10, %c0_11] : memref<3x10x1024xf32, #tpu.memory_space<vmem>>, vector<1x10x1024xf32>
    %6 = vector.shape_cast %5 : vector<1x10x1024xf32> to vector<10x1024xf32>
    %c0_12 = arith.constant 0 : index
    %c0_13 = arith.constant 0 : index
    %c0_14 = arith.constant 0 : index
    %7 = vector.load %arg5[%c0_12, %c0_13, %c0_14] : memref<3x207x1024xbf16, #tpu.memory_space<vmem>>, vector<1x207x1024xbf16>
    %8 = vector.shape_cast %7 : vector<1x207x1024xbf16> to vector<207x1024xbf16>
    %9 = arith.extf %8 : vector<207x1024xbf16> to vector<207x1024xf32>
    %cst = arith.constant dense<0.000000e+00> : vector<2x1024xf32>
    %10 = tpu.matmul %0, %6, %cst {dimension_numbers = #tpu.dot_dimension_numbers<[1], [0], [0], [1], [0, 0, 1, 1], [], []>} : vector<2x10xf32>, vector<10x1024xf32>, vector<2x1024xf32> -> vector<2x1024xf32>
    %cst_15 = arith.constant dense<0.000000e+00> : vector<2x1024xf32>
    %11 = tpu.matmul %1, %9, %cst_15 {dimension_numbers = #tpu.dot_dimension_numbers<[1], [0], [0], [1], [0, 0, 1, 1], [], []>} : vector<2x207xf32>, vector<207x1024xf32>, vector<2x1024xf32> -> vector<2x1024xf32>
    %12 = arith.addf %10, %11 : vector<2x1024xf32>
    %13 = vector.extract_strided_slice %3 {offsets = [0, 0], sizes = [1, 1024], strides = [1, 1]} : vector<3x1024xf32> to vector<1x1024xf32>
    %14 = vector.shape_cast %13 : vector<1x1024xf32> to vector<1024xf32>
    %15 = vector.shape_cast %14 : vector<1024xf32> to vector<1x1024xf32>
    %16 = vector.broadcast %15 : vector<1x1024xf32> to vector<2x1024xf32>
    %17 = arith.addf %12, %16 : vector<2x1024xf32>
    %c1 = arith.constant 1 : index
    %c0_16 = arith.constant 0 : index
    %c0_17 = arith.constant 0 : index
    %18 = vector.load %arg4[%c1, %c0_16, %c0_17] : memref<3x10x1024xf32, #tpu.memory_space<vmem>>, vector<1x10x1024xf32>
    %19 = vector.shape_cast %18 : vector<1x10x1024xf32> to vector<10x1024xf32>
    %c1_18 = arith.constant 1 : index
    %c0_19 = arith.constant 0 : index
    %c0_20 = arith.constant 0 : index
    %20 = vector.load %arg5[%c1_18, %c0_19, %c0_20] : memref<3x207x1024xbf16, #tpu.memory_space<vmem>>, vector<1x207x1024xbf16>
    %21 = vector.shape_cast %20 : vector<1x207x1024xbf16> to vector<207x1024xbf16>
    %22 = arith.extf %21 : vector<207x1024xbf16> to vector<207x1024xf32>
    %cst_21 = arith.constant dense<0.000000e+00> : vector<2x1024xf32>
    %23 = tpu.matmul %0, %19, %cst_21 {dimension_numbers = #tpu.dot_dimension_numbers<[1], [0], [0], [1], [0, 0, 1, 1], [], []>} : vector<2x10xf32>, vector<10x1024xf32>, vector<2x1024xf32> -> vector<2x1024xf32>
    %cst_22 = arith.constant dense<0.000000e+00> : vector<2x1024xf32>
    %24 = tpu.matmul %1, %22, %cst_22 {dimension_numbers = #tpu.dot_dimension_numbers<[1], [0], [0], [1], [0, 0, 1, 1], [], []>} : vector<2x207xf32>, vector<207x1024xf32>, vector<2x1024xf32> -> vector<2x1024xf32>
    %25 = arith.addf %23, %24 : vector<2x1024xf32>
    %26 = vector.extract_strided_slice %3 {offsets = [1, 0], sizes = [1, 1024], strides = [1, 1]} : vector<3x1024xf32> to vector<1x1024xf32>
    %27 = vector.shape_cast %26 : vector<1x1024xf32> to vector<1024xf32>
    %28 = vector.shape_cast %27 : vector<1024xf32> to vector<1x1024xf32>
    %29 = vector.broadcast %28 : vector<1x1024xf32> to vector<2x1024xf32>
    %30 = arith.addf %25, %29 : vector<2x1024xf32>
    %c2 = arith.constant 2 : index
    %c0_23 = arith.constant 0 : index
    %c0_24 = arith.constant 0 : index
    %31 = vector.load %arg4[%c2, %c0_23, %c0_24] : memref<3x10x1024xf32, #tpu.memory_space<vmem>>, vector<1x10x1024xf32>
    %32 = vector.shape_cast %31 : vector<1x10x1024xf32> to vector<10x1024xf32>
    %c2_25 = arith.constant 2 : index
    %c0_26 = arith.constant 0 : index
    %c0_27 = arith.constant 0 : index
    %33 = vector.load %arg5[%c2_25, %c0_26, %c0_27] : memref<3x207x1024xbf16, #tpu.memory_space<vmem>>, vector<1x207x1024xbf16>
    %34 = vector.shape_cast %33 : vector<1x207x1024xbf16> to vector<207x1024xbf16>
    %35 = arith.extf %34 : vector<207x1024xbf16> to vector<207x1024xf32>
    %cst_28 = arith.constant dense<0.000000e+00> : vector<2x1024xf32>
    %36 = tpu.matmul %0, %32, %cst_28 {dimension_numbers = #tpu.dot_dimension_numbers<[1], [0], [0], [1], [0, 0, 1, 1], [], []>} : vector<2x10xf32>, vector<10x1024xf32>, vector<2x1024xf32> -> vector<2x1024xf32>
    %cst_29 = arith.constant dense<0.000000e+00> : vector<2x1024xf32>
    %37 = tpu.matmul %1, %35, %cst_29 {dimension_numbers = #tpu.dot_dimension_numbers<[1], [0], [0], [1], [0, 0, 1, 1], [], []>} : vector<2x207xf32>, vector<207x1024xf32>, vector<2x1024xf32> -> vector<2x1024xf32>
    %38 = arith.addf %36, %37 : vector<2x1024xf32>
    %39 = vector.extract_strided_slice %3 {offsets = [2, 0], sizes = [1, 1024], strides = [1, 1]} : vector<3x1024xf32> to vector<1x1024xf32>
    %40 = vector.shape_cast %39 : vector<1x1024xf32> to vector<1024xf32>
    %41 = vector.shape_cast %40 : vector<1024xf32> to vector<1x1024xf32>
    %42 = vector.broadcast %41 : vector<1x1024xf32> to vector<2x1024xf32>
    %43 = arith.addf %38, %42 : vector<2x1024xf32>
    %cst_30 = arith.constant dense<0.000000e+00> : vector<32x1024xf32>
    %44 = tpu.matmul %2, %4, %cst_30 {dimension_numbers = #tpu.dot_dimension_numbers<[1], [0], [0], [1], [0, 0, 1, 1], [], []>} : vector<32x24xf32>, vector<24x1024xf32>, vector<32x1024xf32> -> vector<32x1024xf32>
    %45 = vector.shape_cast %44 : vector<32x1024xf32> to vector<2x4x4x1024xf32>
    %46 = vector.extract_strided_slice %45 {offsets = [0, 0, 0, 0], sizes = [2, 3, 1, 1024], strides = [1, 1, 1, 1]} : vector<2x4x4x1024xf32> to vector<2x3x1x1024xf32>
    %47 = vector.shape_cast %46 : vector<2x3x1x1024xf32> to vector<2x3x1024xf32>
    %48 = vector.shape_cast %17 : vector<2x1024xf32> to vector<2x1x1024xf32>
    %49 = vector.broadcast %48 : vector<2x1x1024xf32> to vector<2x3x1024xf32>
    %50 = arith.mulf %47, %49 : vector<2x3x1024xf32>
    %51 = vector.extract_strided_slice %45 {offsets = [0, 0, 1, 0], sizes = [2, 3, 1, 1024], strides = [1, 1, 1, 1]} : vector<2x4x4x1024xf32> to vector<2x3x1x1024xf32>
    %52 = vector.shape_cast %51 : vector<2x3x1x1024xf32> to vector<2x3x1024xf32>
    %53 = vector.shape_cast %30 : vector<2x1024xf32> to vector<2x1x1024xf32>
    %54 = vector.broadcast %53 : vector<2x1x1024xf32> to vector<2x3x1024xf32>
    %55 = arith.mulf %52, %54 : vector<2x3x1024xf32>
    %56 = arith.addf %50, %55 : vector<2x3x1024xf32>
    %57 = vector.extract_strided_slice %45 {offsets = [0, 0, 2, 0], sizes = [2, 3, 1, 1024], strides = [1, 1, 1, 1]} : vector<2x4x4x1024xf32> to vector<2x3x1x1024xf32>
    %58 = vector.shape_cast %57 : vector<2x3x1x1024xf32> to vector<2x3x1024xf32>
    %59 = vector.shape_cast %43 : vector<2x1024xf32> to vector<2x1x1024xf32>
    %60 = vector.broadcast %59 : vector<2x1x1024xf32> to vector<2x3x1024xf32>
    %61 = arith.mulf %58, %60 : vector<2x3x1024xf32>
    %62 = arith.addf %56, %61 : vector<2x3x1024xf32>
    %63 = vector.extract_strided_slice %45 {offsets = [0, 0, 3, 0], sizes = [2, 3, 1, 1024], strides = [1, 1, 1, 1]} : vector<2x4x4x1024xf32> to vector<2x3x1x1024xf32>
    %64 = vector.shape_cast %63 : vector<2x3x1x1024xf32> to vector<2x3x1024xf32>
    %65 = arith.addf %62, %64 : vector<2x3x1024xf32>
    %c0_31 = arith.constant 0 : index
    %c0_32 = arith.constant 0 : index
    %c0_33 = arith.constant 0 : index
    %66 = vector.load %arg8[%c0_31, %c0_32, %c0_33] : memref<2x3x1024xf32, #tpu.memory_space<vmem>>, vector<2x3x1024xf32>
    tpu.vector_store %arg8[%c0_31, %c0_32, %c0_33], %65 {strides = array<i32>} : memref<2x3x1024xf32, #tpu.memory_space<vmem>>, vector<2x3x1024xf32>,
    return
  }
  func.func @transform_0(%arg0: i32) -> (i32, i32) {
    %c0_i32 = arith.constant 0 : i32
    %c0_i32_0 = arith.constant 0 : i32
    %c0_i32_1 = arith.constant 0 : i32
    return %c0_i32, %c0_i32_0 : i32, i32
  }
  func.func @transform_1(%arg0: i32) -> (i32, i32) {
    %c0_i32 = arith.constant 0 : i32
    %c0_i32_0 = arith.constant 0 : i32
    %c0_i32_1 = arith.constant 0 : i32
    return %c0_i32, %c0_i32_0 : i32, i32
  }
  func.func @transform_2(%arg0: i32) -> (i32, i32) {
    %c0_i32 = arith.constant 0 : i32
    %c0_i32_0 = arith.constant 0 : i32
    %c0_i32_1 = arith.constant 0 : i32
    return %c0_i32, %c0_i32_0 : i32, i32
  }
  func.func @transform_3(%arg0: i32) -> (i32, i32, i32) {
    %c0_i32 = arith.constant 0 : i32
    %c0_i32_0 = arith.constant 0 : i32
    %c0_i32_1 = arith.constant 0 : i32
    return %c0_i32, %c0_i32_0, %arg0 : i32, i32, i32
  }
  func.func @transform_4(%arg0: i32) -> (i32, i32, i32) {
    %c0_i32 = arith.constant 0 : i32
    %c0_i32_0 = arith.constant 0 : i32
    %c0_i32_1 = arith.constant 0 : i32
    return %c0_i32, %c0_i32_0, %arg0 : i32, i32, i32
  }
  func.func @transform_5(%arg0: i32) -> (i32, i32) {
    %c0_i32 = arith.constant 0 : i32
    %c0_i32_0 = arith.constant 0 : i32
    return %c0_i32, %arg0 : i32, i32
  }
  func.func @transform_6(%arg0: i32) -> (i32, i32) {
    %c0_i32 = arith.constant 0 : i32
    %c0_i32_0 = arith.constant 0 : i32
    return %c0_i32, %arg0 : i32, i32
  }
  func.func @transform_7(%arg0: i32) -> (i32, i32, i32) {
    %c0_i32 = arith.constant 0 : i32
    %c0_i32_0 = arith.constant 0 : i32
    %c0_i32_1 = arith.constant 0 : i32
    return %c0_i32, %c0_i32_0, %arg0 : i32, i32, i32
  }
}

</mosaic_0001>

<llo_original>
// kernel: smpl_forward.1
$region0: #{smpl_forward.1}
  #allocation0 [shape = 'u32[]', space=smem, size = 0x4, offset = 0x4, fixed_abs, tag = 'smem constant byte address 0x4 - core index']
  #allocation1 [shape = 'u32[144,128]{1,0:T(1,128)}', space=vmem, size = 0x12000, scoped, tag = 'internal scratch']
  %s0 = inlined_call_operand.vmem [shape: f32[2,10], index: 0, kind: input, shape index: {}]
  %s1 = inlined_call_operand.vmem [shape: f32[2,207], index: 1, kind: input, shape index: {}]
  %s2 = inlined_call_operand.vmem [shape: f32[32,24], index: 2, kind: input, shape index: {}]
  %s3 = inlined_call_operand.vmem [shape: f32[3,10,2048], index: 3, kind: input, shape index: {}]
  %s4 = inlined_call_operand.vmem [shape: bf16[3,207,2048], index: 4, kind: input, shape index: {}]
  %s5 = inlined_call_operand.vmem [shape: f32[3,2048], index: 5, kind: input, shape index: {}]
  %s6 = inlined_call_operand.hbm [shape: f32[24,2048], index: 6, kind: input, shape index: {}]
  %s7 = inlined_call_operand.vmem [shape: f32[2,3,2048], index: 7, kind: output, shape index: {}]
  %s8 = sld [smem:[#allocation0]]
  $region130: #{smpl_forward.1} parent=0
    _
  %s10 = ssub.s32 1, %s8
  %s11 = scalar_select 0, %s10, %s8
  $region1: #{smpl_forward.1} parent=0
    #allocation2 [shape = 'u8[393216]{0}', space=vmem, size = 0x60000, scoped, tag = 'input window, operand 3']
    #allocation3 [shape = 'u8[2555904]{0}', space=vmem, size = 0x270000, scoped, tag = 'input window, operand 4']
    #allocation4 [shape = 'u8[196608]{0}', space=vmem, size = 0x30000, scoped, tag = 'input window, operand 6']
    #allocation5 [shape = 's32[2]{0}', space=sflag, size = 0x8, scoped, tag = 'scoped memory for smpl_forward.1']
    #allocation6 [shape = 'u8[65536]{0}', space=vmem, size = 0x10000, scoped, tag = 'output window, operand 0']
    %12 = vsyncpa [#allocation5], 0
    %s13 = scalar_lea.sflag [#allocation5], 1
    %14 = vsyncpa %s13, 0
    loop: start=0, step=1, limit=4
    $region2: #{smpl_forward.1} parent=1 // loop_pre_header
      _
    $region3: #{smpl_forward.1} parent=1 // loop_header
      %s16 = sphi 0, %s20
      %p17 = scmp.ge.s32.totalorder %s16, 4
      %s24 = sphi 0, %s24
      %s26 = sphi 0, %s24
      %s27 = sphi 0, %s26
      %s41 = sphi 0, %s27
      %s45 = sphi 0, %s45
      %s47 = sphi 0, %s45
      %s48 = sphi 0, %s47
      %s62 = sphi 0, %s48
      %s66 = sphi 0, %s66
      %s68 = sphi 0, %s66
      %s69 = sphi 0, %s68
      %s83 = sphi 0, %s69
      %s89 = sphi 0, %s91
      %s92 = sphi 0, %s89
      %s93 = sphi 0, %s92
      %s109 = sphi 0, %s93
      %s115 = sphi 0, %s117
      %s118 = sphi 0, %s115
      %s119 = sphi 0, %s118
      %s135 = sphi 0, %s119
      %s141 = sphi 0, %s143
      %s144 = sphi 0, %s141
      %s145 = sphi 0, %s144
      %s161 = sphi 0, %s145
      %s167 = sphi 0, %s169
      %s170 = sphi 0, %s167
      %s171 = sphi 0, %s170
      %s187 = sphi 0, %s171
      %s193 = sphi 0, %s195
      %s196 = sphi 0, %s193
      %s197 = sphi 0, %s196
      %s213 = sphi 0, %s197
    $region4: #{smpl_forward.1} parent=1 // loop_header_branch
      %19 = sbr.rel (%p17) target = $region8
    $region5: #{smpl_forward.1} parent=1 // loop_body
      %s21 = ssub.s32 %s16, 1
      %s22 = ssub.s32 %s16, 2
      %s23 = sadd.s32 %s16, 1
      %s25 = sadd.s32 %s24, 1
      %p28 = scmp.eq.s32.totalorder %s16, 1
      %p29 = scmp.ne.s32.totalorder %s24, %s26
      %p30 = scmp.eq.s32.totalorder %s16, 0
      %p31 = por %p29, %p30
      %p32 = scmp.ne.s32.totalorder %s24, %s26
      %p33 = scmp.eq.s32.totalorder %s21, 1
      %p34 = por %p32, %p33
      %p35 = scmp.ne.s32.totalorder %s26, %s27
      %p36 = scmp.eq.s32.totalorder %s21, 0
      %p37 = por %p35, %p36
      %p38 = scmp.ne.s32.totalorder %s26, %s27
      %p39 = scmp.eq.s32.totalorder %s22, 1
      %p40 = por %p38, %p39
      %p42 = scmp.ne.s32.totalorder %s27, %s41
      %p43 = scmp.eq.s32.totalorder %s22, 0
      %p44 = por %p42, %p43
      %s46 = sadd.s32 %s45, 1
      %p49 = scmp.eq.s32.totalorder %s16, 1
      %p50 = scmp.ne.s32.totalorder %s45, %s47
      %p51 = scmp.eq.s32.totalorder %s16, 0
      %p52 = por %p50, %p51
      %p53 = scmp.ne.s32.totalorder %s45, %s47
      %p54 = scmp.eq.s32.totalorder %s21, 1
      %p55 = por %p53, %p54
      %p56 = scmp.ne.s32.totalorder %s47, %s48
      %p57 = scmp.eq.s32.totalorder %s21, 0
      %p58 = por %p56, %p57
      %p59 = scmp.ne.s32.totalorder %s47, %s48
      %p60 = scmp.eq.s32.totalorder %s22, 1
      %p61 = por %p59, %p60
      %p63 = scmp.ne.s32.totalorder %s48, %s62
      %p64 = scmp.eq.s32.totalorder %s22, 0
      %p65 = por %p63, %p64
      %s67 = sadd.s32 %s66, 1
      %p70 = scmp.eq.s32.totalorder %s16, 1
      %p71 = scmp.ne.s32.totalorder %s66, %s68
      %p72 = scmp.eq.s32.totalorder %s16, 0
      %p73 = por %p71, %p72
      %p74 = scmp.ne.s32.totalorder %s66, %s68
      %p75 = scmp.eq.s32.totalorder %s21, 1
      %p76 = por %p74, %p75
      %p77 = scmp.ne.s32.totalorder %s68, %s69
      %p78 = scmp.eq.s32.totalorder %s21, 0
      %p79 = por %p77, %p78
      %p80 = scmp.ne.s32.totalorder %s68, %s69
      %p81 = scmp.eq.s32.totalorder %s22, 1
      %p82 = por %p80, %p81
      %p84 = scmp.ne.s32.totalorder %s69, %s83
      %p85 = scmp.eq.s32.totalorder %s22, 0
      %p86 = por %p84, %p85
      %s87 = ssub.s32 %s16, %s23
      %p88 = scmp.eq.s32.totalorder %s87, 0
      %s90 = sadd.s32 %s89, 1
      %s91 = scalar_select %p88, %s89, %s90
      %p94 = pneg %p88
      %p95 = scmp.eq.s32.totalorder %s16, 1
      %p96 = por %p94, %p95
      %p97 = scmp.ne.s32.totalorder %s89, %s92
      %p98 = scmp.eq.s32.totalorder %s16, 0
      %p99 = por %p97, %p98
      %p100 = scmp.ne.s32.totalorder %s89, %s92
      %p101 = scmp.eq.s32.totalorder %s21, 1
      %p102 = por %p100, %p101
      %p103 = scmp.ne.s32.totalorder %s92, %s93
      %p104 = scmp.eq.s32.totalorder %s21, 0
      %p105 = por %p103, %p104
      %p106 = scmp.ne.s32.totalorder %s92, %s93
      %p107 = scmp.eq.s32.totalorder %s22, 1
      %p108 = por %p106, %p107
      %p110 = scmp.ne.s32.totalorder %s93, %s109
      %p111 = scmp.eq.s32.totalorder %s22, 0
      %p112 = por %p110, %p111
      %s113 = ssub.s32 %s16, %s23
      %p114 = scmp.eq.s32.totalorder %s113, 0
      %s116 = sadd.s32 %s115, 1
      %s117 = scalar_select %p114, %s115, %s116
      %p120 = pneg %p114
      %p121 = scmp.eq.s32.totalorder %s16, 1
      %p122 = por %p120, %p121
      %p123 = scmp.ne.s32.totalorder %s115, %s118
      %p124 = scmp.eq.s32.totalorder %s16, 0
      %p125 = por %p123, %p124
      %p126 = scmp.ne.s32.totalorder %s115, %s118
      %p127 = scmp.eq.s32.totalorder %s21, 1
      %p128 = por %p126, %p127
      %p129 = scmp.ne.s32.totalorder %s118, %s119
      %p130 = scmp.eq.s32.totalorder %s21, 0
      %p131 = por %p129, %p130
      %p132 = scmp.ne.s32.totalorder %s118, %s119
      %p133 = scmp.eq.s32.totalorder %s22, 1
      %p134 = por %p132, %p133
      %p136 = scmp.ne.s32.totalorder %s119, %s135
      %p137 = scmp.eq.s32.totalorder %s22, 0
      %p138 = por %p136, %p137
      %s139 = ssub.s32 %s16, %s23
      %p140 = scmp.eq.s32.totalorder %s139, 0
      %s142 = sadd.s32 %s141, 1
      %s143 = scalar_select %p140, %s141, %s142
      %p146 = pneg %p140
      %p147 = scmp.eq.s32.totalorder %s16, 1
      %p148 = por %p146, %p147
      %p149 = scmp.ne.s32.totalorder %s141, %s144
      %p150 = scmp.eq.s32.totalorder %s16, 0
      %p151 = por %p149, %p150
      %p152 = scmp.ne.s32.totalorder %s141, %s144
      %p153 = scmp.eq.s32.totalorder %s21, 1
      %p154 = por %p152, %p153
      %p155 = scmp.ne.s32.totalorder %s144, %s145
      %p156 = scmp.eq.s32.totalorder %s21, 0
      %p157 = por %p155, %p156
      %p158 = scmp.ne.s32.totalorder %s144, %s145
      %p159 = scmp.eq.s32.totalorder %s22, 1
      %p160 = por %p158, %p159
      %p162 = scmp.ne.s32.totalorder %s145, %s161
      %p163 = scmp.eq.s32.totalorder %s22, 0
      %p164 = por %p162, %p163
      %s165 = ssub.s32 %s16, %s23
      %p166 = scmp.eq.s32.totalorder %s165, 0
      %s168 = sadd.s32 %s167, 1
      %s169 = scalar_select %p166, %s167, %s168
      %p172 = pneg %p166
      %p173 = scmp.eq.s32.totalorder %s16, 1
      %p174 = por %p172, %p173
      %p175 = scmp.ne.s32.totalorder %s167, %s170
      %p176 = scmp.eq.s32.totalorder %s16, 0
      %p177 = por %p175, %p176
      %p178 = scmp.ne.s32.totalorder %s167, %s170
      %p179 = scmp.eq.s32.totalorder %s21, 1
      %p180 = por %p178, %p179
      %p181 = scmp.ne.s32.totalorder %s170, %s171
      %p182 = scmp.eq.s32.totalorder %s21, 0
      %p183 = por %p181, %p182
      %p184 = scmp.ne.s32.totalorder %s170, %s171
      %p185 = scmp.eq.s32.totalorder %s22, 1
      %p186 = por %p184, %p185
      %p188 = scmp.ne.s32.totalorder %s171, %s187
      %p189 = scmp.eq.s32.totalorder %s22, 0
      %p190 = por %p188, %p189
      %s191 = ssub.s32 %s16, %s23
      %p192 = scmp.eq.s32.totalorder %s191, 0
      %s194 = sadd.s32 %s193, 1
      %s195 = scalar_select %p192, %s193, %s194
      %p198 = pneg %p192
      %p199 = scmp.eq.s32.totalorder %s16, 1
      %p200 = por %p198, %p199
      %p201 = scmp.ne.s32.totalorder %s193, %s196
      %p202 = scmp.eq.s32.totalorder %s16, 0
      %p203 = por %p201, %p202
      %p204 = scmp.ne.s32.totalorder %s193, %s196
      %p205 = scmp.eq.s32.totalorder %s21, 1
      %p206 = por %p204, %p205
      %p207 = scmp.ne.s32.totalorder %s196, %s197
      %p208 = scmp.eq.s32.totalorder %s21, 0
      %p209 = por %p207, %p208
      %p210 = scmp.ne.s32.totalorder %s196, %s197
      %p211 = scmp.eq.s32.totalorder %s22, 1
      %p212 = por %p210, %p211
      %p214 = scmp.ne.s32.totalorder %s197, %s213
      %p215 = scmp.eq.s32.totalorder %s22, 0
      %p216 = por %p214, %p215
      %p217 = scmp.le.s32.totalorder 1, %s16
      %p218 = scmp.lt.s32.totalorder %s16, 3
      %p219 = pnand %p217, %p218
      %p220 = pneg %p219
      // Predicated region
      $region9: #{smpl_forward.1} parent=5 // pred_check
        _
      $region10: #{smpl_forward.1} parent=5 // pred_check_branch
        %222 = sbr.rel (%p219) target = $region12
      $region11: #{smpl_forward.1} parent=5 // pred_region
        %s223 = ssub.s32 %s16, 1
        // Predicated region
        $region13: #{smpl_forward.1} parent=11 // pred_check
          %p224 = pneg %p37
        $region14: #{smpl_forward.1} parent=11 // pred_check_branch
          %226 = sbr.rel (%p224) target = $region16
        $region15: #{smpl_forward.1} parent=11 // pred_region
          _
        $region16: #{smpl_forward.1} parent=11 // pred_fallthru
          _
        // Predicated region
        $region17: #{smpl_forward.1} parent=11 // pred_check
          %p227 = pneg %p58
        $region18: #{smpl_forward.1} parent=11 // pred_check_branch
          %229 = sbr.rel (%p227) target = $region20
        $region19: #{smpl_forward.1} parent=11 // pred_region
          _
        $region20: #{smpl_forward.1} parent=11 // pred_fallthru
          _
        // Predicated region
        $region21: #{smpl_forward.1} parent=11 // pred_check
          %p230 = pneg %p79
        $region22: #{smpl_forward.1} parent=11 // pred_check_branch
          %232 = sbr.rel (%p230) target = $region24
        $region23: #{smpl_forward.1} parent=11 // pred_region
          _
        $region24: #{smpl_forward.1} parent=11 // pred_fallthru
          _
      $region12: #{smpl_forward.1} parent=5 // pred_fallthru
        _
      %p233 = scmp.lt.s32.totalorder %s16, 2
      // Predicated region
      $region25: #{smpl_forward.1} parent=5 // pred_check
        %p234 = pneg %p233
      $region26: #{smpl_forward.1} parent=5 // pred_check_branch
        %236 = sbr.rel (%p234) target = $region28
      $region27: #{smpl_forward.1} parent=5 // pred_region
        // Predicated region
        $region29: #{smpl_forward.1} parent=27 // pred_check
          %p237 = pneg %p99
        $region30: #{smpl_forward.1} parent=27 // pred_check_branch
          %239 = sbr.rel (%p237) target = $region32
        $region31: #{smpl_forward.1} parent=27 // pred_region
          %s240 = sand.u32 %s89, 1
          %s241 = sand.u32 %s89, 1
          %s242 = smul.addr %s241, 384
          %s243 = scalar_lea.vmem [#allocation2], %s242
          %s244 = smul.u32 8, %s16
          %s245 = smul.addr %s244, 8
          %s246 = scalar_lea.vmem %s3, %s245
          // Predicated region
          $region33: #{smpl_forward.1} parent=31 // pred_check
            _
          $region34: #{smpl_forward.1} parent=31 // pred_check_branch
            %248 = sbr.rel (0) target = $region36
          $region35: #{smpl_forward.1} parent=31 // pred_region
            // Predicated region
            $region37: #{smpl_forward.1} parent=35 // pred_check
              _
            $region38: #{smpl_forward.1} parent=35 // pred_check_branch
              %250 = sbr.rel (0) target = $region40
            $region39: #{smpl_forward.1} parent=35 // pred_region
              loop: start=0, step=1, limit=1
              $region41: #{smpl_forward.1} parent=39 // loop_pre_header
                _
              $region42: #{smpl_forward.1} parent=39 // loop_header
                %s252 = sphi 0, %s256
                %p253 = scmp.ge.s32.totalorder %s252, 1
                %s257 = sphi %s246, %s246
                %s258 = sphi %s243, %s243
              $region43: #{smpl_forward.1} parent=39 // loop_header_branch
                %255 = sbr.rel (%p253) target = $region47
              $region44: #{smpl_forward.1} parent=39 // loop_body
                %v259 = vld [vmem:[%s257] sm:$0xff]
                %260 = vst [vmem:[%s258] sm:$0xff] %v259
                %v261 = vld [vmem:[%s257 + $0x8] sm:$0xff]
                %262 = vst [vmem:[%s258 + $0x8] sm:$0xff] %v261
                %v263 = vld [vmem:[%s257 + $0x10] sm:$0xff]
                %264 = vst [vmem:[%s258 + $0x10] sm:$0xff] %v263
                %v265 = vld [vmem:[%s257 + $0x18] sm:$0xff]
                %266 = vst [vmem:[%s258 + $0x18] sm:$0xff] %v265
                %v267 = vld [vmem:[%s257 + $0x20] sm:$0xff]
                %268 = vst [vmem:[%s258 + $0x20] sm:$0xff] %v267
                %v269 = vld [vmem:[%s257 + $0x28] sm:$0xff]
                %270 = vst [vmem:[%s258 + $0x28] sm:$0xff] %v269
                %v271 = vld [vmem:[%s257 + $0x30] sm:$0xff]
                %272 = vst [vmem:[%s258 + $0x30] sm:$0xff] %v271
                %v273 = vld [vmem:[%s257 + $0x38] sm:$0xff]
                %274 = vst [vmem:[%s258 + $0x38] sm:$0xff] %v273
                %v275 = vld [vmem:[%s257 + $0x80] sm:$0xff]
                %276 = vst [vmem:[%s258 + $0x40] sm:$0xff] %v275
                %v277 = vld [vmem:[%s257 + $0x88] sm:$0xff]
                %278 = vst [vmem:[%s258 + $0x48] sm:$0xff] %v277
                %v279 = vld [vmem:[%s257 + $0x90] sm:$0xff]
                %280 = vst [vmem:[%s258 + $0x50] sm:$0xff] %v279
                %v281 = vld [vmem:[%s257 + $0x98] sm:$0xff]
                %282 = vst [vmem:[%s258 + $0x58] sm:$0xff] %v281
                %v283 = vld [vmem:[%s257 + $0xa0] sm:$0xff]
                %284 = vst [vmem:[%s258 + $0x60] sm:$0xff] %v283
                %v285 = vld [vmem:[%s257 + $0xa8] sm:$0xff]
                %286 = vst [vmem:[%s258 + $0x68] sm:$0xff] %v285
                %v287 = vld [vmem:[%s257 + $0xb0] sm:$0xff]
                %288 = vst [vmem:[%s258 + $0x70] sm:$0xff] %v287
                %v289 = vld [vmem:[%s257 + $0xb8] sm:$0xff]
                %290 = vst [vmem:[%s258 + $0x78] sm:$0xff] %v289
                %v291 = vld [vmem:[%s257 + $0x100] sm:$0xff]
                %292 = vst [vmem:[%s258 + $0x80] sm:$0xff] %v291
                %v293 = vld [vmem:[%s257 + $0x108] sm:$0xff]
                %294 = vst [vmem:[%s258 + $0x88] sm:$0xff] %v293
                %v295 = vld [vmem:[%s257 + $0x110] sm:$0xff]
                %296 = vst [vmem:[%s258 + $0x90] sm:$0xff] %v295
                %v297 = vld [vmem:[%s257 + $0x118] sm:$0xff]
                %298 = vst [vmem:[%s258 + $0x98] sm:$0xff] %v297
                %v299 = vld [vmem:[%s257 + $0x120] sm:$0xff]
                %300 = vst [vmem:[%s258 + $0xa0] sm:$0xff] %v299
                %v301 = vld [vmem:[%s257 + $0x128] sm:$0xff]
                %302 = vst [vmem:[%s258 + $0xa8] sm:$0xff] %v301
                %v303 = vld [vmem:[%s257 + $0x130] sm:$0xff]
                %304 = vst [vmem:[%s258 + $0xb0] sm:$0xff] %v303
                %v305 = vld [vmem:[%s257 + $0x138] sm:$0xff]
                %306 = vst [vmem:[%s258 + $0xb8] sm:$0xff] %v305
                %v307 = vld [vmem:[%s257 + $0x180] sm:$0xff]
                %308 = vst [vmem:[%s258 + $0xc0] sm:$0xff] %v307
                %v309 = vld [vmem:[%s257 + $0x188] sm:$0xff]
                %310 = vst [vmem:[%s258 + $0xc8] sm:$0xff] %v309
                %v311 = vld [vmem:[%s257 + $0x190] sm:$0xff]
                %312 = vst [vmem:[%s258 + $0xd0] sm:$0xff] %v311
                %v313 = vld [vmem:[%s257 + $0x198] sm:$0xff]
                %314 = vst [vmem:[%s258 + $0xd8] sm:$0xff] %v313
                %v315 = vld [vmem:[%s257 + $0x1a0] sm:$0xff]
                %316 = vst [vmem:[%s258 + $0xe0] sm:$0xff] %v315
                %v317 = vld [vmem:[%s257 + $0x1a8] sm:$0xff]
                %318 = vst [vmem:[%s258 + $0xe8] sm:$0xff] %v317
                %v319 = vld [vmem:[%s257 + $0x1b0] sm:$0xff]
                %320 = vst [vmem:[%s258 + $0xf0] sm:$0xff] %v319
                %v321 = vld [vmem:[%s257 + $0x1b8] sm:$0xff]
                %322 = vst [vmem:[%s258 + $0xf8] sm:$0xff] %v321
                %v323 = vld [vmem:[%s257 + $0x200] sm:$0xff]
                %324 = vst [vmem:[%s258 + $0x100] sm:$0xff] %v323
                %v325 = vld [vmem:[%s257 + $0x208] sm:$0xff]
                %326 = vst [vmem:[%s258 + $0x108] sm:$0xff] %v325
                %v327 = vld [vmem:[%s257 + $0x210] sm:$0xff]
                %328 = vst [vmem:[%s258 + $0x110] sm:$0xff] %v327
                %v329 = vld [vmem:[%s257 + $0x218] sm:$0xff]
                %330 = vst [vmem:[%s258 + $0x118] sm:$0xff] %v329
                %v331 = vld [vmem:[%s257 + $0x220] sm:$0xff]
                %332 = vst [vmem:[%s258 + $0x120] sm:$0xff] %v331
                %v333 = vld [vmem:[%s257 + $0x228] sm:$0xff]
                %334 = vst [vmem:[%s258 + $0x128] sm:$0xff] %v333
                %v335 = vld [vmem:[%s257 + $0x230] sm:$0xff]
                %336 = vst [vmem:[%s258 + $0x130] sm:$0xff] %v335
                %v337 = vld [vmem:[%s257 + $0x238] sm:$0xff]
                %338 = vst [vmem:[%s258 + $0x138] sm:$0xff] %v337
                %v339 = vld [vmem:[%s257 + $0x280] sm:$0xff]
                %340 = vst [vmem:[%s258 + $0x140] sm:$0xff] %v339
                %v341 = vld [vmem:[%s257 + $0x288] sm:$0xff]
                %342 = vst [vmem:[%s258 + $0x148] sm:$0xff] %v341
                %v343 = vld [vmem:[%s257 + $0x290] sm:$0xff]
                %344 = vst [vmem:[%s258 + $0x150] sm:$0xff] %v343
                %v345 = vld [vmem:[%s257 + $0x298] sm:$0xff]
                %346 = vst [vmem:[%s258 + $0x158] sm:$0xff] %v345
                %v347 = vld [vmem:[%s257 + $0x2a0] sm:$0xff]
                %348 = vst [vmem:[%s258 + $0x160] sm:$0xff] %v347
                %v349 = vld [vmem:[%s257 + $0x2a8] sm:$0xff]
                %350 = vst [vmem:[%s258 + $0x168] sm:$0xff] %v349
                %v351 = vld [vmem:[%s257 + $0x2b0] sm:$0xff]
                %352 = vst [vmem:[%s258 + $0x170] sm:$0xff] %v351
                %v353 = vld [vmem:[%s257 + $0x2b8] sm:$0xff]
                %354 = vst [vmem:[%s258 + $0x178] sm:$0xff] %v353
              $region45: #{smpl_forward.1} parent=39 // loop_footer
                %s256 = sadd.s32 1, %s252
              $region46: #{smpl_forward.1} parent=39 // loop_footer_branch
                %251 = sbr.rel target = $region42
              $region47: #{smpl_forward.1} parent=39 // loop_exit
                _
            $region40: #{smpl_forward.1} parent=35 // pred_fallthru
              _
            // Predicated region
            $region48: #{smpl_forward.1} parent=35 // pred_check
              _
            $region49: #{smpl_forward.1} parent=35 // pred_check_branch
              %356 = sbr.rel target = $region51
            $region50: #{smpl_forward.1} parent=35 // pred_region
              _
            $region51: #{smpl_forward.1} parent=35 // pred_fallthru
              _
          $region36: #{smpl_forward.1} parent=31 // pred_fallthru
            _
          %357 = vnop
        $region32: #{smpl_forward.1} parent=27 // pred_fallthru
          _
        // Predicated region
        $region52: #{smpl_forward.1} parent=27 // pred_check
          %p358 = pneg %p125
        $region53: #{smpl_forward.1} parent=27 // pred_check_branch
          %360 = sbr.rel (%p358) target = $region55
        $region54: #{smpl_forward.1} parent=27 // pred_region
          %s361 = sand.u32 %s115, 1
          %s362 = sand.u32 %s115, 1
          %s363 = smul.addr %s362, 2496
          %s364 = scalar_lea.vmem [#allocation3], %s363
          %s365 = smul.u32 8, %s16
          %s366 = smul.addr %s365, 4
          %s367 = scalar_lea.vmem %s4, %s366
          // Predicated region
          $region56: #{smpl_forward.1} parent=54 // pred_check
            _
          $region57: #{smpl_forward.1} parent=54 // pred_check_branch
            %369 = sbr.rel (0) target = $region59
          $region58: #{smpl_forward.1} parent=54 // pred_region
            // Predicated region
            $region60: #{smpl_forward.1} parent=58 // pred_check
              _
            $region61: #{smpl_forward.1} parent=58 // pred_check_branch
              %371 = sbr.rel (0) target = $region63
            $region62: #{smpl_forward.1} parent=58 // pred_region
              loop: start=0, step=1, limit=1
              $region64: #{smpl_forward.1} parent=62 // loop_pre_header
                _
              $region65: #{smpl_forward.1} parent=62 // loop_header
                %s373 = sphi 0, %s377
                %p374 = scmp.ge.s32.totalorder %s373, 1
                %s378 = sphi %s367, %s367
                %s379 = sphi %s364, %s364
              $region66: #{smpl_forward.1} parent=62 // loop_header_branch
                %376 = sbr.rel (%p374) target = $region70
              $region67: #{smpl_forward.1} parent=62 // loop_body
                %v380 = vld [vmem:[%s378] sm:$0xff]
                %381 = vst [vmem:[%s379] sm:$0xff] %v380
                %v382 = vld [vmem:[%s378 + $0x8] sm:$0xff]
                %383 = vst [vmem:[%s379 + $0x8] sm:$0xff] %v382
                %v384 = vld [vmem:[%s378 + $0x10] sm:$0xff]
                %385 = vst [vmem:[%s379 + $0x10] sm:$0xff] %v384
                %v386 = vld [vmem:[%s378 + $0x18] sm:$0xff]
                %387 = vst [vmem:[%s379 + $0x18] sm:$0xff] %v386
                %v388 = vld [vmem:[%s378 + $0x40] sm:$0xff]
                %389 = vst [vmem:[%s379 + $0x20] sm:$0xff] %v388
                %v390 = vld [vmem:[%s378 + $0x48] sm:$0xff]
                %391 = vst [vmem:[%s379 + $0x28] sm:$0xff] %v390
                %v392 = vld [vmem:[%s378 + $0x50] sm:$0xff]
                %393 = vst [vmem:[%s379 + $0x30] sm:$0xff] %v392
                %v394 = vld [vmem:[%s378 + $0x58] sm:$0xff]
                %395 = vst [vmem:[%s379 + $0x38] sm:$0xff] %v394
                %v396 = vld [vmem:[%s378 + $0x80] sm:$0xff]
                %397 = vst [vmem:[%s379 + $0x40] sm:$0xff] %v396
                %v398 = vld [vmem:[%s378 + $0x88] sm:$0xff]
                %399 = vst [vmem:[%s379 + $0x48] sm:$0xff] %v398
                %v400 = vld [vmem:[%s378 + $0x90] sm:$0xff]
                %401 = vst [vmem:[%s379 + $0x50] sm:$0xff] %v400
                %v402 = vld [vmem:[%s378 + $0x98] sm:$0xff]
                %403 = vst [vmem:[%s379 + $0x58] sm:$0xff] %v402
                %v404 = vld [vmem:[%s378 + $0xc0] sm:$0xff]
                %405 = vst [vmem:[%s379 + $0x60] sm:$0xff] %v404
                %v406 = vld [vmem:[%s378 + $0xc8] sm:$0xff]
                %407 = vst [vmem:[%s379 + $0x68] sm:$0xff] %v406
                %v408 = vld [vmem:[%s378 + $0xd0] sm:$0xff]
                %409 = vst [vmem:[%s379 + $0x70] sm:$0xff] %v408
                %v410 = vld [vmem:[%s378 + $0xd8] sm:$0xff]
                %411 = vst [vmem:[%s379 + $0x78] sm:$0xff] %v410
                %v412 = vld [vmem:[%s378 + $0x100] sm:$0xff]
                %413 = vst [vmem:[%s379 + $0x80] sm:$0xff] %v412
                %v414 = vld [vmem:[%s378 + $0x108] sm:$0xff]
                %415 = vst [vmem:[%s379 + $0x88] sm:$0xff] %v414
                %v416 = vld [vmem:[%s378 + $0x110] sm:$0xff]
                %417 = vst [vmem:[%s379 + $0x90] sm:$0xff] %v416
                %v418 = vld [vmem:[%s378 + $0x118] sm:$0xff]
                %419 = vst [vmem:[%s379 + $0x98] sm:$0xff] %v418
                %v420 = vld [vmem:[%s378 + $0x140] sm:$0xff]
                %421 = vst [vmem:[%s379 + $0xa0] sm:$0xff] %v420
                %v422 = vld [vmem:[%s378 + $0x148] sm:$0xff]
                %423 = vst [vmem:[%s379 + $0xa8] sm:$0xff] %v422
                %v424 = vld [vmem:[%s378 + $0x150] sm:$0xff]
                %425 = vst [vmem:[%s379 + $0xb0] sm:$0xff] %v424
                %v426 = vld [vmem:[%s378 + $0x158] sm:$0xff]
                %427 = vst [vmem:[%s379 + $0xb8] sm:$0xff] %v426
                %v428 = vld [vmem:[%s378 + $0x180] sm:$0xff]
                %429 = vst [vmem:[%s379 + $0xc0] sm:$0xff] %v428
                %v430 = vld [vmem:[%s378 + $0x188] sm:$0xff]
                %431 = vst [vmem:[%s379 + $0xc8] sm:$0xff] %v430
                %v432 = vld [vmem:[%s378 + $0x190] sm:$0xff]
                %433 = vst [vmem:[%s379 + $0xd0] sm:$0xff] %v432
                %v434 = vld [vmem:[%s378 + $0x198] sm:$0xff]
                %435 = vst [vmem:[%s379 + $0xd8] sm:$0xff] %v434
                %v436 = vld [vmem:[%s378 + $0x1c0] sm:$0xff]
                %437 = vst [vmem:[%s379 + $0xe0] sm:$0xff] %v436
                %v438 = vld [vmem:[%s378 + $0x1c8] sm:$0xff]
                %439 = vst [vmem:[%s379 + $0xe8] sm:$0xff] %v438
                %v440 = vld [vmem:[%s378 + $0x1d0] sm:$0xff]
                %441 = vst [vmem:[%s379 + $0xf0] sm:$0xff] %v440
                %v442 = vld [vmem:[%s378 + $0x1d8] sm:$0xff]
                %443 = vst [vmem:[%s379 + $0xf8] sm:$0xff] %v442
                %v444 = vld [vmem:[%s378 + $0x200] sm:$0xff]
                %445 = vst [vmem:[%s379 + $0x100] sm:$0xff] %v444
                %v446 = vld [vmem:[%s378 + $0x208] sm:$0xff]
                %447 = vst [vmem:[%s379 + $0x108] sm:$0xff] %v446
                %v448 = vld [vmem:[%s378 + $0x210] sm:$0xff]
                %449 = vst [vmem:[%s379 + $0x110] sm:$0xff] %v448
                %v450 = vld [vmem:[%s378 + $0x218] sm:$0xff]
                %451 = vst [vmem:[%s379 + $0x118] sm:$0xff] %v450
                %v452 = vld [vmem:[%s378 + $0x240] sm:$0xff]
                %453 = vst [vmem:[%s379 + $0x120] sm:$0xff] %v452
                %v454 = vld [vmem:[%s378 + $0x248] sm:$0xff]
                %455 = vst [vmem:[%s379 + $0x128] sm:$0xff] %v454
                %v456 = vld [vmem:[%s378 + $0x250] sm:$0xff]
                %457 = vst [vmem:[%s379 + $0x130] sm:$0xff] %v456
                %v458 = vld [vmem:[%s378 + $0x258] sm:$0xff]
                %459 = vst [vmem:[%s379 + $0x138] sm:$0xff] %v458
                %v460 = vld [vmem:[%s378 + $0x280] sm:$0xff]
                %461 = vst [vmem:[%s379 + $0x140] sm:$0xff] %v460
                %v462 = vld [vmem:[%s378 + $0x288] sm:$0xff]
                %463 = vst [vmem:[%s379 + $0x148] sm:$0xff] %v462
                %v464 = vld [vmem:[%s378 + $0x290] sm:$0xff]
                %465 = vst [vmem:[%s379 + $0x150] sm:$0xff] %v464
                %v466 = vld [vmem:[%s378 + $0x298] sm:$0xff]
                %467 = vst [vmem:[%s379 + $0x158] sm:$0xff] %v466
                %v468 = vld [vmem:[%s378 + $0x2c0] sm:$0xff]
                %469 = vst [vmem:[%s379 + $0x160] sm:$0xff] %v468
                %v470 = vld [vmem:[%s378 + $0x2c8] sm:$0xff]
                %471 = vst [vmem:[%s379 + $0x168] sm:$0xff] %v470
                %v472 = vld [vmem:[%s378 + $0x2d0] sm:$0xff]
                %473 = vst [vmem:[%s379 + $0x170] sm:$0xff] %v472
                %v474 = vld [vmem:[%s378 + $0x2d8] sm:$0xff]
                %475 = vst [vmem:[%s379 + $0x178] sm:$0xff] %v474
                %v476 = vld [vmem:[%s378 + $0x300] sm:$0xff]
                %477 = vst [vmem:[%s379 + $0x180] sm:$0xff] %v476
                %v478 = vld [vmem:[%s378 + $0x308] sm:$0xff]
                %479 = vst [vmem:[%s379 + $0x188] sm:$0xff] %v478
                %v480 = vld [vmem:[%s378 + $0x310] sm:$0xff]
                %481 = vst [vmem:[%s379 + $0x190] sm:$0xff] %v480
                %v482 = vld [vmem:[%s378 + $0x318] sm:$0xff]
                %483 = vst [vmem:[%s379 + $0x198] sm:$0xff] %v482
                %v484 = vld [vmem:[%s378 + $0x340] sm:$0xff]
                %485 = vst [vmem:[%s379 + $0x1a0] sm:$0xff] %v484
                %v486 = vld [vmem:[%s378 + $0x348] sm:$0xff]
                %487 = vst [vmem:[%s379 + $0x1a8] sm:$0xff] %v486
                %v488 = vld [vmem:[%s378 + $0x350] sm:$0xff]
                %489 = vst [vmem:[%s379 + $0x1b0] sm:$0xff] %v488
                %v490 = vld [vmem:[%s378 + $0x358] sm:$0xff]
                %491 = vst [vmem:[%s379 + $0x1b8] sm:$0xff] %v490
                %v492 = vld [vmem:[%s378 + $0x380] sm:$0xff]
                %493 = vst [vmem:[%s379 + $0x1c0] sm:$0xff] %v492
                %v494 = vld [vmem:[%s378 + $0x388] sm:$0xff]
                %495 = vst [vmem:[%s379 + $0x1c8] sm:$0xff] %v494
                %v496 = vld [vmem:[%s378 + $0x390] sm:$0xff]
                %497 = vst [vmem:[%s379 + $0x1d0] sm:$0xff] %v496
                %v498 = vld [vmem:[%s378 + $0x398] sm:$0xff]
                %499 = vst [vmem:[%s379 + $0x1d8] sm:$0xff] %v498
                %v500 = vld [vmem:[%s378 + $0x3c0] sm:$0xff]
                %501 = vst [vmem:[%s379 + $0x1e0] sm:$0xff] %v500
                %v502 = vld [vmem:[%s378 + $0x3c8] sm:$0xff]
                %503 = vst [vmem:[%s379 + $0x1e8] sm:$0xff] %v502
                %v504 = vld [vmem:[%s378 + $0x3d0] sm:$0xff]
                %505 = vst [vmem:[%s379 + $0x1f0] sm:$0xff] %v504
                %v506 = vld [vmem:[%s378 + $0x3d8] sm:$0xff]
                %507 = vst [vmem:[%s379 + $0x1f8] sm:$0xff] %v506
                %v508 = vld [vmem:[%s378 + $0x400] sm:$0xff]
                %509 = vst [vmem:[%s379 + $0x200] sm:$0xff] %v508
                %v510 = vld [vmem:[%s378 + $0x408] sm:$0xff]
                %511 = vst [vmem:[%s379 + $0x208] sm:$0xff] %v510
                %v512 = vld [vmem:[%s378 + $0x410] sm:$0xff]
                %513 = vst [vmem:[%s379 + $0x210] sm:$0xff] %v512
                %v514 = vld [vmem:[%s378 + $0x418] sm:$0xff]
                %515 = vst [vmem:[%s379 + $0x218] sm:$0xff] %v514
                %v516 = vld [vmem:[%s378 + $0x440] sm:$0xff]
                %517 = vst [vmem:[%s379 + $0x220] sm:$0xff] %v516
                %v518 = vld [vmem:[%s378 + $0x448] sm:$0xff]
                %519 = vst [vmem:[%s379 + $0x228] sm:$0xff] %v518
                %v520 = vld [vmem:[%s378 + $0x450] sm:$0xff]
                %521 = vst [vmem:[%s379 + $0x230] sm:$0xff] %v520
                %v522 = vld [vmem:[%s378 + $0x458] sm:$0xff]
                %523 = vst [vmem:[%s379 + $0x238] sm:$0xff] %v522
                %v524 = vld [vmem:[%s378 + $0x480] sm:$0xff]
                %525 = vst [vmem:[%s379 + $0x240] sm:$0xff] %v524
                %v526 = vld [vmem:[%s378 + $0x488] sm:$0xff]
                %527 = vst [vmem:[%s379 + $0x248] sm:$0xff] %v526
                %v528 = vld [vmem:[%s378 + $0x490] sm:$0xff]
                %529 = vst [vmem:[%s379 + $0x250] sm:$0xff] %v528
                %v530 = vld [vmem:[%s378 + $0x498] sm:$0xff]
                %531 = vst [vmem:[%s379 + $0x258] sm:$0xff] %v530
                %v532 = vld [vmem:[%s378 + $0x4c0] sm:$0xff]
                %533 = vst [vmem:[%s379 + $0x260] sm:$0xff] %v532
                %v534 = vld [vmem:[%s378 + $0x4c8] sm:$0xff]
                %535 = vst [vmem:[%s379 + $0x268] sm:$0xff] %v534
                %v536 = vld [vmem:[%s378 + $0x4d0] sm:$0xff]
                %537 = vst [vmem:[%s379 + $0x270] sm:$0xff] %v536
                %v538 = vld [vmem:[%s378 + $0x4d8] sm:$0xff]
                %539 = vst [vmem:[%s379 + $0x278] sm:$0xff] %v538
                %v540 = vld [vmem:[%s378 + $0x500] sm:$0xff]
                %541 = vst [vmem:[%s379 + $0x280] sm:$0xff] %v540
                %v542 = vld [vmem:[%s378 + $0x508] sm:$0xff]
                %543 = vst [vmem:[%s379 + $0x288] sm:$0xff] %v542
                %v544 = vld [vmem:[%s378 + $0x510] sm:$0xff]
                %545 = vst [vmem:[%s379 + $0x290] sm:$0xff] %v544
                %v546 = vld [vmem:[%s378 + $0x518] sm:$0xff]
                %547 = vst [vmem:[%s379 + $0x298] sm:$0xff] %v546
                %v548 = vld [vmem:[%s378 + $0x540] sm:$0xff]
                %549 = vst [vmem:[%s379 + $0x2a0] sm:$0xff] %v548
                %v550 = vld [vmem:[%s378 + $0x548] sm:$0xff]
                %551 = vst [vmem:[%s379 + $0x2a8] sm:$0xff] %v550
                %v552 = vld [vmem:[%s378 + $0x550] sm:$0xff]
                %553 = vst [vmem:[%s379 + $0x2b0] sm:$0xff] %v552
                %v554 = vld [vmem:[%s378 + $0x558] sm:$0xff]
                %555 = vst [vmem:[%s379 + $0x2b8] sm:$0xff] %v554
                %v556 = vld [vmem:[%s378 + $0x580] sm:$0xff]
                %557 = vst [vmem:[%s379 + $0x2c0] sm:$0xff] %v556
                %v558 = vld [vmem:[%s378 + $0x588] sm:$0xff]
                %559 = vst [vmem:[%s379 + $0x2c8] sm:$0xff] %v558
                %v560 = vld [vmem:[%s378 + $0x590] sm:$0xff]
                %561 = vst [vmem:[%s379 + $0x2d0] sm:$0xff] %v560
                %v562 = vld [vmem:[%s378 + $0x598] sm:$0xff]
                %563 = vst [vmem:[%s379 + $0x2d8] sm:$0xff] %v562
                %v564 = vld [vmem:[%s378 + $0x5c0] sm:$0xff]
                %565 = vst [vmem:[%s379 + $0x2e0] sm:$0xff] %v564
                %v566 = vld [vmem:[%s378 + $0x5c8] sm:$0xff]
                %567 = vst [vmem:[%s379 + $0x2e8] sm:$0xff] %v566
                %v568 = vld [vmem:[%s378 + $0x5d0] sm:$0xff]
                %569 = vst [vmem:[%s379 + $0x2f0] sm:$0xff] %v568
                %v570 = vld [vmem:[%s378 + $0x5d8] sm:$0xff]
                %571 = vst [vmem:[%s379 + $0x2f8] sm:$0xff] %v570
                %v572 = vld [vmem:[%s378 + $0x600] sm:$0xff]
                %573 = vst [vmem:[%s379 + $0x300] sm:$0xff] %v572
                %v574 = vld [vmem:[%s378 + $0x608] sm:$0xff]
                %575 = vst [vmem:[%s379 + $0x308] sm:$0xff] %v574
                %v576 = vld [vmem:[%s378 + $0x610] sm:$0xff]
                %577 = vst [vmem:[%s379 + $0x310] sm:$0xff] %v576
                %v578 = vld [vmem:[%s378 + $0x618] sm:$0xff]
                %579 = vst [vmem:[%s379 + $0x318] sm:$0xff] %v578
                %v580 = vld [vmem:[%s378 + $0x640] sm:$0xff]
                %581 = vst [vmem:[%s379 + $0x320] sm:$0xff] %v580
                %v582 = vld [vmem:[%s378 + $0x648] sm:$0xff]
                %583 = vst [vmem:[%s379 + $0x328] sm:$0xff] %v582
                %v584 = vld [vmem:[%s378 + $0x650] sm:$0xff]
                %585 = vst [vmem:[%s379 + $0x330] sm:$0xff] %v584
                %v586 = vld [vmem:[%s378 + $0x658] sm:$0xff]
                %587 = vst [vmem:[%s379 + $0x338] sm:$0xff] %v586
                %v588 = vld [vmem:[%s378 + $0x680] sm:$0xff]
                %589 = vst [vmem:[%s379 + $0x340] sm:$0xff] %v588
                %v590 = vld [vmem:[%s378 + $0x688] sm:$0xff]
                %591 = vst [vmem:[%s379 + $0x348] sm:$0xff] %v590
                %v592 = vld [vmem:[%s378 + $0x690] sm:$0xff]
                %593 = vst [vmem:[%s379 + $0x350] sm:$0xff] %v592
                %v594 = vld [vmem:[%s378 + $0x698] sm:$0xff]
                %595 = vst [vmem:[%s379 + $0x358] sm:$0xff] %v594
                %v596 = vld [vmem:[%s378 + $0x6c0] sm:$0xff]
                %597 = vst [vmem:[%s379 + $0x360] sm:$0xff] %v596
                %v598 = vld [vmem:[%s378 + $0x6c8] sm:$0xff]
                %599 = vst [vmem:[%s379 + $0x368] sm:$0xff] %v598
                %v600 = vld [vmem:[%s378 + $0x6d0] sm:$0xff]
                %601 = vst [vmem:[%s379 + $0x370] sm:$0xff] %v600
                %v602 = vld [vmem:[%s378 + $0x6d8] sm:$0xff]
                %603 = vst [vmem:[%s379 + $0x378] sm:$0xff] %v602
                %v604 = vld [vmem:[%s378 + $0x700] sm:$0xff]
                %605 = vst [vmem:[%s379 + $0x380] sm:$0xff] %v604
                %v606 = vld [vmem:[%s378 + $0x708] sm:$0xff]
                %607 = vst [vmem:[%s379 + $0x388] sm:$0xff] %v606
                %v608 = vld [vmem:[%s378 + $0x710] sm:$0xff]
                %609 = vst [vmem:[%s379 + $0x390] sm:$0xff] %v608
                %v610 = vld [vmem:[%s378 + $0x718] sm:$0xff]
                %611 = vst [vmem:[%s379 + $0x398] sm:$0xff] %v610
                %v612 = vld [vmem:[%s378 + $0x740] sm:$0xff]
                %613 = vst [vmem:[%s379 + $0x3a0] sm:$0xff] %v612
                %v614 = vld [vmem:[%s378 + $0x748] sm:$0xff]
                %615 = vst [vmem:[%s379 + $0x3a8] sm:$0xff] %v614
                %v616 = vld [vmem:[%s378 + $0x750] sm:$0xff]
                %617 = vst [vmem:[%s379 + $0x3b0] sm:$0xff] %v616
                %v618 = vld [vmem:[%s378 + $0x758] sm:$0xff]
                %619 = vst [vmem:[%s379 + $0x3b8] sm:$0xff] %v618
                %v620 = vld [vmem:[%s378 + $0x780] sm:$0xff]
                %621 = vst [vmem:[%s379 + $0x3c0] sm:$0xff] %v620
                %v622 = vld [vmem:[%s378 + $0x788] sm:$0xff]
                %623 = vst [vmem:[%s379 + $0x3c8] sm:$0xff] %v622
                %v624 = vld [vmem:[%s378 + $0x790] sm:$0xff]
                %625 = vst [vmem:[%s379 + $0x3d0] sm:$0xff] %v624
                %v626 = vld [vmem:[%s378 + $0x798] sm:$0xff]
                %627 = vst [vmem:[%s379 + $0x3d8] sm:$0xff] %v626
                %v628 = vld [vmem:[%s378 + $0x7c0] sm:$0xff]
                %629 = vst [vmem:[%s379 + $0x3e0] sm:$0xff] %v628
                %v630 = vld [vmem:[%s378 + $0x7c8] sm:$0xff]
                %631 = vst [vmem:[%s379 + $0x3e8] sm:$0xff] %v630
                %v632 = vld [vmem:[%s378 + $0x7d0] sm:$0xff]
                %633 = vst [vmem:[%s379 + $0x3f0] sm:$0xff] %v632
                %v634 = vld [vmem:[%s378 + $0x7d8] sm:$0xff]
                %635 = vst [vmem:[%s379 + $0x3f8] sm:$0xff] %v634
                %v636 = vld [vmem:[%s378 + $0x800] sm:$0xff]
                %637 = vst [vmem:[%s379 + $0x400] sm:$0xff] %v636
                %v638 = vld [vmem:[%s378 + $0x808] sm:$0xff]
                %639 = vst [vmem:[%s379 + $0x408] sm:$0xff] %v638
                %v640 = vld [vmem:[%s378 + $0x810] sm:$0xff]
                %641 = vst [vmem:[%s379 + $0x410] sm:$0xff] %v640
                %v642 = vld [vmem:[%s378 + $0x818] sm:$0xff]
                %643 = vst [vmem:[%s379 + $0x418] sm:$0xff] %v642
                %v644 = vld [vmem:[%s378 + $0x840] sm:$0xff]
                %645 = vst [vmem:[%s379 + $0x420] sm:$0xff] %v644
                %v646 = vld [vmem:[%s378 + $0x848] sm:$0xff]
                %647 = vst [vmem:[%s379 + $0x428] sm:$0xff] %v646
                %v648 = vld [vmem:[%s378 + $0x850] sm:$0xff]
                %649 = vst [vmem:[%s379 + $0x430] sm:$0xff] %v648
                %v650 = vld [vmem:[%s378 + $0x858] sm:$0xff]
                %651 = vst [vmem:[%s379 + $0x438] sm:$0xff] %v650
                %v652 = vld [vmem:[%s378 + $0x880] sm:$0xff]
                %653 = vst [vmem:[%s379 + $0x440] sm:$0xff] %v652
                %v654 = vld [vmem:[%s378 + $0x888] sm:$0xff]
                %655 = vst [vmem:[%s379 + $0x448] sm:$0xff] %v654
                %v656 = vld [vmem:[%s378 + $0x890] sm:$0xff]
                %657 = vst [vmem:[%s379 + $0x450] sm:$0xff] %v656
                %v658 = vld [vmem:[%s378 + $0x898] sm:$0xff]
                %659 = vst [vmem:[%s379 + $0x458] sm:$0xff] %v658
                %v660 = vld [vmem:[%s378 + $0x8c0] sm:$0xff]
                %661 = vst [vmem:[%s379 + $0x460] sm:$0xff] %v660
                %v662 = vld [vmem:[%s378 + $0x8c8] sm:$0xff]
                %663 = vst [vmem:[%s379 + $0x468] sm:$0xff] %v662
                %v664 = vld [vmem:[%s378 + $0x8d0] sm:$0xff]
                %665 = vst [vmem:[%s379 + $0x470] sm:$0xff] %v664
                %v666 = vld [vmem:[%s378 + $0x8d8] sm:$0xff]
                %667 = vst [vmem:[%s379 + $0x478] sm:$0xff] %v666
                %v668 = vld [vmem:[%s378 + $0x900] sm:$0xff]
                %669 = vst [vmem:[%s379 + $0x480] sm:$0xff] %v668
                %v670 = vld [vmem:[%s378 + $0x908] sm:$0xff]
                %671 = vst [vmem:[%s379 + $0x488] sm:$0xff] %v670
                %v672 = vld [vmem:[%s378 + $0x910] sm:$0xff]
                %673 = vst [vmem:[%s379 + $0x490] sm:$0xff] %v672
                %v674 = vld [vmem:[%s378 + $0x918] sm:$0xff]
                %675 = vst [vmem:[%s379 + $0x498] sm:$0xff] %v674
                %v676 = vld [vmem:[%s378 + $0x940] sm:$0xff]
                %677 = vst [vmem:[%s379 + $0x4a0] sm:$0xff] %v676
                %v678 = vld [vmem:[%s378 + $0x948] sm:$0xff]
                %679 = vst [vmem:[%s379 + $0x4a8] sm:$0xff] %v678
                %v680 = vld [vmem:[%s378 + $0x950] sm:$0xff]
                %681 = vst [vmem:[%s379 + $0x4b0] sm:$0xff] %v680
                %v682 = vld [vmem:[%s378 + $0x958] sm:$0xff]
                %683 = vst [vmem:[%s379 + $0x4b8] sm:$0xff] %v682
                %v684 = vld [vmem:[%s378 + $0x980] sm:$0xff]
                %685 = vst [vmem:[%s379 + $0x4c0] sm:$0xff] %v684
                %v686 = vld [vmem:[%s378 + $0x988] sm:$0xff]
                %687 = vst [vmem:[%s379 + $0x4c8] sm:$0xff] %v686
                %v688 = vld [vmem:[%s378 + $0x990] sm:$0xff]
                %689 = vst [vmem:[%s379 + $0x4d0] sm:$0xff] %v688
                %v690 = vld [vmem:[%s378 + $0x998] sm:$0xff]
                %691 = vst [vmem:[%s379 + $0x4d8] sm:$0xff] %v690
                %v692 = vld [vmem:[%s378 + $0x9c0] sm:$0xff]
                %693 = vst [vmem:[%s379 + $0x4e0] sm:$0xff] %v692
                %v694 = vld [vmem:[%s378 + $0x9c8] sm:$0xff]
                %695 = vst [vmem:[%s379 + $0x4e8] sm:$0xff] %v694
                %v696 = vld [vmem:[%s378 + $0x9d0] sm:$0xff]
                %697 = vst [vmem:[%s379 + $0x4f0] sm:$0xff] %v696
                %v698 = vld [vmem:[%s378 + $0x9d8] sm:$0xff]
                %699 = vst [vmem:[%s379 + $0x4f8] sm:$0xff] %v698
                %v700 = vld [vmem:[%s378 + $0xa00] sm:$0xff]
                %701 = vst [vmem:[%s379 + $0x500] sm:$0xff] %v700
                %v702 = vld [vmem:[%s378 + $0xa08] sm:$0xff]
                %703 = vst [vmem:[%s379 + $0x508] sm:$0xff] %v702
                %v704 = vld [vmem:[%s378 + $0xa10] sm:$0xff]
                %705 = vst [vmem:[%s379 + $0x510] sm:$0xff] %v704
                %v706 = vld [vmem:[%s378 + $0xa18] sm:$0xff]
                %707 = vst [vmem:[%s379 + $0x518] sm:$0xff] %v706
                %v708 = vld [vmem:[%s378 + $0xa40] sm:$0xff]
                %709 = vst [vmem:[%s379 + $0x520] sm:$0xff] %v708
                %v710 = vld [vmem:[%s378 + $0xa48] sm:$0xff]
                %711 = vst [vmem:[%s379 + $0x528] sm:$0xff] %v710
                %v712 = vld [vmem:[%s378 + $0xa50] sm:$0xff]
                %713 = vst [vmem:[%s379 + $0x530] sm:$0xff] %v712
                %v714 = vld [vmem:[%s378 + $0xa58] sm:$0xff]
                %715 = vst [vmem:[%s379 + $0x538] sm:$0xff] %v714
                %v716 = vld [vmem:[%s378 + $0xa80] sm:$0xff]
                %717 = vst [vmem:[%s379 + $0x540] sm:$0xff] %v716
                %v718 = vld [vmem:[%s378 + $0xa88] sm:$0xff]
                %719 = vst [vmem:[%s379 + $0x548] sm:$0xff] %v718
                %v720 = vld [vmem:[%s378 + $0xa90] sm:$0xff]
                %721 = vst [vmem:[%s379 + $0x550] sm:$0xff] %v720
                %v722 = vld [vmem:[%s378 + $0xa98] sm:$0xff]
                %723 = vst [vmem:[%s379 + $0x558] sm:$0xff] %v722
                %v724 = vld [vmem:[%s378 + $0xac0] sm:$0xff]
                %725 = vst [vmem:[%s379 + $0x560] sm:$0xff] %v724
                %v726 = vld [vmem:[%s378 + $0xac8] sm:$0xff]
                %727 = vst [vmem:[%s379 + $0x568] sm:$0xff] %v726
                %v728 = vld [vmem:[%s378 + $0xad0] sm:$0xff]
                %729 = vst [vmem:[%s379 + $0x570] sm:$0xff] %v728
                %v730 = vld [vmem:[%s378 + $0xad8] sm:$0xff]
                %731 = vst [vmem:[%s379 + $0x578] sm:$0xff] %v730
                %v732 = vld [vmem:[%s378 + $0xb00] sm:$0xff]
                %733 = vst [vmem:[%s379 + $0x580] sm:$0xff] %v732
                %v734 = vld [vmem:[%s378 + $0xb08] sm:$0xff]
                %735 = vst [vmem:[%s379 + $0x588] sm:$0xff] %v734
                %v736 = vld [vmem:[%s378 + $0xb10] sm:$0xff]
                %737 = vst [vmem:[%s379 + $0x590] sm:$0xff] %v736
                %v738 = vld [vmem:[%s378 + $0xb18] sm:$0xff]
                %739 = vst [vmem:[%s379 + $0x598] sm:$0xff] %v738
                %v740 = vld [vmem:[%s378 + $0xb40] sm:$0xff]
                %741 = vst [vmem:[%s379 + $0x5a0] sm:$0xff] %v740
                %v742 = vld [vmem:[%s378 + $0xb48] sm:$0xff]
                %743 = vst [vmem:[%s379 + $0x5a8] sm:$0xff] %v742
                %v744 = vld [vmem:[%s378 + $0xb50] sm:$0xff]
                %745 = vst [vmem:[%s379 + $0x5b0] sm:$0xff] %v744
                %v746 = vld [vmem:[%s378 + $0xb58] sm:$0xff]
                %747 = vst [vmem:[%s379 + $0x5b8] sm:$0xff] %v746
                %v748 = vld [vmem:[%s378 + $0xb80] sm:$0xff]
                %749 = vst [vmem:[%s379 + $0x5c0] sm:$0xff] %v748
                %v750 = vld [vmem:[%s378 + $0xb88] sm:$0xff]
                %751 = vst [vmem:[%s379 + $0x5c8] sm:$0xff] %v750
                %v752 = vld [vmem:[%s378 + $0xb90] sm:$0xff]
                %753 = vst [vmem:[%s379 + $0x5d0] sm:$0xff] %v752
                %v754 = vld [vmem:[%s378 + $0xb98] sm:$0xff]
                %755 = vst [vmem:[%s379 + $0x5d8] sm:$0xff] %v754
                %v756 = vld [vmem:[%s378 + $0xbc0] sm:$0xff]
                %757 = vst [vmem:[%s379 + $0x5e0] sm:$0xff] %v756
                %v758 = vld [vmem:[%s378 + $0xbc8] sm:$0xff]
                %759 = vst [vmem:[%s379 + $0x5e8] sm:$0xff] %v758
                %v760 = vld [vmem:[%s378 + $0xbd0] sm:$0xff]
                %761 = vst [vmem:[%s379 + $0x5f0] sm:$0xff] %v760
                %v762 = vld [vmem:[%s378 + $0xbd8] sm:$0xff]
                %763 = vst [vmem:[%s379 + $0x5f8] sm:$0xff] %v762
                %v764 = vld [vmem:[%s378 + $0xc00] sm:$0xff]
                %765 = vst [vmem:[%s379 + $0x600] sm:$0xff] %v764
                %v766 = vld [vmem:[%s378 + $0xc08] sm:$0xff]
                %767 = vst [vmem:[%s379 + $0x608] sm:$0xff] %v766
                %v768 = vld [vmem:[%s378 + $0xc10] sm:$0xff]
                %769 = vst [vmem:[%s379 + $0x610] sm:$0xff] %v768
                %v770 = vld [vmem:[%s378 + $0xc18] sm:$0xff]
                %771 = vst [vmem:[%s379 + $0x618] sm:$0xff] %v770
                %v772 = vld [vmem:[%s378 + $0xc40] sm:$0xff]
                %773 = vst [vmem:[%s379 + $0x620] sm:$0xff] %v772
                %v774 = vld [vmem:[%s378 + $0xc48] sm:$0xff]
                %775 = vst [vmem:[%s379 + $0x628] sm:$0xff] %v774
                %v776 = vld [vmem:[%s378 + $0xc50] sm:$0xff]
                %777 = vst [vmem:[%s379 + $0x630] sm:$0xff] %v776
                %v778 = vld [vmem:[%s378 + $0xc58] sm:$0xff]
                %779 = vst [vmem:[%s379 + $0x638] sm:$0xff] %v778
                %v780 = vld [vmem:[%s378 + $0xc80] sm:$0xff]
                %781 = vst [vmem:[%s379 + $0x640] sm:$0xff] %v780
                %v782 = vld [vmem:[%s378 + $0xc88] sm:$0xff]
                %783 = vst [vmem:[%s379 + $0x648] sm:$0xff] %v782
                %v784 = vld [vmem:[%s378 + $0xc90] sm:$0xff]
                %785 = vst [vmem:[%s379 + $0x650] sm:$0xff] %v784
                %v786 = vld [vmem:[%s378 + $0xc98] sm:$0xff]
                %787 = vst [vmem:[%s379 + $0x658] sm:$0xff] %v786
                %v788 = vld [vmem:[%s378 + $0xcc0] sm:$0xff]
                %789 = vst [vmem:[%s379 + $0x660] sm:$0xff] %v788
                %v790 = vld [vmem:[%s378 + $0xcc8] sm:$0xff]
                %791 = vst [vmem:[%s379 + $0x668] sm:$0xff] %v790
                %v792 = vld [vmem:[%s378 + $0xcd0] sm:$0xff]
                %793 = vst [vmem:[%s379 + $0x670] sm:$0xff] %v792
                %v794 = vld [vmem:[%s378 + $0xcd8] sm:$0xff]
                %795 = vst [vmem:[%s379 + $0x678] sm:$0xff] %v794
                %v796 = vld [vmem:[%s378 + $0xd00] sm:$0xff]
                %797 = vst [vmem:[%s379 + $0x680] sm:$0xff] %v796
                %v798 = vld [vmem:[%s378 + $0xd08] sm:$0xff]
                %799 = vst [vmem:[%s379 + $0x688] sm:$0xff] %v798
                %v800 = vld [vmem:[%s378 + $0xd10] sm:$0xff]
                %801 = vst [vmem:[%s379 + $0x690] sm:$0xff] %v800
                %v802 = vld [vmem:[%s378 + $0xd18] sm:$0xff]
                %803 = vst [vmem:[%s379 + $0x698] sm:$0xff] %v802
                %v804 = vld [vmem:[%s378 + $0xd40] sm:$0xff]
                %805 = vst [vmem:[%s379 + $0x6a0] sm:$0xff] %v804
                %v806 = vld [vmem:[%s378 + $0xd48] sm:$0xff]
                %807 = vst [vmem:[%s379 + $0x6a8] sm:$0xff] %v806
                %v808 = vld [vmem:[%s378 + $0xd50] sm:$0xff]
                %809 = vst [vmem:[%s379 + $0x6b0] sm:$0xff] %v808
                %v810 = vld [vmem:[%s378 + $0xd58] sm:$0xff]
                %811 = vst [vmem:[%s379 + $0x6b8] sm:$0xff] %v810
                %v812 = vld [vmem:[%s378 + $0xd80] sm:$0xff]
                %813 = vst [vmem:[%s379 + $0x6c0] sm:$0xff] %v812
                %v814 = vld [vmem:[%s378 + $0xd88] sm:$0xff]
                %815 = vst [vmem:[%s379 + $0x6c8] sm:$0xff] %v814
                %v816 = vld [vmem:[%s378 + $0xd90] sm:$0xff]
                %817 = vst [vmem:[%s379 + $0x6d0] sm:$0xff] %v816
                %v818 = vld [vmem:[%s378 + $0xd98] sm:$0xff]
                %819 = vst [vmem:[%s379 + $0x6d8] sm:$0xff] %v818
                %v820 = vld [vmem:[%s378 + $0xdc0] sm:$0xff]
                %821 = vst [vmem:[%s379 + $0x6e0] sm:$0xff] %v820
                %v822 = vld [vmem:[%s378 + $0xdc8] sm:$0xff]
                %823 = vst [vmem:[%s379 + $0x6e8] sm:$0xff] %v822
                %v824 = vld [vmem:[%s378 + $0xdd0] sm:$0xff]
                %825 = vst [vmem:[%s379 + $0x6f0] sm:$0xff] %v824
                %v826 = vld [vmem:[%s378 + $0xdd8] sm:$0xff]
                %827 = vst [vmem:[%s379 + $0x6f8] sm:$0xff] %v826
                %v828 = vld [vmem:[%s378 + $0xe00] sm:$0xff]
                %829 = vst [vmem:[%s379 + $0x700] sm:$0xff] %v828
                %v830 = vld [vmem:[%s378 + $0xe08] sm:$0xff]
                %831 = vst [vmem:[%s379 + $0x708] sm:$0xff] %v830
                %v832 = vld [vmem:[%s378 + $0xe10] sm:$0xff]
                %833 = vst [vmem:[%s379 + $0x710] sm:$0xff] %v832
                %v834 = vld [vmem:[%s378 + $0xe18] sm:$0xff]
                %835 = vst [vmem:[%s379 + $0x718] sm:$0xff] %v834
                %v836 = vld [vmem:[%s378 + $0xe40] sm:$0xff]
                %837 = vst [vmem:[%s379 + $0x720] sm:$0xff] %v836
                %v838 = vld [vmem:[%s378 + $0xe48] sm:$0xff]
                %839 = vst [vmem:[%s379 + $0x728] sm:$0xff] %v838
                %v840 = vld [vmem:[%s378 + $0xe50] sm:$0xff]
                %841 = vst [vmem:[%s379 + $0x730] sm:$0xff] %v840
                %v842 = vld [vmem:[%s378 + $0xe58] sm:$0xff]
                %843 = vst [vmem:[%s379 + $0x738] sm:$0xff] %v842
                %v844 = vld [vmem:[%s378 + $0xe80] sm:$0xff]
                %845 = vst [vmem:[%s379 + $0x740] sm:$0xff] %v844
                %v846 = vld [vmem:[%s378 + $0xe88] sm:$0xff]
                %847 = vst [vmem:[%s379 + $0x748] sm:$0xff] %v846
                %v848 = vld [vmem:[%s378 + $0xe90] sm:$0xff]
                %849 = vst [vmem:[%s379 + $0x750] sm:$0xff] %v848
                %v850 = vld [vmem:[%s378 + $0xe98] sm:$0xff]
                %851 = vst [vmem:[%s379 + $0x758] sm:$0xff] %v850
                %v852 = vld [vmem:[%s378 + $0xec0] sm:$0xff]
                %853 = vst [vmem:[%s379 + $0x760] sm:$0xff] %v852
                %v854 = vld [vmem:[%s378 + $0xec8] sm:$0xff]
                %855 = vst [vmem:[%s379 + $0x768] sm:$0xff] %v854
                %v856 = vld [vmem:[%s378 + $0xed0] sm:$0xff]
                %857 = vst [vmem:[%s379 + $0x770] sm:$0xff] %v856
                %v858 = vld [vmem:[%s378 + $0xed8] sm:$0xff]
                %859 = vst [vmem:[%s379 + $0x778] sm:$0xff] %v858
                %v860 = vld [vmem:[%s378 + $0xf00] sm:$0xff]
                %861 = vst [vmem:[%s379 + $0x780] sm:$0xff] %v860
                %v862 = vld [vmem:[%s378 + $0xf08] sm:$0xff]
                %863 = vst [vmem:[%s379 + $0x788] sm:$0xff] %v862
                %v864 = vld [vmem:[%s378 + $0xf10] sm:$0xff]
                %865 = vst [vmem:[%s379 + $0x790] sm:$0xff] %v864
                %v866 = vld [vmem:[%s378 + $0xf18] sm:$0xff]
                %867 = vst [vmem:[%s379 + $0x798] sm:$0xff] %v866
                %v868 = vld [vmem:[%s378 + $0xf40] sm:$0xff]
                %869 = vst [vmem:[%s379 + $0x7a0] sm:$0xff] %v868
                %v870 = vld [vmem:[%s378 + $0xf48] sm:$0xff]
                %871 = vst [vmem:[%s379 + $0x7a8] sm:$0xff] %v870
                %v872 = vld [vmem:[%s378 + $0xf50] sm:$0xff]
                %873 = vst [vmem:[%s379 + $0x7b0] sm:$0xff] %v872
                %v874 = vld [vmem:[%s378 + $0xf58] sm:$0xff]
                %875 = vst [vmem:[%s379 + $0x7b8] sm:$0xff] %v874
                %v876 = vld [vmem:[%s378 + $0xf80] sm:$0xff]
                %877 = vst [vmem:[%s379 + $0x7c0] sm:$0xff] %v876
                %v878 = vld [vmem:[%s378 + $0xf88] sm:$0xff]
                %879 = vst [vmem:[%s379 + $0x7c8] sm:$0xff] %v878
                %v880 = vld [vmem:[%s378 + $0xf90] sm:$0xff]
                %881 = vst [vmem:[%s379 + $0x7d0] sm:$0xff] %v880
                %v882 = vld [vmem:[%s378 + $0xf98] sm:$0xff]
                %883 = vst [vmem:[%s379 + $0x7d8] sm:$0xff] %v882
                %v884 = vld [vmem:[%s378 + $0xfc0] sm:$0xff]
                %885 = vst [vmem:[%s379 + $0x7e0] sm:$0xff] %v884
                %v886 = vld [vmem:[%s378 + $0xfc8] sm:$0xff]
                %887 = vst [vmem:[%s379 + $0x7e8] sm:$0xff] %v886
                %v888 = vld [vmem:[%s378 + $0xfd0] sm:$0xff]
                %889 = vst [vmem:[%s379 + $0x7f0] sm:$0xff] %v888
                %v890 = vld [vmem:[%s378 + $0xfd8] sm:$0xff]
                %891 = vst [vmem:[%s379 + $0x7f8] sm:$0xff] %v890
                %v892 = vld [vmem:[%s378 + $0x1000] sm:$0xff]
                %893 = vst [vmem:[%s379 + $0x800] sm:$0xff] %v892
                %v894 = vld [vmem:[%s378 + $0x1008] sm:$0xff]
                %895 = vst [vmem:[%s379 + $0x808] sm:$0xff] %v894
                %v896 = vld [vmem:[%s378 + $0x1010] sm:$0xff]
                %897 = vst [vmem:[%s379 + $0x810] sm:$0xff] %v896
                %v898 = vld [vmem:[%s378 + $0x1018] sm:$0xff]
                %899 = vst [vmem:[%s379 + $0x818] sm:$0xff] %v898
                %v900 = vld [vmem:[%s378 + $0x1040] sm:$0xff]
                %901 = vst [vmem:[%s379 + $0x820] sm:$0xff] %v900
                %v902 = vld [vmem:[%s378 + $0x1048] sm:$0xff]
                %903 = vst [vmem:[%s379 + $0x828] sm:$0xff] %v902
                %v904 = vld [vmem:[%s378 + $0x1050] sm:$0xff]
                %905 = vst [vmem:[%s379 + $0x830] sm:$0xff] %v904
                %v906 = vld [vmem:[%s378 + $0x1058] sm:$0xff]
                %907 = vst [vmem:[%s379 + $0x838] sm:$0xff] %v906
                %v908 = vld [vmem:[%s378 + $0x1080] sm:$0xff]
                %909 = vst [vmem:[%s379 + $0x840] sm:$0xff] %v908
                %v910 = vld [vmem:[%s378 + $0x1088] sm:$0xff]
                %911 = vst [vmem:[%s379 + $0x848] sm:$0xff] %v910
                %v912 = vld [vmem:[%s378 + $0x1090] sm:$0xff]
                %913 = vst [vmem:[%s379 + $0x850] sm:$0xff] %v912
                %v914 = vld [vmem:[%s378 + $0x1098] sm:$0xff]
                %915 = vst [vmem:[%s379 + $0x858] sm:$0xff] %v914
                %v916 = vld [vmem:[%s378 + $0x10c0] sm:$0xff]
                %917 = vst [vmem:[%s379 + $0x860] sm:$0xff] %v916
                %v918 = vld [vmem:[%s378 + $0x10c8] sm:$0xff]
                %919 = vst [vmem:[%s379 + $0x868] sm:$0xff] %v918
                %v920 = vld [vmem:[%s378 + $0x10d0] sm:$0xff]
                %921 = vst [vmem:[%s379 + $0x870] sm:$0xff] %v920
                %v922 = vld [vmem:[%s378 + $0x10d8] sm:$0xff]
                %923 = vst [vmem:[%s379 + $0x878] sm:$0xff] %v922
                %v924 = vld [vmem:[%s378 + $0x1100] sm:$0xff]
                %925 = vst [vmem:[%s379 + $0x880] sm:$0xff] %v924
                %v926 = vld [vmem:[%s378 + $0x1108] sm:$0xff]
                %927 = vst [vmem:[%s379 + $0x888] sm:$0xff] %v926
                %v928 = vld [vmem:[%s378 + $0x1110] sm:$0xff]
                %929 = vst [vmem:[%s379 + $0x890] sm:$0xff] %v928
                %v930 = vld [vmem:[%s378 + $0x1118] sm:$0xff]
                %931 = vst [vmem:[%s379 + $0x898] sm:$0xff] %v930
                %v932 = vld [vmem:[%s378 + $0x1140] sm:$0xff]
                %933 = vst [vmem:[%s379 + $0x8a0] sm:$0xff] %v932
                %v934 = vld [vmem:[%s378 + $0x1148] sm:$0xff]
                %935 = vst [vmem:[%s379 + $0x8a8] sm:$0xff] %v934
                %v936 = vld [vmem:[%s378 + $0x1150] sm:$0xff]
                %937 = vst [vmem:[%s379 + $0x8b0] sm:$0xff] %v936
                %v938 = vld [vmem:[%s378 + $0x1158] sm:$0xff]
                %939 = vst [vmem:[%s379 + $0x8b8] sm:$0xff] %v938
                %v940 = vld [vmem:[%s378 + $0x1180] sm:$0xff]
                %941 = vst [vmem:[%s379 + $0x8c0] sm:$0xff] %v940
                %v942 = vld [vmem:[%s378 + $0x1188] sm:$0xff]
                %943 = vst [vmem:[%s379 + $0x8c8] sm:$0xff] %v942
                %v944 = vld [vmem:[%s378 + $0x1190] sm:$0xff]
                %945 = vst [vmem:[%s379 + $0x8d0] sm:$0xff] %v944
                %v946 = vld [vmem:[%s378 + $0x1198] sm:$0xff]
                %947 = vst [vmem:[%s379 + $0x8d8] sm:$0xff] %v946
                %v948 = vld [vmem:[%s378 + $0x11c0] sm:$0xff]
                %949 = vst [vmem:[%s379 + $0x8e0] sm:$0xff] %v948
                %v950 = vld [vmem:[%s378 + $0x11c8] sm:$0xff]
                %951 = vst [vmem:[%s379 + $0x8e8] sm:$0xff] %v950
                %v952 = vld [vmem:[%s378 + $0x11d0] sm:$0xff]
                %953 = vst [vmem:[%s379 + $0x8f0] sm:$0xff] %v952
                %v954 = vld [vmem:[%s378 + $0x11d8] sm:$0xff]
                %955 = vst [vmem:[%s379 + $0x8f8] sm:$0xff] %v954
                %v956 = vld [vmem:[%s378 + $0x1200] sm:$0xff]
                %957 = vst [vmem:[%s379 + $0x900] sm:$0xff] %v956
                %v958 = vld [vmem:[%s378 + $0x1208] sm:$0xff]
                %959 = vst [vmem:[%s379 + $0x908] sm:$0xff] %v958
                %v960 = vld [vmem:[%s378 + $0x1210] sm:$0xff]
                %961 = vst [vmem:[%s379 + $0x910] sm:$0xff] %v960
                %v962 = vld [vmem:[%s378 + $0x1218] sm:$0xff]
                %963 = vst [vmem:[%s379 + $0x918] sm:$0xff] %v962
                %v964 = vld [vmem:[%s378 + $0x1240] sm:$0xff]
                %965 = vst [vmem:[%s379 + $0x920] sm:$0xff] %v964
                %v966 = vld [vmem:[%s378 + $0x1248] sm:$0xff]
                %967 = vst [vmem:[%s379 + $0x928] sm:$0xff] %v966
                %v968 = vld [vmem:[%s378 + $0x1250] sm:$0xff]
                %969 = vst [vmem:[%s379 + $0x930] sm:$0xff] %v968
                %v970 = vld [vmem:[%s378 + $0x1258] sm:$0xff]
                %971 = vst [vmem:[%s379 + $0x938] sm:$0xff] %v970
                %v972 = vld [vmem:[%s378 + $0x1280] sm:$0xff]
                %973 = vst [vmem:[%s379 + $0x940] sm:$0xff] %v972
                %v974 = vld [vmem:[%s378 + $0x1288] sm:$0xff]
                %975 = vst [vmem:[%s379 + $0x948] sm:$0xff] %v974
                %v976 = vld [vmem:[%s378 + $0x1290] sm:$0xff]
                %977 = vst [vmem:[%s379 + $0x950] sm:$0xff] %v976
                %v978 = vld [vmem:[%s378 + $0x1298] sm:$0xff]
                %979 = vst [vmem:[%s379 + $0x958] sm:$0xff] %v978
                %v980 = vld [vmem:[%s378 + $0x12c0] sm:$0xff]
                %981 = vst [vmem:[%s379 + $0x960] sm:$0xff] %v980
                %v982 = vld [vmem:[%s378 + $0x12c8] sm:$0xff]
                %983 = vst [vmem:[%s379 + $0x968] sm:$0xff] %v982
                %v984 = vld [vmem:[%s378 + $0x12d0] sm:$0xff]
                %985 = vst [vmem:[%s379 + $0x970] sm:$0xff] %v984
                %v986 = vld [vmem:[%s378 + $0x12d8] sm:$0xff]
                %987 = vst [vmem:[%s379 + $0x978] sm:$0xff] %v986
                %v988 = vld [vmem:[%s378 + $0x1300] sm:$0xff]
                %989 = vst [vmem:[%s379 + $0x980] sm:$0xff] %v988
                %v990 = vld [vmem:[%s378 + $0x1308] sm:$0xff]
                %991 = vst [vmem:[%s379 + $0x988] sm:$0xff] %v990
                %v992 = vld [vmem:[%s378 + $0x1310] sm:$0xff]
                %993 = vst [vmem:[%s379 + $0x990] sm:$0xff] %v992
                %v994 = vld [vmem:[%s378 + $0x1318] sm:$0xff]
                %995 = vst [vmem:[%s379 + $0x998] sm:$0xff] %v994
                %v996 = vld [vmem:[%s378 + $0x1340] sm:$0xff]
                %997 = vst [vmem:[%s379 + $0x9a0] sm:$0xff] %v996
                %v998 = vld [vmem:[%s378 + $0x1348] sm:$0xff]
                %999 = vst [vmem:[%s379 + $0x9a8] sm:$0xff] %v998
                %v1000 = vld [vmem:[%s378 + $0x1350] sm:$0xff]
                %1001 = vst [vmem:[%s379 + $0x9b0] sm:$0xff] %v1000
                %v1002 = vld [vmem:[%s378 + $0x1358] sm:$0xff]
                %1003 = vst [vmem:[%s379 + $0x9b8] sm:$0xff] %v1002
              $region68: #{smpl_forward.1} parent=62 // loop_footer
                %s377 = sadd.s32 1, %s373
              $region69: #{smpl_forward.1} parent=62 // loop_footer_branch
                %372 = sbr.rel target = $region65
              $region70: #{smpl_forward.1} parent=62 // loop_exit
                _
            $region63: #{smpl_forward.1} parent=58 // pred_fallthru
              _
            // Predicated region
            $region71: #{smpl_forward.1} parent=58 // pred_check
              _
            $region72: #{smpl_forward.1} parent=58 // pred_check_branch
              %1005 = sbr.rel target = $region74
            $region73: #{smpl_forward.1} parent=58 // pred_region
              _
            $region74: #{smpl_forward.1} parent=58 // pred_fallthru
              _
          $region59: #{smpl_forward.1} parent=54 // pred_fallthru
            _
          %1006 = vnop
        $region55: #{smpl_forward.1} parent=27 // pred_fallthru
          _
        // Predicated region
        $region75: #{smpl_forward.1} parent=27 // pred_check
          %p1007 = pneg %p151
        $region76: #{smpl_forward.1} parent=27 // pred_check_branch
          %1009 = sbr.rel (%p1007) target = $region78
        $region77: #{smpl_forward.1} parent=27 // pred_region
          %s1010 = smul.u32 8, %s16
          %p1011 = scmp.lt.s32.totalorder %s1010, 15
          %s1012 = scalar_select %p1011, %s1010, 15
          %s1013 = smul.addr %s1012, 4
          %s1014 = scalar_lea.vmem %s5, %s1013
          %s1015 = smul.u32 8, %s16
        $region78: #{smpl_forward.1} parent=27 // pred_fallthru
          _
        // Predicated region
        $region79: #{smpl_forward.1} parent=27 // pred_check
          %p1016 = pneg %p177
        $region80: #{smpl_forward.1} parent=27 // pred_check_branch
          %1018 = sbr.rel (%p1016) target = $region82
        $region81: #{smpl_forward.1} parent=27 // pred_region
          %s1019 = sand.u32 %s167, 1
          %s1020 = scalar_lea.sflag [#allocation5], %s1019
          %s1021 = sand.u32 %s167, 1
          %s1022 = smul.addr %s1021, 192
          %s1023 = scalar_lea.vmem [#allocation4], %s1022
          %s1024 = smul.u32 8, %s16
          %s1026 = ssub.s32 3072, 3072
          %1027 = vsyncadd %s1020, %s1026
          %s1028 = smul.addr %s1024, 128
          %s1029 = scalar_lea.hbm %s6, %s1028
          %s1030 = sshll.u32 %s1023, 4
          %s1031 = int_to_ptr.vmem [resolvable:$true] %s1030
          %1036 = dma.hbm_to_vmem [thread:$0]  %s1029, 3072, %s1031, %s1020, 2048, 1024, 64
        $region82: #{smpl_forward.1} parent=27 // pred_fallthru
          _
      $region28: #{smpl_forward.1} parent=5 // pred_fallthru
        _
      %p1037 = scmp.le.s32.totalorder 1, %s16
      %p1038 = scmp.lt.s32.totalorder %s16, 3
      %p1039 = pnand %p1037, %p1038
      %p1040 = pneg %p1039
      // Predicated region
      $region83: #{smpl_forward.1} parent=5 // pred_check
        _
      $region84: #{smpl_forward.1} parent=5 // pred_check_branch
        %1042 = sbr.rel (%p1039) target = $region86
      $region85: #{smpl_forward.1} parent=5 // pred_region
        %s1043 = ssub.s32 %s16, 1
        %s1044 = sand.u32 %s92, 1
        %s1045 = sand.u32 %s92, 1
        %s1046 = smul.addr %s1045, 384
        %s1047 = scalar_lea.vmem [#allocation2], %s1046
        // Predicated region
        $region87: #{smpl_forward.1} parent=85 // pred_check
          %p1048 = pneg %p105
        $region88: #{smpl_forward.1} parent=85 // pred_check_branch
          %1050 = sbr.rel (%p1048) target = $region90
        $region89: #{smpl_forward.1} parent=85 // pred_region
          _
        $region90: #{smpl_forward.1} parent=85 // pred_fallthru
          _
        %s1051 = sand.u32 %s118, 1
        %s1052 = sand.u32 %s118, 1
        %s1053 = smul.addr %s1052, 2496
        %s1054 = scalar_lea.vmem [#allocation3], %s1053
        // Predicated region
        $region91: #{smpl_forward.1} parent=85 // pred_check
          %p1055 = pneg %p131
        $region92: #{smpl_forward.1} parent=85 // pred_check_branch
          %1057 = sbr.rel (%p1055) target = $region94
        $region93: #{smpl_forward.1} parent=85 // pred_region
          _
        $region94: #{smpl_forward.1} parent=85 // pred_fallthru
          _
        %s1058 = sand.u32 %s170, 1
        %s1059 = scalar_lea.sflag [#allocation5], %s1058
        %s1060 = sand.u32 %s170, 1
        %s1061 = smul.addr %s1060, 192
        %s1062 = scalar_lea.vmem [#allocation4], %s1061
        // Predicated region
        $region95: #{smpl_forward.1} parent=85 // pred_check
          %p1063 = pneg %p183
        $region96: #{smpl_forward.1} parent=85 // pred_check_branch
          %1065 = sbr.rel (%p1063) target = $region98
        $region97: #{smpl_forward.1} parent=85 // pred_region
          %1066 = dma.done %s1059, 3072
        $region98: #{smpl_forward.1} parent=85 // pred_fallthru
          _
        %p1067 = pneg %p37
        %p1068 = pneg %p34
        %p1069 = pneg %p58
        %p1070 = pneg %p55
        %p1071 = pneg %p79
        %p1072 = pneg %p76
        %s1073 = sand.u32 %s92, 1
        %s1074 = sand.u32 %s92, 1
        %s1075 = smul.addr %s1074, 384
        %s1076 = scalar_lea.vmem [#allocation2], %s1075
        %p1077 = pneg %p105
        %p1078 = pneg %p102
        %s1079 = sand.u32 %s118, 1
        %s1080 = sand.u32 %s118, 1
        %s1081 = smul.addr %s1080, 2496
        %s1082 = scalar_lea.vmem [#allocation3], %s1081
        %p1083 = pneg %p131
        %p1084 = pneg %p128
        %s1085 = smul.u32 8, %s21
        %p1086 = scmp.lt.s32.totalorder %s1085, 15
        %s1087 = scalar_select %p1086, %s1085, 15
        %s1088 = smul.addr %s1087, 4
        %s1089 = scalar_lea.vmem %s5, %s1088
        %p1090 = pneg %p157
        %p1091 = pneg %p154
        %s1092 = sand.u32 %s170, 1
        %s1093 = scalar_lea.sflag [#allocation5], %s1092
        %s1094 = sand.u32 %s170, 1
        %s1095 = smul.addr %s1094, 192
        %s1096 = scalar_lea.vmem [#allocation4], %s1095
        %p1097 = pneg %p183
        %p1098 = pneg %p180
        %p1099 = pneg %p209
        %p1100 = pneg %p206
        %s1101 = sand.u32 %s196, 1
        %s1102 = sand.u32 %s196, 1
        %s1103 = smul.addr %s1102, 64
        %s1104 = scalar_lea.vmem [#allocation6], %s1103
        %s1105 = smul.u32 8, %s21
        %s1106 = smul.u32 8, %s21
        %s1107 = smul.u32 8, %s21
        %p1108 = scmp.lt.s32.totalorder %s1107, 15
        %s1109 = scalar_select %p1108, %s1107, 15
        %s1110 = smul.addr %s1109, 4
        %s1111 = scalar_lea.vmem %s5, %s1110
        %s1112 = smul.u32 8, %s21
        %s1113 = smul.u32 8, %s21
        %s1114 = smul.u32 8, %s21
        %v1115 = vld [vmem:[%s0] sm:$0x3]
        %v1116 = vld [vmem:[%s1] sm:$0xf]
        %v1117 = vld [vmem:[%s2] sm:$0xff]
        %v1118 = vld [vmem:[%s2 + $0x8] sm:$0xff]
        %v1119 = vld [vmem:[%s2 + $0x10] sm:$0xff]
        %v1120 = vld [vmem:[%s2 + $0x18] sm:$0xff]
        %v1121 = vld [vmem:[%s1111] sm:$0x77]
        %v1122 = vld [vmem:[%s1111 + $0x8] sm:$0x77]
        %v1123 = vld [vmem:[%s1111 + $0x10] sm:$0x77]
        %v1124 = vld [vmem:[%s1111 + $0x18] sm:$0x77]
        %v1125 = vld [vmem:[%s1062] sm:$0xff]
        %v1126 = vld [vmem:[%s1062 + $0x8] sm:$0xff]
        %v1127 = vld [vmem:[%s1062 + $0x10] sm:$0xff]
        %v1128 = vld [vmem:[%s1062 + $0x18] sm:$0xff]
        %v1129 = vld [vmem:[%s1062 + $0x20] sm:$0xff]
        %v1130 = vld [vmem:[%s1062 + $0x28] sm:$0xff]
        %v1131 = vld [vmem:[%s1062 + $0x30] sm:$0xff]
        %v1132 = vld [vmem:[%s1062 + $0x38] sm:$0xff]
        %v1133 = vld [vmem:[%s1062 + $0x40] sm:$0xff]
        %v1134 = vld [vmem:[%s1062 + $0x48] sm:$0xff]
        %v1135 = vld [vmem:[%s1062 + $0x50] sm:$0xff]
        %v1136 = vld [vmem:[%s1062 + $0x58] sm:$0xff]
        %v1137 = vld [vmem:[%s1062 + $0x60] sm:$0xff]
        %v1138 = vld [vmem:[%s1062 + $0x68] sm:$0xff]
        %v1139 = vld [vmem:[%s1062 + $0x70] sm:$0xff]
        %v1140 = vld [vmem:[%s1062 + $0x78] sm:$0xff]
        %v1141 = vld [vmem:[%s1062 + $0x80] sm:$0xff]
        %v1142 = vld [vmem:[%s1062 + $0x88] sm:$0xff]
        %v1143 = vld [vmem:[%s1062 + $0x90] sm:$0xff]
        %v1144 = vld [vmem:[%s1062 + $0x98] sm:$0xff]
        %v1145 = vld [vmem:[%s1062 + $0xa0] sm:$0xff]
        %v1146 = vld [vmem:[%s1062 + $0xa8] sm:$0xff]
        %v1147 = vld [vmem:[%s1062 + $0xb0] sm:$0xff]
        %v1148 = vld [vmem:[%s1062 + $0xb8] sm:$0xff]
        %v1149 = vld [vmem:[%s1047] sm:$0xff]
        %v1150 = vld [vmem:[%s1047 + $0x8] sm:$0xff]
        %v1151 = vld [vmem:[%s1047 + $0x10] sm:$0xff]
        %v1152 = vld [vmem:[%s1047 + $0x18] sm:$0xff]
        %v1153 = vld [vmem:[%s1047 + $0x20] sm:$0xff]
        %v1154 = vld [vmem:[%s1047 + $0x28] sm:$0xff]
        %v1155 = vld [vmem:[%s1047 + $0x30] sm:$0xff]
        %v1156 = vld [vmem:[%s1047 + $0x38] sm:$0xff]
        %v1157 = vld [vmem:[%s1047 + $0x40] sm:$0x3]
        %v1158 = vld [vmem:[%s1047 + $0x48] sm:$0x3]
        %v1159 = vld [vmem:[%s1047 + $0x50] sm:$0x3]
        %v1160 = vld [vmem:[%s1047 + $0x58] sm:$0x3]
        %v1161 = vld [vmem:[%s1047 + $0x60] sm:$0x3]
        %v1162 = vld [vmem:[%s1047 + $0x68] sm:$0x3]
        %v1163 = vld [vmem:[%s1047 + $0x70] sm:$0x3]
        %v1164 = vld [vmem:[%s1047 + $0x78] sm:$0x3]
        %v1165 = vld [vmem:[%s1054] sm:$0xff]
        %v1166 = vld [vmem:[%s1054 + $0x8] sm:$0xff]
        %v1167 = vld [vmem:[%s1054 + $0x10] sm:$0xff]
        %v1168 = vld [vmem:[%s1054 + $0x18] sm:$0xff]
        %v1169 = vld [vmem:[%s1054 + $0x20] sm:$0xff]
        %v1170 = vld [vmem:[%s1054 + $0x28] sm:$0xff]
        %v1171 = vld [vmem:[%s1054 + $0x30] sm:$0xff]
        %v1172 = vld [vmem:[%s1054 + $0x38] sm:$0xff]
        %v1173 = vld [vmem:[%s1054 + $0x40] sm:$0xff]
        %v1174 = vld [vmem:[%s1054 + $0x48] sm:$0xff]
        %v1175 = vld [vmem:[%s1054 + $0x50] sm:$0xff]
        %v1176 = vld [vmem:[%s1054 + $0x58] sm:$0xff]
        %v1177 = vld [vmem:[%s1054 + $0x60] sm:$0xff]
        %v1178 = vld [vmem:[%s1054 + $0x68] sm:$0xff]
        %v1179 = vld [vmem:[%s1054 + $0x70] sm:$0xff]
        %v1180 = vld [vmem:[%s1054 + $0x78] sm:$0xff]
        %v1181 = vld [vmem:[%s1054 + $0x80] sm:$0xff]
        %v1182 = vld [vmem:[%s1054 + $0x88] sm:$0xff]
        %v1183 = vld [vmem:[%s1054 + $0x90] sm:$0xff]
        %v1184 = vld [vmem:[%s1054 + $0x98] sm:$0xff]
        %v1185 = vld [vmem:[%s1054 + $0xa0] sm:$0xff]
        %v1186 = vld [vmem:[%s1054 + $0xa8] sm:$0xff]
        %v1187 = vld [vmem:[%s1054 + $0xb0] sm:$0xff]
        %v1188 = vld [vmem:[%s1054 + $0xb8] sm:$0xff]
        %v1189 = vld [vmem:[%s1054 + $0xc0] sm:$0xff]
        %v1190 = vld [vmem:[%s1054 + $0xc8] sm:$0xff]
        %v1191 = vld [vmem:[%s1054 + $0xd0] sm:$0xff]
        %v1192 = vld [vmem:[%s1054 + $0xd8] sm:$0xff]
        %v1193 = vld [vmem:[%s1054 + $0xe0] sm:$0xff]
        %v1194 = vld [vmem:[%s1054 + $0xe8] sm:$0xff]
        %v1195 = vld [vmem:[%s1054 + $0xf0] sm:$0xff]
        %v1196 = vld [vmem:[%s1054 + $0xf8] sm:$0xff]
        %v1197 = vld [vmem:[%s1054 + $0x100] sm:$0xff]
        %v1198 = vld [vmem:[%s1054 + $0x108] sm:$0xff]
        %v1199 = vld [vmem:[%s1054 + $0x110] sm:$0xff]
        %v1200 = vld [vmem:[%s1054 + $0x118] sm:$0xff]
        %v1201 = vld [vmem:[%s1054 + $0x120] sm:$0xff]
        %v1202 = vld [vmem:[%s1054 + $0x128] sm:$0xff]
        %v1203 = vld [vmem:[%s1054 + $0x130] sm:$0xff]
        %v1204 = vld [vmem:[%s1054 + $0x138] sm:$0xff]
        %v1205 = vld [vmem:[%s1054 + $0x140] sm:$0xff]
        %v1206 = vld [vmem:[%s1054 + $0x148] sm:$0xff]
        %v1207 = vld [vmem:[%s1054 + $0x150] sm:$0xff]
        %v1208 = vld [vmem:[%s1054 + $0x158] sm:$0xff]
        %v1209 = vld [vmem:[%s1054 + $0x160] sm:$0xff]
        %v1210 = vld [vmem:[%s1054 + $0x168] sm:$0xff]
        %v1211 = vld [vmem:[%s1054 + $0x170] sm:$0xff]
        %v1212 = vld [vmem:[%s1054 + $0x178] sm:$0xff]
        %v1213 = vld [vmem:[%s1054 + $0x180] sm:$0xff]
        %v1214 = vld [vmem:[%s1054 + $0x188] sm:$0xff]
        %v1215 = vld [vmem:[%s1054 + $0x190] sm:$0xff]
        %v1216 = vld [vmem:[%s1054 + $0x198] sm:$0xff]
        %v1217 = vld [vmem:[%s1054 + $0x1a0] sm:$0xff]
        %v1218 = vld [vmem:[%s1054 + $0x1a8] sm:$0xff]
        %v1219 = vld [vmem:[%s1054 + $0x1b0] sm:$0xff]
        %v1220 = vld [vmem:[%s1054 + $0x1b8] sm:$0xff]
        %v1221 = vld [vmem:[%s1054 + $0x1c0] sm:$0xff]
        %v1222 = vld [vmem:[%s1054 + $0x1c8] sm:$0xff]
        %v1223 = vld [vmem:[%s1054 + $0x1d0] sm:$0xff]
        %v1224 = vld [vmem:[%s1054 + $0x1d8] sm:$0xff]
        %v1225 = vld [vmem:[%s1054 + $0x1e0] sm:$0xff]
        %v1226 = vld [vmem:[%s1054 + $0x1e8] sm:$0xff]
        %v1227 = vld [vmem:[%s1054 + $0x1f0] sm:$0xff]
        %v1228 = vld [vmem:[%s1054 + $0x1f8] sm:$0xff]
        %v1229 = vld [vmem:[%s1054 + $0x200] sm:$0xff]
        %v1230 = vld [vmem:[%s1054 + $0x208] sm:$0xff]
        %v1231 = vld [vmem:[%s1054 + $0x210] sm:$0xff]
        %v1232 = vld [vmem:[%s1054 + $0x218] sm:$0xff]
        %v1233 = vld [vmem:[%s1054 + $0x220] sm:$0xff]
        %v1234 = vld [vmem:[%s1054 + $0x228] sm:$0xff]
        %v1235 = vld [vmem:[%s1054 + $0x230] sm:$0xff]
        %v1236 = vld [vmem:[%s1054 + $0x238] sm:$0xff]
        %v1237 = vld [vmem:[%s1054 + $0x240] sm:$0xff]
        %v1238 = vld [vmem:[%s1054 + $0x248] sm:$0xff]
        %v1239 = vld [vmem:[%s1054 + $0x250] sm:$0xff]
        %v1240 = vld [vmem:[%s1054 + $0x258] sm:$0xff]
        %v1241 = vld [vmem:[%s1054 + $0x260] sm:$0xff]
        %v1242 = vld [vmem:[%s1054 + $0x268] sm:$0xff]
        %v1243 = vld [vmem:[%s1054 + $0x270] sm:$0xff]
        %v1244 = vld [vmem:[%s1054 + $0x278] sm:$0xff]
        %v1245 = vld [vmem:[%s1054 + $0x280] sm:$0xff]
        %v1246 = vld [vmem:[%s1054 + $0x288] sm:$0xff]
        %v1247 = vld [vmem:[%s1054 + $0x290] sm:$0xff]
        %v1248 = vld [vmem:[%s1054 + $0x298] sm:$0xff]
        %v1249 = vld [vmem:[%s1054 + $0x2a0] sm:$0xff]
        %v1250 = vld [vmem:[%s1054 + $0x2a8] sm:$0xff]
        %v1251 = vld [vmem:[%s1054 + $0x2b0] sm:$0xff]
        %v1252 = vld [vmem:[%s1054 + $0x2b8] sm:$0xff]
        %v1253 = vld [vmem:[%s1054 + $0x2c0] sm:$0xff]
        %v1254 = vld [vmem:[%s1054 + $0x2c8] sm:$0xff]
        %v1255 = vld [vmem:[%s1054 + $0x2d0] sm:$0xff]
        %v1256 = vld [vmem:[%s1054 + $0x2d8] sm:$0xff]
        %v1257 = vld [vmem:[%s1054 + $0x2e0] sm:$0xff]
        %v1258 = vld [vmem:[%s1054 + $0x2e8] sm:$0xff]
        %v1259 = vld [vmem:[%s1054 + $0x2f0] sm:$0xff]
        %v1260 = vld [vmem:[%s1054 + $0x2f8] sm:$0xff]
        %v1261 = vld [vmem:[%s1054 + $0x300] sm:$0xff]
        %v1262 = vld [vmem:[%s1054 + $0x308] sm:$0xff]
        %v1263 = vld [vmem:[%s1054 + $0x310] sm:$0xff]
        %v1264 = vld [vmem:[%s1054 + $0x318] sm:$0xff]
        %v1265 = vld [vmem:[%s1054 + $0x320] sm:$0xff]
        %v1266 = vld [vmem:[%s1054 + $0x328] sm:$0xff]
        %v1267 = vld [vmem:[%s1054 + $0x330] sm:$0xff]
        %v1268 = vld [vmem:[%s1054 + $0x338] sm:$0xff]
        %v1269 = vunpack.c.l.bf16 %v1165
        %v1270 = vunpack.c.h.bf16 %v1165
        %v1271 = vunpack.c.l.bf16 %v1166
        %v1272 = vunpack.c.h.bf16 %v1166
        %v1273 = vunpack.c.l.bf16 %v1167
        %v1274 = vunpack.c.h.bf16 %v1167
        %v1275 = vunpack.c.l.bf16 %v1168
        %v1276 = vunpack.c.h.bf16 %v1168
        %v1277 = vunpack.c.l.bf16 %v1169
        %v1278 = vunpack.c.h.bf16 %v1169
        %v1279 = vunpack.c.l.bf16 %v1170
        %v1280 = vunpack.c.h.bf16 %v1170
        %v1281 = vunpack.c.l.bf16 %v1171
        %v1282 = vunpack.c.h.bf16 %v1171
        %v1283 = vunpack.c.l.bf16 %v1172
        %v1284 = vunpack.c.h.bf16 %v1172
        %v1285 = vunpack.c.l.bf16 %v1173
        %v1286 = vunpack.c.h.bf16 %v1173
        %v1287 = vunpack.c.l.bf16 %v1174
        %v1288 = vunpack.c.h.bf16 %v1174
        %v1289 = vunpack.c.l.bf16 %v1175
        %v1290 = vunpack.c.h.bf16 %v1175
        %v1291 = vunpack.c.l.bf16 %v1176
        %v1292 = vunpack.c.h.bf16 %v1176
        %v1293 = vunpack.c.l.bf16 %v1177
        %v1294 = vunpack.c.h.bf16 %v1177
        %v1295 = vunpack.c.l.bf16 %v1178
        %v1296 = vunpack.c.h.bf16 %v1178
        %v1297 = vunpack.c.l.bf16 %v1179
        %v1298 = vunpack.c.h.bf16 %v1179
        %v1299 = vunpack.c.l.bf16 %v1180
        %v1300 = vunpack.c.h.bf16 %v1180
        %v1301 = vunpack.c.l.bf16 %v1181
        %v1302 = vunpack.c.h.bf16 %v1181
        %v1303 = vunpack.c.l.bf16 %v1182
        %v1304 = vunpack.c.h.bf16 %v1182
        %v1305 = vunpack.c.l.bf16 %v1183
        %v1306 = vunpack.c.h.bf16 %v1183
        %v1307 = vunpack.c.l.bf16 %v1184
        %v1308 = vunpack.c.h.bf16 %v1184
        %v1309 = vunpack.c.l.bf16 %v1185
        %v1310 = vunpack.c.h.bf16 %v1185
        %v1311 = vunpack.c.l.bf16 %v1186
        %v1312 = vunpack.c.h.bf16 %v1186
        %v1313 = vunpack.c.l.bf16 %v1187
        %v1314 = vunpack.c.h.bf16 %v1187
        %v1315 = vunpack.c.l.bf16 %v1188
        %v1316 = vunpack.c.h.bf16 %v1188
        %v1317 = vunpack.c.l.bf16 %v1189
        %v1318 = vunpack.c.h.bf16 %v1189
        %v1319 = vunpack.c.l.bf16 %v1190
        %v1320 = vunpack.c.h.bf16 %v1190
        %v1321 = vunpack.c.l.bf16 %v1191
        %v1322 = vunpack.c.h.bf16 %v1191
        %v1323 = vunpack.c.l.bf16 %v1192
        %v1324 = vunpack.c.h.bf16 %v1192
        %v1325 = vunpack.c.l.bf16 %v1193
        %v1326 = vunpack.c.h.bf16 %v1193
        %v1327 = vunpack.c.l.bf16 %v1194
        %v1328 = vunpack.c.h.bf16 %v1194
        %v1329 = vunpack.c.l.bf16 %v1195
        %v1330 = vunpack.c.h.bf16 %v1195
        %v1331 = vunpack.c.l.bf16 %v1196
        %v1332 = vunpack.c.h.bf16 %v1196
        %v1333 = vunpack.c.l.bf16 %v1197
        %v1334 = vunpack.c.h.bf16 %v1197
        %v1335 = vunpack.c.l.bf16 %v1198
        %v1336 = vunpack.c.h.bf16 %v1198
        %v1337 = vunpack.c.l.bf16 %v1199
        %v1338 = vunpack.c.h.bf16 %v1199
        %v1339 = vunpack.c.l.bf16 %v1200
        %v1340 = vunpack.c.h.bf16 %v1200
        %v1341 = vunpack.c.l.bf16 %v1201
        %v1342 = vunpack.c.h.bf16 %v1201
        %v1343 = vunpack.c.l.bf16 %v1202
        %v1344 = vunpack.c.h.bf16 %v1202
        %v1345 = vunpack.c.l.bf16 %v1203
        %v1346 = vunpack.c.h.bf16 %v1203
        %v1347 = vunpack.c.l.bf16 %v1204
        %v1348 = vunpack.c.h.bf16 %v1204
        %v1349 = vunpack.c.l.bf16 %v1205
        %v1350 = vunpack.c.h.bf16 %v1205
        %v1351 = vunpack.c.l.bf16 %v1206
        %v1352 = vunpack.c.h.bf16 %v1206
        %v1353 = vunpack.c.l.bf16 %v1207
        %v1354 = vunpack.c.h.bf16 %v1207
        %v1355 = vunpack.c.l.bf16 %v1208
        %v1356 = vunpack.c.h.bf16 %v1208
        %v1357 = vunpack.c.l.bf16 %v1209
        %v1358 = vunpack.c.h.bf16 %v1209
        %v1359 = vunpack.c.l.bf16 %v1210
        %v1360 = vunpack.c.h.bf16 %v1210
        %v1361 = vunpack.c.l.bf16 %v1211
        %v1362 = vunpack.c.h.bf16 %v1211
        %v1363 = vunpack.c.l.bf16 %v1212
        %v1364 = vunpack.c.h.bf16 %v1212
        %v1365 = vunpack.c.l.bf16 %v1213
        %v1366 = vunpack.c.h.bf16 %v1213
        %v1367 = vunpack.c.l.bf16 %v1214
        %v1368 = vunpack.c.h.bf16 %v1214
        %v1369 = vunpack.c.l.bf16 %v1215
        %v1370 = vunpack.c.h.bf16 %v1215
        %v1371 = vunpack.c.l.bf16 %v1216
        %v1372 = vunpack.c.h.bf16 %v1216
        %v1373 = vunpack.c.l.bf16 %v1217
        %v1374 = vunpack.c.h.bf16 %v1217
        %v1375 = vunpack.c.l.bf16 %v1218
        %v1376 = vunpack.c.h.bf16 %v1218
        %v1377 = vunpack.c.l.bf16 %v1219
        %v1378 = vunpack.c.h.bf16 %v1219
        %v1379 = vunpack.c.l.bf16 %v1220
        %v1380 = vunpack.c.h.bf16 %v1220
        %v1381 = vunpack.c.l.bf16 %v1221
        %v1382 = vunpack.c.h.bf16 %v1221
        %v1383 = vunpack.c.l.bf16 %v1222
        %v1384 = vunpack.c.h.bf16 %v1222
        %v1385 = vunpack.c.l.bf16 %v1223
        %v1386 = vunpack.c.h.bf16 %v1223
        %v1387 = vunpack.c.l.bf16 %v1224
        %v1388 = vunpack.c.h.bf16 %v1224
        %v1389 = vunpack.c.l.bf16 %v1225
        %v1390 = vunpack.c.h.bf16 %v1225
        %v1391 = vunpack.c.l.bf16 %v1226
        %v1392 = vunpack.c.h.bf16 %v1226
        %v1393 = vunpack.c.l.bf16 %v1227
        %v1394 = vunpack.c.h.bf16 %v1227
        %v1395 = vunpack.c.l.bf16 %v1228
        %v1396 = vunpack.c.h.bf16 %v1228
        %v1397 = vunpack.c.l.bf16 %v1229
        %v1398 = vunpack.c.h.bf16 %v1229
        %v1399 = vunpack.c.l.bf16 %v1230
        %v1400 = vunpack.c.h.bf16 %v1230
        %v1401 = vunpack.c.l.bf16 %v1231
        %v1402 = vunpack.c.h.bf16 %v1231
        %v1403 = vunpack.c.l.bf16 %v1232
        %v1404 = vunpack.c.h.bf16 %v1232
        %v1405 = vunpack.c.l.bf16 %v1233
        %v1406 = vunpack.c.h.bf16 %v1233
        %v1407 = vunpack.c.l.bf16 %v1234
        %v1408 = vunpack.c.h.bf16 %v1234
        %v1409 = vunpack.c.l.bf16 %v1235
        %v1410 = vunpack.c.h.bf16 %v1235
        %v1411 = vunpack.c.l.bf16 %v1236
        %v1412 = vunpack.c.h.bf16 %v1236
        %v1413 = vunpack.c.l.bf16 %v1237
        %v1414 = vunpack.c.h.bf16 %v1237
        %v1415 = vunpack.c.l.bf16 %v1238
        %v1416 = vunpack.c.h.bf16 %v1238
        %v1417 = vunpack.c.l.bf16 %v1239
        %v1418 = vunpack.c.h.bf16 %v1239
        %v1419 = vunpack.c.l.bf16 %v1240
        %v1420 = vunpack.c.h.bf16 %v1240
        %v1421 = vunpack.c.l.bf16 %v1241
        %v1422 = vunpack.c.h.bf16 %v1241
        %v1423 = vunpack.c.l.bf16 %v1242
        %v1424 = vunpack.c.h.bf16 %v1242
        %v1425 = vunpack.c.l.bf16 %v1243
        %v1426 = vunpack.c.h.bf16 %v1243
        %v1427 = vunpack.c.l.bf16 %v1244
        %v1428 = vunpack.c.h.bf16 %v1244
        %v1429 = vunpack.c.l.bf16 %v1245
        %v1430 = vunpack.c.h.bf16 %v1245
        %v1431 = vunpack.c.l.bf16 %v1246
        %v1432 = vunpack.c.h.bf16 %v1246
        %v1433 = vunpack.c.l.bf16 %v1247
        %v1434 = vunpack.c.h.bf16 %v1247
        %v1435 = vunpack.c.l.bf16 %v1248
        %v1436 = vunpack.c.h.bf16 %v1248
        %v1437 = vunpack.c.l.bf16 %v1249
        %v1438 = vunpack.c.h.bf16 %v1249
        %v1439 = vunpack.c.l.bf16 %v1250
        %v1440 = vunpack.c.h.bf16 %v1250
        %v1441 = vunpack.c.l.bf16 %v1251
        %v1442 = vunpack.c.h.bf16 %v1251
        %v1443 = vunpack.c.l.bf16 %v1252
        %v1444 = vunpack.c.h.bf16 %v1252
        %v1445 = vunpack.c.l.bf16 %v1253
        %v1446 = vunpack.c.h.bf16 %v1253
        %v1447 = vunpack.c.l.bf16 %v1254
        %v1448 = vunpack.c.h.bf16 %v1254
        %v1449 = vunpack.c.l.bf16 %v1255
        %v1450 = vunpack.c.h.bf16 %v1255
        %v1451 = vunpack.c.l.bf16 %v1256
        %v1452 = vunpack.c.h.bf16 %v1256
        %v1453 = vunpack.c.l.bf16 %v1257
        %v1454 = vunpack.c.h.bf16 %v1257
        %v1455 = vunpack.c.l.bf16 %v1258
        %v1456 = vunpack.c.h.bf16 %v1258
        %v1457 = vunpack.c.l.bf16 %v1259
        %v1458 = vunpack.c.h.bf16 %v1259
        %v1459 = vunpack.c.l.bf16 %v1260
        %v1460 = vunpack.c.h.bf16 %v1260
        %v1461 = vunpack.c.l.bf16 %v1261
        %v1462 = vunpack.c.h.bf16 %v1261
        %v1463 = vunpack.c.l.bf16 %v1262
        %v1464 = vunpack.c.h.bf16 %v1262
        %v1465 = vunpack.c.l.bf16 %v1263
        %v1466 = vunpack.c.h.bf16 %v1263
        %v1467 = vunpack.c.l.bf16 %v1264
        %v1468 = vunpack.c.h.bf16 %v1264
        %v1469 = vunpack.c.l.bf16 %v1265
        %v1470 = vunpack.c.h.bf16 %v1265
        %v1471 = vunpack.c.l.bf16 %v1266
        %v1472 = vunpack.c.h.bf16 %v1266
        %v1473 = vunpack.c.l.bf16 %v1267
        %v1474 = vunpack.c.h.bf16 %v1267
        %v1475 = vunpack.c.l.bf16 %v1268
        %v1476 = vunpack.c.h.bf16 %v1268
        %v1479 = vunpack.c.l.s4 1983009808
        %v1480 = vunpack.c.0.s8 %v1479
        %v1481 = vlaneseq
        %v1482 = vshrl.u32 %v1481, 7
        %v1483 = vsub.s32 %v1480, %v1482
        %v1484 = vrot.slane %v1116, %v1483
        %v1485 = vcombine.high %v1484, %v1484
        %vm1487 = vcmask 646144
        %v1488 = vsel %vm1487, %v1485, 0
        %vm1490 = vcmask 1046528
        %v1492 = vsel %vm1490, %v1469, 0
        %v1495 = vsel %vm1490, %v1470, 0
        %v1498 = vsel %vm1490, %v1471, 0
        %v1501 = vsel %vm1490, %v1472, 0
        %v1504 = vsel %vm1490, %v1473, 0
        %v1507 = vsel %vm1490, %v1474, 0
        %v1510 = vsel %vm1490, %v1475, 0
        %v1513 = vsel %vm1490, %v1476, 0
        %1515 = vmatprep.subr.mxu0 %v1390
        %1516 = vmatpush1.msra.mxu0 %v1389
        %1517 = vmatprep.subr.mxu0 %v1382
        %1518 = vmatpush1.msra.mxu0 %v1381
        %1519 = vmatprep.subr.mxu0 %v1374
        %1520 = vmatpush1.msra.mxu0 %v1373
        %1521 = vmatprep.subr.mxu0 %v1366
        %1522 = vmatpush1.msra.mxu0 %v1365
        %1523 = vmatprep.subr.mxu0 %v1358
        %1524 = vmatpush1.msra.mxu0 %v1357
        %1525 = vmatprep.subr.mxu0 %v1350
        %1526 = vmatpush1.msra.mxu0 %v1349
        %1527 = vmatprep.subr.mxu0 %v1342
        %1528 = vmatpush1.msra.mxu0 %v1341
        %1529 = vmatprep.subr.mxu0 %v1334
        %1530 = vmatpush1.msra.mxu0 %v1333
        %1531 = vmatprep.subr.mxu0 %v1326
        %1532 = vmatpush1.msra.mxu0 %v1325
        %1533 = vmatprep.subr.mxu0 %v1318
        %1534 = vmatpush1.msra.mxu0 %v1317
        %1535 = vmatprep.subr.mxu0 %v1310
        %1536 = vmatpush1.msra.mxu0 %v1309
        %1537 = vmatprep.subr.mxu0 %v1302
        %1538 = vmatpush1.msra.mxu0 %v1301
        %1539 = vmatprep.subr.mxu0 %v1294
        %1540 = vmatpush1.msra.mxu0 %v1293
        %1541 = vmatprep.subr.mxu0 %v1286
        %1542 = vmatpush1.msra.mxu0 %v1285
        %1543 = vmatprep.subr.mxu0 %v1278
        %1544 = vmatpush1.msra.mxu0 %v1277
        %1545 = vmatprep.subr.mxu0 %v1270
        %1546 = vmatpush1.msra.mxu0 %v1269
        %1547 = vmatprep.subr.mxu0 0.0
        %1548 = vmatpush2.msra.mxu0 0.0
        %1549 = vmatprep.subr.mxu0 0.0
        %1550 = vmatpush2.msra.mxu0 0.0
        %1551 = vmatprep.subr.mxu0 0.0
        %1552 = vmatpush2.msra.mxu0 0.0
        %1553 = vmatprep.subr.mxu0 0.0
        %1554 = vmatpush2.msra.mxu0 0.0
        %1555 = vmatprep.subr.mxu0 0.0
        %1556 = vmatpush2.msra.mxu0 0.0
        %1557 = vmatprep.subr.mxu0 0.0
        %1558 = vmatpush2.msra.mxu0 0.0
        %1559 = vmatprep.subr.mxu0 %v1495
        %1560 = vmatpush2.msra.mxu0 %v1492
        %1561 = vmatprep.subr.mxu0 %v1462
        %1562 = vmatpush2.msra.mxu0 %v1461
        %1563 = vmatprep.subr.mxu0 %v1454
        %1564 = vmatpush2.msra.mxu0 %v1453
        %1565 = vmatprep.subr.mxu0 %v1446
        %1566 = vmatpush2.msra.mxu0 %v1445
        %1567 = vmatprep.subr.mxu0 %v1438
        %1568 = vmatpush2.msra.mxu0 %v1437
        %1569 = vmatprep.subr.mxu0 %v1430
        %1570 = vmatpush2.msra.mxu0 %v1429
        %1571 = vmatprep.subr.mxu0 %v1422
        %1572 = vmatpush2.msra.mxu0 %v1421
        %1573 = vmatprep.subr.mxu0 %v1414
        %1574 = vmatpush2.msra.mxu0 %v1413
        %1575 = vmatprep.subr.mxu0 %v1406
        %1576 = vmatpush2.msra.mxu0 %v1405
        %1577 = vmatprep.subr.mxu0 %v1398
        %1578 = vmatpush2.msra.mxu0 %v1397
        %1579 = vmatprep.mubr.f32.mxu0 %v1488
        %1580 = vmatmul.mubr.f32.gmra.mxu0 %v1484
        %v1581 = vpop.f32.mrf.mxu0
        %v1582 = vadd.f32 0.0, %v1581
        %v1583 = vpop.f32.mrf.mxu0
        %v1584 = vadd.f32 0.0, %v1583
        %1585 = vdwg.mxu0
        %1586 = vmatprep.subr.mxu0 %v1392
        %1587 = vmatpush1.msra.mxu0 %v1391
        %1588 = vmatprep.subr.mxu0 %v1384
        %1589 = vmatpush1.msra.mxu0 %v1383
        %1590 = vmatprep.subr.mxu0 %v1376
        %1591 = vmatpush1.msra.mxu0 %v1375
        %1592 = vmatprep.subr.mxu0 %v1368
        %1593 = vmatpush1.msra.mxu0 %v1367
        %1594 = vmatprep.subr.mxu0 %v1360
        %1595 = vmatpush1.msra.mxu0 %v1359
        %1596 = vmatprep.subr.mxu0 %v1352
        %1597 = vmatpush1.msra.mxu0 %v1351
        %1598 = vmatprep.subr.mxu0 %v1344
        %1599 = vmatpush1.msra.mxu0 %v1343
        %1600 = vmatprep.subr.mxu0 %v1336
        %1601 = vmatpush1.msra.mxu0 %v1335
        %1602 = vmatprep.subr.mxu0 %v1328
        %1603 = vmatpush1.msra.mxu0 %v1327
        %1604 = vmatprep.subr.mxu0 %v1320
        %1605 = vmatpush1.msra.mxu0 %v1319
        %1606 = vmatprep.subr.mxu0 %v1312
        %1607 = vmatpush1.msra.mxu0 %v1311
        %1608 = vmatprep.subr.mxu0 %v1304
        %1609 = vmatpush1.msra.mxu0 %v1303
        %1610 = vmatprep.subr.mxu0 %v1296
        %1611 = vmatpush1.msra.mxu0 %v1295
        %1612 = vmatprep.subr.mxu0 %v1288
        %1613 = vmatpush1.msra.mxu0 %v1287
        %1614 = vmatprep.subr.mxu0 %v1280
        %1615 = vmatpush1.msra.mxu0 %v1279
        %1616 = vmatprep.subr.mxu0 %v1272
        %1617 = vmatpush1.msra.mxu0 %v1271
        %1618 = vmatprep.subr.mxu0 0.0
        %1619 = vmatpush2.msra.mxu0 0.0
        %1620 = vmatprep.subr.mxu0 0.0
        %1621 = vmatpush2.msra.mxu0 0.0
        %1622 = vmatprep.subr.mxu0 0.0
        %1623 = vmatpush2.msra.mxu0 0.0
        %1624 = vmatprep.subr.mxu0 0.0
        %1625 = vmatpush2.msra.mxu0 0.0
        %1626 = vmatprep.subr.mxu0 0.0
        %1627 = vmatpush2.msra.mxu0 0.0
        %1628 = vmatprep.subr.mxu0 0.0
        %1629 = vmatpush2.msra.mxu0 0.0
        %1630 = vmatprep.subr.mxu0 %v1501
        %1631 = vmatpush2.msra.mxu0 %v1498
        %1632 = vmatprep.subr.mxu0 %v1464
        %1633 = vmatpush2.msra.mxu0 %v1463
        %1634 = vmatprep.subr.mxu0 %v1456
        %1635 = vmatpush2.msra.mxu0 %v1455
        %1636 = vmatprep.subr.mxu0 %v1448
        %1637 = vmatpush2.msra.mxu0 %v1447
        %1638 = vmatprep.subr.mxu0 %v1440
        %1639 = vmatpush2.msra.mxu0 %v1439
        %1640 = vmatprep.subr.mxu0 %v1432
        %1641 = vmatpush2.msra.mxu0 %v1431
        %1642 = vmatprep.subr.mxu0 %v1424
        %1643 = vmatpush2.msra.mxu0 %v1423
        %1644 = vmatprep.subr.mxu0 %v1416
        %1645 = vmatpush2.msra.mxu0 %v1415
        %1646 = vmatprep.subr.mxu0 %v1408
        %1647 = vmatpush2.msra.mxu0 %v1407
        %1648 = vmatprep.subr.mxu0 %v1400
        %1649 = vmatpush2.msra.mxu0 %v1399
        %1650 = vmatprep.mubr.f32.mxu0 %v1488
        %1651 = vmatmul.mubr.f32.gmra.mxu0 %v1484
        %v1652 = vpop.f32.mrf.mxu0
        %v1653 = vadd.f32 0.0, %v1652
        %v1654 = vpop.f32.mrf.mxu0
        %v1655 = vadd.f32 0.0, %v1654
        %1656 = vdwg.mxu0
        %1657 = vmatprep.subr.mxu0 %v1394
        %1658 = vmatpush1.msra.mxu0 %v1393
        %1659 = vmatprep.subr.mxu0 %v1386
        %1660 = vmatpush1.msra.mxu0 %v1385
        %1661 = vmatprep.subr.mxu0 %v1378
        %1662 = vmatpush1.msra.mxu0 %v1377
        %1663 = vmatprep.subr.mxu0 %v1370
        %1664 = vmatpush1.msra.mxu0 %v1369
        %1665 = vmatprep.subr.mxu0 %v1362
        %1666 = vmatpush1.msra.mxu0 %v1361
        %1667 = vmatprep.subr.mxu0 %v1354
        %1668 = vmatpush1.msra.mxu0 %v1353
        %1669 = vmatprep.subr.mxu0 %v1346
        %1670 = vmatpush1.msra.mxu0 %v1345
        %1671 = vmatprep.subr.mxu0 %v1338
        %1672 = vmatpush1.msra.mxu0 %v1337
        %1673 = vmatprep.subr.mxu0 %v1330
        %1674 = vmatpush1.msra.mxu0 %v1329
        %1675 = vmatprep.subr.mxu0 %v1322
        %1676 = vmatpush1.msra.mxu0 %v1321
        %1677 = vmatprep.subr.mxu0 %v1314
        %1678 = vmatpush1.msra.mxu0 %v1313
        %1679 = vmatprep.subr.mxu0 %v1306
        %1680 = vmatpush1.msra.mxu0 %v1305
        %1681 = vmatprep.subr.mxu0 %v1298
        %1682 = vmatpush1.msra.mxu0 %v1297
        %1683 = vmatprep.subr.mxu0 %v1290
        %1684 = vmatpush1.msra.mxu0 %v1289
        %1685 = vmatprep.subr.mxu0 %v1282
        %1686 = vmatpush1.msra.mxu0 %v1281
        %1687 = vmatprep.subr.mxu0 %v1274
        %1688 = vmatpush1.msra.mxu0 %v1273
        %1689 = vmatprep.subr.mxu0 0.0
        %1690 = vmatpush2.msra.mxu0 0.0
        %1691 = vmatprep.subr.mxu0 0.0
        %1692 = vmatpush2.msra.mxu0 0.0
        %1693 = vmatprep.subr.mxu0 0.0
        %1694 = vmatpush2.msra.mxu0 0.0
        %1695 = vmatprep.subr.mxu0 0.0
        %1696 = vmatpush2.msra.mxu0 0.0
        %1697 = vmatprep.subr.mxu0 0.0
        %1698 = vmatpush2.msra.mxu0 0.0
        %1699 = vmatprep.subr.mxu0 0.0
        %1700 = vmatpush2.msra.mxu0 0.0
        %1701 = vmatprep.subr.mxu0 %v1507
        %1702 = vmatpush2.msra.mxu0 %v1504
        %1703 = vmatprep.subr.mxu0 %v1466
        %1704 = vmatpush2.msra.mxu0 %v1465
        %1705 = vmatprep.subr.mxu0 %v1458
        %1706 = vmatpush2.msra.mxu0 %v1457
        %1707 = vmatprep.subr.mxu0 %v1450
        %1708 = vmatpush2.msra.mxu0 %v1449
        %1709 = vmatprep.subr.mxu0 %v1442
        %1710 = vmatpush2.msra.mxu0 %v1441
        %1711 = vmatprep.subr.mxu0 %v1434
        %1712 = vmatpush2.msra.mxu0 %v1433
        %1713 = vmatprep.subr.mxu0 %v1426
        %1714 = vmatpush2.msra.mxu0 %v1425
        %1715 = vmatprep.subr.mxu0 %v1418
        %1716 = vmatpush2.msra.mxu0 %v1417
        %1717 = vmatprep.subr.mxu0 %v1410
        %1718 = vmatpush2.msra.mxu0 %v1409
        %1719 = vmatprep.subr.mxu0 %v1402
        %1720 = vmatpush2.msra.mxu0 %v1401
        %1721 = vmatprep.mubr.f32.mxu0 %v1488
        %1722 = vmatmul.mubr.f32.gmra.mxu0 %v1484
        %v1723 = vpop.f32.mrf.mxu0
        %v1724 = vadd.f32 0.0, %v1723
        %v1725 = vpop.f32.mrf.mxu0
        %v1726 = vadd.f32 0.0, %v1725
        %1727 = vdwg.mxu0
        %1728 = vmatprep.subr.mxu0 %v1396
        %1729 = vmatpush1.msra.mxu0 %v1395
        %1730 = vmatprep.subr.mxu0 %v1388
        %1731 = vmatpush1.msra.mxu0 %v1387
        %1732 = vmatprep.subr.mxu0 %v1380
        %1733 = vmatpush1.msra.mxu0 %v1379
        %1734 = vmatprep.subr.mxu0 %v1372
        %1735 = vmatpush1.msra.mxu0 %v1371
        %1736 = vmatprep.subr.mxu0 %v1364
        %1737 = vmatpush1.msra.mxu0 %v1363
        %1738 = vmatprep.subr.mxu0 %v1356
        %1739 = vmatpush1.msra.mxu0 %v1355
        %1740 = vmatprep.subr.mxu0 %v1348
        %1741 = vmatpush1.msra.mxu0 %v1347
        %1742 = vmatprep.subr.mxu0 %v1340
        %1743 = vmatpush1.msra.mxu0 %v1339
        %1744 = vmatprep.subr.mxu0 %v1332
        %1745 = vmatpush1.msra.mxu0 %v1331
        %1746 = vmatprep.subr.mxu0 %v1324
        %1747 = vmatpush1.msra.mxu0 %v1323
        %1748 = vmatprep.subr.mxu0 %v1316
        %1749 = vmatpush1.msra.mxu0 %v1315
        %1750 = vmatprep.subr.mxu0 %v1308
        %1751 = vmatpush1.msra.mxu0 %v1307
        %1752 = vmatprep.subr.mxu0 %v1300
        %1753 = vmatpush1.msra.mxu0 %v1299
        %1754 = vmatprep.subr.mxu0 %v1292
        %1755 = vmatpush1.msra.mxu0 %v1291
        %1756 = vmatprep.subr.mxu0 %v1284
        %1757 = vmatpush1.msra.mxu0 %v1283
        %1758 = vmatprep.subr.mxu0 %v1276
        %1759 = vmatpush1.msra.mxu0 %v1275
        %1760 = vmatprep.subr.mxu0 0.0
        %1761 = vmatpush2.msra.mxu0 0.0
        %1762 = vmatprep.subr.mxu0 0.0
        %1763 = vmatpush2.msra.mxu0 0.0
        %1764 = vmatprep.subr.mxu0 0.0
        %1765 = vmatpush2.msra.mxu0 0.0
        %1766 = vmatprep.subr.mxu0 0.0
        %1767 = vmatpush2.msra.mxu0 0.0
        %1768 = vmatprep.subr.mxu0 0.0
        %1769 = vmatpush2.msra.mxu0 0.0
        %1770 = vmatprep.subr.mxu0 0.0
        %1771 = vmatpush2.msra.mxu0 0.0
        %1772 = vmatprep.subr.mxu0 %v1513
        %1773 = vmatpush2.msra.mxu0 %v1510
        %1774 = vmatprep.subr.mxu0 %v1468
        %1775 = vmatpush2.msra.mxu0 %v1467
        %1776 = vmatprep.subr.mxu0 %v1460
        %1777 = vmatpush2.msra.mxu0 %v1459
        %1778 = vmatprep.subr.mxu0 %v1452
        %1779 = vmatpush2.msra.mxu0 %v1451
        %1780 = vmatprep.subr.mxu0 %v1444
        %1781 = vmatpush2.msra.mxu0 %v1443
        %1782 = vmatprep.subr.mxu0 %v1436
        %1783 = vmatpush2.msra.mxu0 %v1435
        %1784 = vmatprep.subr.mxu0 %v1428
        %1785 = vmatpush2.msra.mxu0 %v1427
        %1786 = vmatprep.subr.mxu0 %v1420
        %1787 = vmatpush2.msra.mxu0 %v1419
        %1788 = vmatprep.subr.mxu0 %v1412
        %1789 = vmatpush2.msra.mxu0 %v1411
        %1790 = vmatprep.subr.mxu0 %v1404
        %1791 = vmatpush2.msra.mxu0 %v1403
        %1792 = vmatprep.mubr.f32.mxu0 %v1488
        %1793 = vmatmul.mubr.f32.gmra.mxu0 %v1484
        %v1794 = vpop.f32.mrf.mxu0
        %v1795 = vadd.f32 0.0, %v1794
        %v1796 = vpop.f32.mrf.mxu0
        %v1797 = vadd.f32 0.0, %v1796
        %1798 = vdwg.mxu0
        %vm1799 = vcmask 80896
        %v1801 = vsel %vm1799, %v1115, 0
        %vm1803 = vcmask 1041408
        %v1805 = vsel %vm1803, %v1157, 0
        %v1808 = vsel %vm1803, %v1158, 0
        %v1811 = vsel %vm1803, %v1159, 0
        %v1814 = vsel %vm1803, %v1160, 0
        %v1817 = vsel %vm1803, %v1161, 0
        %v1820 = vsel %vm1803, %v1162, 0
        %v1823 = vsel %vm1803, %v1163, 0
        %v1826 = vsel %vm1803, %v1164, 0
        %1828 = vmatprep.subr.mxu0 0.0
        %1829 = vmatpush1.msra.mxu0 0.0
        %1830 = vmatprep.subr.mxu0 0.0
        %1831 = vmatpush1.msra.mxu0 0.0
        %1832 = vmatprep.subr.mxu0 0.0
        %1833 = vmatpush1.msra.mxu0 0.0
        %1834 = vmatprep.subr.mxu0 0.0
        %1835 = vmatpush1.msra.mxu0 0.0
        %1836 = vmatprep.subr.mxu0 0.0
        %1837 = vmatpush1.msra.mxu0 0.0
        %1838 = vmatprep.subr.mxu0 0.0
        %1839 = vmatpush1.msra.mxu0 0.0
        %1840 = vmatprep.subr.mxu0 0.0
        %1841 = vmatpush1.msra.mxu0 0.0
        %1842 = vmatprep.subr.mxu0 0.0
        %1843 = vmatpush1.msra.mxu0 0.0
        %1844 = vmatprep.subr.mxu0 0.0
        %1845 = vmatpush1.msra.mxu0 0.0
        %1846 = vmatprep.subr.mxu0 0.0
        %1847 = vmatpush1.msra.mxu0 0.0
        %1848 = vmatprep.subr.mxu0 0.0
        %1849 = vmatpush1.msra.mxu0 0.0
        %1850 = vmatprep.subr.mxu0 0.0
        %1851 = vmatpush1.msra.mxu0 0.0
        %1852 = vmatprep.subr.mxu0 0.0
        %1853 = vmatpush1.msra.mxu0 0.0
        %1854 = vmatprep.subr.mxu0 0.0
        %1855 = vmatpush1.msra.mxu0 0.0
        %1856 = vmatprep.subr.mxu0 %v1808
        %1857 = vmatpush1.msra.mxu0 %v1805
        %1858 = vmatprep.subr.mxu0 %v1150
        %1859 = vmatpush1.msra.mxu0 %v1149
        %1860 = vmatprep.subr.mxu0 0.0
        %1861 = vmatpush2.msra.mxu0 0.0
        %1862 = vmatprep.subr.mxu0 0.0
        %1863 = vmatpush2.msra.mxu0 0.0
        %1864 = vmatprep.subr.mxu0 0.0
        %1865 = vmatpush2.msra.mxu0 0.0
        %1866 = vmatprep.subr.mxu0 0.0
        %1867 = vmatpush2.msra.mxu0 0.0
        %1868 = vmatprep.subr.mxu0 0.0
        %1869 = vmatpush2.msra.mxu0 0.0
        %1870 = vmatprep.subr.mxu0 0.0
        %1871 = vmatpush2.msra.mxu0 0.0
        %1872 = vmatprep.subr.mxu0 0.0
        %1873 = vmatpush2.msra.mxu0 0.0
        %1874 = vmatprep.subr.mxu0 0.0
        %1875 = vmatpush2.msra.mxu0 0.0
        %1876 = vmatprep.subr.mxu0 0.0
        %1877 = vmatpush2.msra.mxu0 0.0
        %1878 = vmatprep.subr.mxu0 0.0
        %1879 = vmatpush2.msra.mxu0 0.0
        %1880 = vmatprep.subr.mxu0 0.0
        %1881 = vmatpush2.msra.mxu0 0.0
        %1882 = vmatprep.subr.mxu0 0.0
        %1883 = vmatpush2.msra.mxu0 0.0
        %1884 = vmatprep.subr.mxu0 0.0
        %1885 = vmatpush2.msra.mxu0 0.0
        %1886 = vmatprep.subr.mxu0 0.0
        %1887 = vmatpush2.msra.mxu0 0.0
        %1888 = vmatprep.subr.mxu0 0.0
        %1889 = vmatpush2.msra.mxu0 0.0
        %1890 = vmatprep.subr.mxu0 0.0
        %1891 = vmatpush2.msra.mxu0 0.0
        %1892 = vmatprep.mubr.f32.mxu0 0.0
        %1893 = vmatmul.mubr.f32.gmra.mxu0 %v1801
        %v1894 = vpop.f32.mrf.mxu0
        %v1895 = vadd.f32 %v1582, %v1894
        %v1896 = vpop.f32.mrf.mxu0
        %v1897 = vadd.f32 %v1584, %v1896
        %1898 = vdwg.mxu0
        %1899 = vmatprep.subr.mxu0 0.0
        %1900 = vmatpush1.msra.mxu0 0.0
        %1901 = vmatprep.subr.mxu0 0.0
        %1902 = vmatpush1.msra.mxu0 0.0
        %1903 = vmatprep.subr.mxu0 0.0
        %1904 = vmatpush1.msra.mxu0 0.0
        %1905 = vmatprep.subr.mxu0 0.0
        %1906 = vmatpush1.msra.mxu0 0.0
        %1907 = vmatprep.subr.mxu0 0.0
        %1908 = vmatpush1.msra.mxu0 0.0
        %1909 = vmatprep.subr.mxu0 0.0
        %1910 = vmatpush1.msra.mxu0 0.0
        %1911 = vmatprep.subr.mxu0 0.0
        %1912 = vmatpush1.msra.mxu0 0.0
        %1913 = vmatprep.subr.mxu0 0.0
        %1914 = vmatpush1.msra.mxu0 0.0
        %1915 = vmatprep.subr.mxu0 0.0
        %1916 = vmatpush1.msra.mxu0 0.0
        %1917 = vmatprep.subr.mxu0 0.0
        %1918 = vmatpush1.msra.mxu0 0.0
        %1919 = vmatprep.subr.mxu0 0.0
        %1920 = vmatpush1.msra.mxu0 0.0
        %1921 = vmatprep.subr.mxu0 0.0
        %1922 = vmatpush1.msra.mxu0 0.0
        %1923 = vmatprep.subr.mxu0 0.0
        %1924 = vmatpush1.msra.mxu0 0.0
        %1925 = vmatprep.subr.mxu0 0.0
        %1926 = vmatpush1.msra.mxu0 0.0
        %1927 = vmatprep.subr.mxu0 %v1814
        %1928 = vmatpush1.msra.mxu0 %v1811
        %1929 = vmatprep.subr.mxu0 %v1152
        %1930 = vmatpush1.msra.mxu0 %v1151
        %1931 = vmatprep.subr.mxu0 0.0
        %1932 = vmatpush2.msra.mxu0 0.0
        %1933 = vmatprep.subr.mxu0 0.0
        %1934 = vmatpush2.msra.mxu0 0.0
        %1935 = vmatprep.subr.mxu0 0.0
        %1936 = vmatpush2.msra.mxu0 0.0
        %1937 = vmatprep.subr.mxu0 0.0
        %1938 = vmatpush2.msra.mxu0 0.0
        %1939 = vmatprep.subr.mxu0 0.0
        %1940 = vmatpush2.msra.mxu0 0.0
        %1941 = vmatprep.subr.mxu0 0.0
        %1942 = vmatpush2.msra.mxu0 0.0
        %1943 = vmatprep.subr.mxu0 0.0
        %1944 = vmatpush2.msra.mxu0 0.0
        %1945 = vmatprep.subr.mxu0 0.0
        %1946 = vmatpush2.msra.mxu0 0.0
        %1947 = vmatprep.subr.mxu0 0.0
        %1948 = vmatpush2.msra.mxu0 0.0
        %1949 = vmatprep.subr.mxu0 0.0
        %1950 = vmatpush2.msra.mxu0 0.0
        %1951 = vmatprep.subr.mxu0 0.0
        %1952 = vmatpush2.msra.mxu0 0.0
        %1953 = vmatprep.subr.mxu0 0.0
        %1954 = vmatpush2.msra.mxu0 0.0
        %1955 = vmatprep.subr.mxu0 0.0
        %1956 = vmatpush2.msra.mxu0 0.0
        %1957 = vmatprep.subr.mxu0 0.0
        %1958 = vmatpush2.msra.mxu0 0.0
        %1959 = vmatprep.subr.mxu0 0.0
        %1960 = vmatpush2.msra.mxu0 0.0
        %1961 = vmatprep.subr.mxu0 0.0
        %1962 = vmatpush2.msra.mxu0 0.0
        %1963 = vmatprep.mubr.f32.mxu0 0.0
        %1964 = vmatmul.mubr.f32.gmra.mxu0 %v1801
        %v1965 = vpop.f32.mrf.mxu0
        %v1966 = vadd.f32 %v1653, %v1965
        %v1967 = vpop.f32.mrf.mxu0
        %v1968 = vadd.f32 %v1655, %v1967
        %1969 = vdwg.mxu0
        %1970 = vmatprep.subr.mxu0 0.0
        %1971 = vmatpush1.msra.mxu0 0.0
        %1972 = vmatprep.subr.mxu0 0.0
        %1973 = vmatpush1.msra.mxu0 0.0
        %1974 = vmatprep.subr.mxu0 0.0
        %1975 = vmatpush1.msra.mxu0 0.0
        %1976 = vmatprep.subr.mxu0 0.0
        %1977 = vmatpush1.msra.mxu0 0.0
        %1978 = vmatprep.subr.mxu0 0.0
        %1979 = vmatpush1.msra.mxu0 0.0
        %1980 = vmatprep.subr.mxu0 0.0
        %1981 = vmatpush1.msra.mxu0 0.0
        %1982 = vmatprep.subr.mxu0 0.0
        %1983 = vmatpush1.msra.mxu0 0.0
        %1984 = vmatprep.subr.mxu0 0.0
        %1985 = vmatpush1.msra.mxu0 0.0
        %1986 = vmatprep.subr.mxu0 0.0
        %1987 = vmatpush1.msra.mxu0 0.0
        %1988 = vmatprep.subr.mxu0 0.0
        %1989 = vmatpush1.msra.mxu0 0.0
        %1990 = vmatprep.subr.mxu0 0.0
        %1991 = vmatpush1.msra.mxu0 0.0
        %1992 = vmatprep.subr.mxu0 0.0
        %1993 = vmatpush1.msra.mxu0 0.0
        %1994 = vmatprep.subr.mxu0 0.0
        %1995 = vmatpush1.msra.mxu0 0.0
        %1996 = vmatprep.subr.mxu0 0.0
        %1997 = vmatpush1.msra.mxu0 0.0
        %1998 = vmatprep.subr.mxu0 %v1820
        %1999 = vmatpush1.msra.mxu0 %v1817
        %2000 = vmatprep.subr.mxu0 %v1154
        %2001 = vmatpush1.msra.mxu0 %v1153
        %2002 = vmatprep.subr.mxu0 0.0
        %2003 = vmatpush2.msra.mxu0 0.0
        %2004 = vmatprep.subr.mxu0 0.0
        %2005 = vmatpush2.msra.mxu0 0.0
        %2006 = vmatprep.subr.mxu0 0.0
        %2007 = vmatpush2.msra.mxu0 0.0
        %2008 = vmatprep.subr.mxu0 0.0
        %2009 = vmatpush2.msra.mxu0 0.0
        %2010 = vmatprep.subr.mxu0 0.0
        %2011 = vmatpush2.msra.mxu0 0.0
        %2012 = vmatprep.subr.mxu0 0.0
        %2013 = vmatpush2.msra.mxu0 0.0
        %2014 = vmatprep.subr.mxu0 0.0
        %2015 = vmatpush2.msra.mxu0 0.0
        %2016 = vmatprep.subr.mxu0 0.0
        %2017 = vmatpush2.msra.mxu0 0.0
        %2018 = vmatprep.subr.mxu0 0.0
        %2019 = vmatpush2.msra.mxu0 0.0
        %2020 = vmatprep.subr.mxu0 0.0
        %2021 = vmatpush2.msra.mxu0 0.0
        %2022 = vmatprep.subr.mxu0 0.0
        %2023 = vmatpush2.msra.mxu0 0.0
        %2024 = vmatprep.subr.mxu0 0.0
        %2025 = vmatpush2.msra.mxu0 0.0
        %2026 = vmatprep.subr.mxu0 0.0
        %2027 = vmatpush2.msra.mxu0 0.0
        %2028 = vmatprep.subr.mxu0 0.0
        %2029 = vmatpush2.msra.mxu0 0.0
        %2030 = vmatprep.subr.mxu0 0.0
        %2031 = vmatpush2.msra.mxu0 0.0
        %2032 = vmatprep.subr.mxu0 0.0
        %2033 = vmatpush2.msra.mxu0 0.0
        %2034 = vmatprep.mubr.f32.mxu0 0.0
        %2035 = vmatmul.mubr.f32.gmra.mxu0 %v1801
        %v2036 = vpop.f32.mrf.mxu0
        %v2037 = vadd.f32 %v1724, %v2036
        %v2038 = vpop.f32.mrf.mxu0
        %v2039 = vadd.f32 %v1726, %v2038
        %2040 = vdwg.mxu0
        %2041 = vmatprep.subr.mxu0 0.0
        %2042 = vmatpush1.msra.mxu0 0.0
        %2043 = vmatprep.subr.mxu0 0.0
        %2044 = vmatpush1.msra.mxu0 0.0
        %2045 = vmatprep.subr.mxu0 0.0
        %2046 = vmatpush1.msra.mxu0 0.0
        %2047 = vmatprep.subr.mxu0 0.0
        %2048 = vmatpush1.msra.mxu0 0.0
        %2049 = vmatprep.subr.mxu0 0.0
        %2050 = vmatpush1.msra.mxu0 0.0
        %2051 = vmatprep.subr.mxu0 0.0
        %2052 = vmatpush1.msra.mxu0 0.0
        %2053 = vmatprep.subr.mxu0 0.0
        %2054 = vmatpush1.msra.mxu0 0.0
        %2055 = vmatprep.subr.mxu0 0.0
        %2056 = vmatpush1.msra.mxu0 0.0
        %2057 = vmatprep.subr.mxu0 0.0
        %2058 = vmatpush1.msra.mxu0 0.0
        %2059 = vmatprep.subr.mxu0 0.0
        %2060 = vmatpush1.msra.mxu0 0.0
        %2061 = vmatprep.subr.mxu0 0.0
        %2062 = vmatpush1.msra.mxu0 0.0
        %2063 = vmatprep.subr.mxu0 0.0
        %2064 = vmatpush1.msra.mxu0 0.0
        %2065 = vmatprep.subr.mxu0 0.0
        %2066 = vmatpush1.msra.mxu0 0.0
        %2067 = vmatprep.subr.mxu0 0.0
        %2068 = vmatpush1.msra.mxu0 0.0
        %2069 = vmatprep.subr.mxu0 %v1826
        %2070 = vmatpush1.msra.mxu0 %v1823
        %2071 = vmatprep.subr.mxu0 %v1156
        %2072 = vmatpush1.msra.mxu0 %v1155
        %2073 = vmatprep.subr.mxu0 0.0
        %2074 = vmatpush2.msra.mxu0 0.0
        %2075 = vmatprep.subr.mxu0 0.0
        %2076 = vmatpush2.msra.mxu0 0.0
        %2077 = vmatprep.subr.mxu0 0.0
        %2078 = vmatpush2.msra.mxu0 0.0
        %2079 = vmatprep.subr.mxu0 0.0
        %2080 = vmatpush2.msra.mxu0 0.0
        %2081 = vmatprep.subr.mxu0 0.0
        %2082 = vmatpush2.msra.mxu0 0.0
        %2083 = vmatprep.subr.mxu0 0.0
        %2084 = vmatpush2.msra.mxu0 0.0
        %2085 = vmatprep.subr.mxu0 0.0
        %2086 = vmatpush2.msra.mxu0 0.0
        %2087 = vmatprep.subr.mxu0 0.0
        %2088 = vmatpush2.msra.mxu0 0.0
        %2089 = vmatprep.subr.mxu0 0.0
        %2090 = vmatpush2.msra.mxu0 0.0
        %2091 = vmatprep.subr.mxu0 0.0
        %2092 = vmatpush2.msra.mxu0 0.0
        %2093 = vmatprep.subr.mxu0 0.0
        %2094 = vmatpush2.msra.mxu0 0.0
        %2095 = vmatprep.subr.mxu0 0.0
        %2096 = vmatpush2.msra.mxu0 0.0
        %2097 = vmatprep.subr.mxu0 0.0
        %2098 = vmatpush2.msra.mxu0 0.0
        %2099 = vmatprep.subr.mxu0 0.0
        %2100 = vmatpush2.msra.mxu0 0.0
        %2101 = vmatprep.subr.mxu0 0.0
        %2102 = vmatpush2.msra.mxu0 0.0
        %2103 = vmatprep.subr.mxu0 0.0
        %2104 = vmatpush2.msra.mxu0 0.0
        %2105 = vmatprep.mubr.f32.mxu0 0.0
        %2106 = vmatmul.mubr.f32.gmra.mxu0 %v1801
        %v2107 = vpop.f32.mrf.mxu0
        %v2108 = vadd.f32 %v1795, %v2107
        %v2109 = vpop.f32.mrf.mxu0
        %v2110 = vadd.f32 %v1797, %v2109
        %2111 = vdwg.mxu0
        %v2116 = vlaneseq
        %v2117 = vshrl.u32 %v2116, 7
        %v2118 = vsub.s32 0, %v2117
        %v2119 = vrot.slane %v1121, %v2118
        %v2120 = vlaneseq
        %v2121 = vshrl.u32 %v2120, 7
        %v2122 = vsub.s32 4, %v2121
        %v2123 = vrot.slane %v1121, %v2122
        %v2124 = vlaneseq
        %v2125 = vshrl.u32 %v2124, 7
        %v2126 = vsub.s32 0, %v2125
        %v2127 = vrot.slane %v1122, %v2126
        %v2128 = vlaneseq
        %v2129 = vshrl.u32 %v2128, 7
        %v2130 = vsub.s32 4, %v2129
        %v2131 = vrot.slane %v1122, %v2130
        %v2132 = vlaneseq
        %v2133 = vshrl.u32 %v2132, 7
        %v2134 = vsub.s32 0, %v2133
        %v2135 = vrot.slane %v1123, %v2134
        %v2136 = vlaneseq
        %v2137 = vshrl.u32 %v2136, 7
        %v2138 = vsub.s32 4, %v2137
        %v2139 = vrot.slane %v1123, %v2138
        %v2140 = vlaneseq
        %v2141 = vshrl.u32 %v2140, 7
        %v2142 = vsub.s32 0, %v2141
        %v2143 = vrot.slane %v1124, %v2142
        %v2144 = vlaneseq
        %v2145 = vshrl.u32 %v2144, 7
        %v2146 = vsub.s32 4, %v2145
        %v2147 = vrot.slane %v1124, %v2146
        %v2156 = vlaneseq
        %v2157 = vshrl.u32 %v2156, 7
        %v2158 = vsub.s32 0, %v2157
        %v2159 = vrot.slane %v2119, %v2158
        %v2160 = vlaneseq
        %v2161 = vshrl.u32 %v2160, 7
        %v2162 = vsub.s32 0, %v2161
        %v2163 = vrot.slane %v2123, %v2162
        %v2164 = vlaneseq
        %v2165 = vshrl.u32 %v2164, 7
        %v2166 = vsub.s32 0, %v2165
        %v2167 = vrot.slane %v2127, %v2166
        %v2168 = vlaneseq
        %v2169 = vshrl.u32 %v2168, 7
        %v2170 = vsub.s32 0, %v2169
        %v2171 = vrot.slane %v2131, %v2170
        %v2172 = vlaneseq
        %v2173 = vshrl.u32 %v2172, 7
        %v2174 = vsub.s32 0, %v2173
        %v2175 = vrot.slane %v2135, %v2174
        %v2176 = vlaneseq
        %v2177 = vshrl.u32 %v2176, 7
        %v2178 = vsub.s32 0, %v2177
        %v2179 = vrot.slane %v2139, %v2178
        %v2180 = vlaneseq
        %v2181 = vshrl.u32 %v2180, 7
        %v2182 = vsub.s32 0, %v2181
        %v2183 = vrot.slane %v2143, %v2182
        %v2184 = vlaneseq
        %v2185 = vshrl.u32 %v2184, 7
        %v2186 = vsub.s32 0, %v2185
        %v2187 = vrot.slane %v2147, %v2186
        %v2188 = vadd.f32 %v1895, %v2159
        %v2189 = vadd.f32 %v1897, %v2163
        %v2190 = vadd.f32 %v1966, %v2167
        %v2191 = vadd.f32 %v1968, %v2171
        %v2192 = vadd.f32 %v2037, %v2175
        %v2193 = vadd.f32 %v2039, %v2179
        %v2194 = vadd.f32 %v2108, %v2183
        %v2195 = vadd.f32 %v2110, %v2187
        %s2196 = scalar_lea.vmem %s1047, 128 [#allocation2]
        %v2197 = vld [vmem:[%s2196] sm:$0xff]
        %v2198 = vld [vmem:[%s2196 + $0x8] sm:$0xff]
        %v2199 = vld [vmem:[%s2196 + $0x10] sm:$0xff]
        %v2200 = vld [vmem:[%s2196 + $0x18] sm:$0xff]
        %v2201 = vld [vmem:[%s2196 + $0x20] sm:$0xff]
        %v2202 = vld [vmem:[%s2196 + $0x28] sm:$0xff]
        %v2203 = vld [vmem:[%s2196 + $0x30] sm:$0xff]
        %v2204 = vld [vmem:[%s2196 + $0x38] sm:$0xff]
        %v2205 = vld [vmem:[%s2196 + $0x40] sm:$0x3]
        %v2206 = vld [vmem:[%s2196 + $0x48] sm:$0x3]
        %v2207 = vld [vmem:[%s2196 + $0x50] sm:$0x3]
        %v2208 = vld [vmem:[%s2196 + $0x58] sm:$0x3]
        %v2209 = vld [vmem:[%s2196 + $0x60] sm:$0x3]
        %v2210 = vld [vmem:[%s2196 + $0x68] sm:$0x3]
        %v2211 = vld [vmem:[%s2196 + $0x70] sm:$0x3]
        %v2212 = vld [vmem:[%s2196 + $0x78] sm:$0x3]
        %s2213 = scalar_lea.vmem %s1054, 832 [#allocation3]
        %v2214 = vld [vmem:[%s2213] sm:$0xff]
        %v2215 = vld [vmem:[%s2213 + $0x8] sm:$0xff]
        %v2216 = vld [vmem:[%s2213 + $0x10] sm:$0xff]
        %v2217 = vld [vmem:[%s2213 + $0x18] sm:$0xff]
        %v2218 = vld [vmem:[%s2213 + $0x20] sm:$0xff]
        %v2219 = vld [vmem:[%s2213 + $0x28] sm:$0xff]
        %v2220 = vld [vmem:[%s2213 + $0x30] sm:$0xff]
        %v2221 = vld [vmem:[%s2213 + $0x38] sm:$0xff]
        %v2222 = vld [vmem:[%s2213 + $0x40] sm:$0xff]
        %v2223 = vld [vmem:[%s2213 + $0x48] sm:$0xff]
        %v2224 = vld [vmem:[%s2213 + $0x50] sm:$0xff]
        %v2225 = vld [vmem:[%s2213 + $0x58] sm:$0xff]
        %v2226 = vld [vmem:[%s2213 + $0x60] sm:$0xff]
        %v2227 = vld [vmem:[%s2213 + $0x68] sm:$0xff]
        %v2228 = vld [vmem:[%s2213 + $0x70] sm:$0xff]
        %v2229 = vld [vmem:[%s2213 + $0x78] sm:$0xff]
        %v2230 = vld [vmem:[%s2213 + $0x80] sm:$0xff]
        %v2231 = vld [vmem:[%s2213 + $0x88] sm:$0xff]
        %v2232 = vld [vmem:[%s2213 + $0x90] sm:$0xff]
        %v2233 = vld [vmem:[%s2213 + $0x98] sm:$0xff]
        %v2234 = vld [vmem:[%s2213 + $0xa0] sm:$0xff]
        %v2235 = vld [vmem:[%s2213 + $0xa8] sm:$0xff]
        %v2236 = vld [vmem:[%s2213 + $0xb0] sm:$0xff]
        %v2237 = vld [vmem:[%s2213 + $0xb8] sm:$0xff]
        %v2238 = vld [vmem:[%s2213 + $0xc0] sm:$0xff]
        %v2239 = vld [vmem:[%s2213 + $0xc8] sm:$0xff]
        %v2240 = vld [vmem:[%s2213 + $0xd0] sm:$0xff]
        %v2241 = vld [vmem:[%s2213 + $0xd8] sm:$0xff]
        %v2242 = vld [vmem:[%s2213 + $0xe0] sm:$0xff]
        %v2243 = vld [vmem:[%s2213 + $0xe8] sm:$0xff]
        %v2244 = vld [vmem:[%s2213 + $0xf0] sm:$0xff]
        %v2245 = vld [vmem:[%s2213 + $0xf8] sm:$0xff]
        %v2246 = vld [vmem:[%s2213 + $0x100] sm:$0xff]
        %v2247 = vld [vmem:[%s2213 + $0x108] sm:$0xff]
        %v2248 = vld [vmem:[%s2213 + $0x110] sm:$0xff]
        %v2249 = vld [vmem:[%s2213 + $0x118] sm:$0xff]
        %v2250 = vld [vmem:[%s2213 + $0x120] sm:$0xff]
        %v2251 = vld [vmem:[%s2213 + $0x128] sm:$0xff]
        %v2252 = vld [vmem:[%s2213 + $0x130] sm:$0xff]
        %v2253 = vld [vmem:[%s2213 + $0x138] sm:$0xff]
        %v2254 = vld [vmem:[%s2213 + $0x140] sm:$0xff]
        %v2255 = vld [vmem:[%s2213 + $0x148] sm:$0xff]
        %v2256 = vld [vmem:[%s2213 + $0x150] sm:$0xff]
        %v2257 = vld [vmem:[%s2213 + $0x158] sm:$0xff]
        %v2258 = vld [vmem:[%s2213 + $0x160] sm:$0xff]
        %v2259 = vld [vmem:[%s2213 + $0x168] sm:$0xff]
        %v2260 = vld [vmem:[%s2213 + $0x170] sm:$0xff]
        %v2261 = vld [vmem:[%s2213 + $0x178] sm:$0xff]
        %v2262 = vld [vmem:[%s2213 + $0x180] sm:$0xff]
        %v2263 = vld [vmem:[%s2213 + $0x188] sm:$0xff]
        %v2264 = vld [vmem:[%s2213 + $0x190] sm:$0xff]
        %v2265 = vld [vmem:[%s2213 + $0x198] sm:$0xff]
        %v2266 = vld [vmem:[%s2213 + $0x1a0] sm:$0xff]
        %v2267 = vld [vmem:[%s2213 + $0x1a8] sm:$0xff]
        %v2268 = vld [vmem:[%s2213 + $0x1b0] sm:$0xff]
        %v2269 = vld [vmem:[%s2213 + $0x1b8] sm:$0xff]
        %v2270 = vld [vmem:[%s2213 + $0x1c0] sm:$0xff]
        %v2271 = vld [vmem:[%s2213 + $0x1c8] sm:$0xff]
        %v2272 = vld [vmem:[%s2213 + $0x1d0] sm:$0xff]
        %v2273 = vld [vmem:[%s2213 + $0x1d8] sm:$0xff]
        %v2274 = vld [vmem:[%s2213 + $0x1e0] sm:$0xff]
        %v2275 = vld [vmem:[%s2213 + $0x1e8] sm:$0xff]
        %v2276 = vld [vmem:[%s2213 + $0x1f0] sm:$0xff]
        %v2277 = vld [vmem:[%s2213 + $0x1f8] sm:$0xff]
        %v2278 = vld [vmem:[%s2213 + $0x200] sm:$0xff]
        %v2279 = vld [vmem:[%s2213 + $0x208] sm:$0xff]
        %v2280 = vld [vmem:[%s2213 + $0x210] sm:$0xff]
        %v2281 = vld [vmem:[%s2213 + $0x218] sm:$0xff]
        %v2282 = vld [vmem:[%s2213 + $0x220] sm:$0xff]
        %v2283 = vld [vmem:[%s2213 + $0x228] sm:$0xff]
        %v2284 = vld [vmem:[%s2213 + $0x230] sm:$0xff]
        %v2285 = vld [vmem:[%s2213 + $0x238] sm:$0xff]
        %v2286 = vld [vmem:[%s2213 + $0x240] sm:$0xff]
        %v2287 = vld [vmem:[%s2213 + $0x248] sm:$0xff]
        %v2288 = vld [vmem:[%s2213 + $0x250] sm:$0xff]
        %v2289 = vld [vmem:[%s2213 + $0x258] sm:$0xff]
        %v2290 = vld [vmem:[%s2213 + $0x260] sm:$0xff]
        %v2291 = vld [vmem:[%s2213 + $0x268] sm:$0xff]
        %v2292 = vld [vmem:[%s2213 + $0x270] sm:$0xff]
        %v2293 = vld [vmem:[%s2213 + $0x278] sm:$0xff]
        %v2294 = vld [vmem:[%s2213 + $0x280] sm:$0xff]
        %v2295 = vld [vmem:[%s2213 + $0x288] sm:$0xff]
        %v2296 = vld [vmem:[%s2213 + $0x290] sm:$0xff]
        %v2297 = vld [vmem:[%s2213 + $0x298] sm:$0xff]
        %v2298 = vld [vmem:[%s2213 + $0x2a0] sm:$0xff]
        %v2299 = vld [vmem:[%s2213 + $0x2a8] sm:$0xff]
        %v2300 = vld [vmem:[%s2213 + $0x2b0] sm:$0xff]
        %v2301 = vld [vmem:[%s2213 + $0x2b8] sm:$0xff]
        %v2302 = vld [vmem:[%s2213 + $0x2c0] sm:$0xff]
        %v2303 = vld [vmem:[%s2213 + $0x2c8] sm:$0xff]
        %v2304 = vld [vmem:[%s2213 + $0x2d0] sm:$0xff]
        %v2305 = vld [vmem:[%s2213 + $0x2d8] sm:$0xff]
        %v2306 = vld [vmem:[%s2213 + $0x2e0] sm:$0xff]
        %v2307 = vld [vmem:[%s2213 + $0x2e8] sm:$0xff]
        %v2308 = vld [vmem:[%s2213 + $0x2f0] sm:$0xff]
        %v2309 = vld [vmem:[%s2213 + $0x2f8] sm:$0xff]
        %v2310 = vld [vmem:[%s2213 + $0x300] sm:$0xff]
        %v2311 = vld [vmem:[%s2213 + $0x308] sm:$0xff]
        %v2312 = vld [vmem:[%s2213 + $0x310] sm:$0xff]
        %v2313 = vld [vmem:[%s2213 + $0x318] sm:$0xff]
        %v2314 = vld [vmem:[%s2213 + $0x320] sm:$0xff]
        %v2315 = vld [vmem:[%s2213 + $0x328] sm:$0xff]
        %v2316 = vld [vmem:[%s2213 + $0x330] sm:$0xff]
        %v2317 = vld [vmem:[%s2213 + $0x338] sm:$0xff]
        %v2318 = vunpack.c.l.bf16 %v2214
        %v2319 = vunpack.c.h.bf16 %v2214
        %v2320 = vunpack.c.l.bf16 %v2215
        %v2321 = vunpack.c.h.bf16 %v2215
        %v2322 = vunpack.c.l.bf16 %v2216
        %v2323 = vunpack.c.h.bf16 %v2216
        %v2324 = vunpack.c.l.bf16 %v2217
        %v2325 = vunpack.c.h.bf16 %v2217
        %v2326 = vunpack.c.l.bf16 %v2218
        %v2327 = vunpack.c.h.bf16 %v2218
        %v2328 = vunpack.c.l.bf16 %v2219
        %v2329 = vunpack.c.h.bf16 %v2219
        %v2330 = vunpack.c.l.bf16 %v2220
        %v2331 = vunpack.c.h.bf16 %v2220
        %v2332 = vunpack.c.l.bf16 %v2221
        %v2333 = vunpack.c.h.bf16 %v2221
        %v2334 = vunpack.c.l.bf16 %v2222
        %v2335 = vunpack.c.h.bf16 %v2222
        %v2336 = vunpack.c.l.bf16 %v2223
        %v2337 = vunpack.c.h.bf16 %v2223
        %v2338 = vunpack.c.l.bf16 %v2224
        %v2339 = vunpack.c.h.bf16 %v2224
        %v2340 = vunpack.c.l.bf16 %v2225
        %v2341 = vunpack.c.h.bf16 %v2225
        %v2342 = vunpack.c.l.bf16 %v2226
        %v2343 = vunpack.c.h.bf16 %v2226
        %v2344 = vunpack.c.l.bf16 %v2227
        %v2345 = vunpack.c.h.bf16 %v2227
        %v2346 = vunpack.c.l.bf16 %v2228
        %v2347 = vunpack.c.h.bf16 %v2228
        %v2348 = vunpack.c.l.bf16 %v2229
        %v2349 = vunpack.c.h.bf16 %v2229
        %v2350 = vunpack.c.l.bf16 %v2230
        %v2351 = vunpack.c.h.bf16 %v2230
        %v2352 = vunpack.c.l.bf16 %v2231
        %v2353 = vunpack.c.h.bf16 %v2231
        %v2354 = vunpack.c.l.bf16 %v2232
        %v2355 = vunpack.c.h.bf16 %v2232
        %v2356 = vunpack.c.l.bf16 %v2233
        %v2357 = vunpack.c.h.bf16 %v2233
        %v2358 = vunpack.c.l.bf16 %v2234
        %v2359 = vunpack.c.h.bf16 %v2234
        %v2360 = vunpack.c.l.bf16 %v2235
        %v2361 = vunpack.c.h.bf16 %v2235
        %v2362 = vunpack.c.l.bf16 %v2236
        %v2363 = vunpack.c.h.bf16 %v2236
        %v2364 = vunpack.c.l.bf16 %v2237
        %v2365 = vunpack.c.h.bf16 %v2237
        %v2366 = vunpack.c.l.bf16 %v2238
        %v2367 = vunpack.c.h.bf16 %v2238
        %v2368 = vunpack.c.l.bf16 %v2239
        %v2369 = vunpack.c.h.bf16 %v2239
        %v2370 = vunpack.c.l.bf16 %v2240
        %v2371 = vunpack.c.h.bf16 %v2240
        %v2372 = vunpack.c.l.bf16 %v2241
        %v2373 = vunpack.c.h.bf16 %v2241
        %v2374 = vunpack.c.l.bf16 %v2242
        %v2375 = vunpack.c.h.bf16 %v2242
        %v2376 = vunpack.c.l.bf16 %v2243
        %v2377 = vunpack.c.h.bf16 %v2243
        %v2378 = vunpack.c.l.bf16 %v2244
        %v2379 = vunpack.c.h.bf16 %v2244
        %v2380 = vunpack.c.l.bf16 %v2245
        %v2381 = vunpack.c.h.bf16 %v2245
        %v2382 = vunpack.c.l.bf16 %v2246
        %v2383 = vunpack.c.h.bf16 %v2246
        %v2384 = vunpack.c.l.bf16 %v2247
        %v2385 = vunpack.c.h.bf16 %v2247
        %v2386 = vunpack.c.l.bf16 %v2248
        %v2387 = vunpack.c.h.bf16 %v2248
        %v2388 = vunpack.c.l.bf16 %v2249
        %v2389 = vunpack.c.h.bf16 %v2249
        %v2390 = vunpack.c.l.bf16 %v2250
        %v2391 = vunpack.c.h.bf16 %v2250
        %v2392 = vunpack.c.l.bf16 %v2251
        %v2393 = vunpack.c.h.bf16 %v2251
        %v2394 = vunpack.c.l.bf16 %v2252
        %v2395 = vunpack.c.h.bf16 %v2252
        %v2396 = vunpack.c.l.bf16 %v2253
        %v2397 = vunpack.c.h.bf16 %v2253
        %v2398 = vunpack.c.l.bf16 %v2254
        %v2399 = vunpack.c.h.bf16 %v2254
        %v2400 = vunpack.c.l.bf16 %v2255
        %v2401 = vunpack.c.h.bf16 %v2255
        %v2402 = vunpack.c.l.bf16 %v2256
        %v2403 = vunpack.c.h.bf16 %v2256
        %v2404 = vunpack.c.l.bf16 %v2257
        %v2405 = vunpack.c.h.bf16 %v2257
        %v2406 = vunpack.c.l.bf16 %v2258
        %v2407 = vunpack.c.h.bf16 %v2258
        %v2408 = vunpack.c.l.bf16 %v2259
        %v2409 = vunpack.c.h.bf16 %v2259
        %v2410 = vunpack.c.l.bf16 %v2260
        %v2411 = vunpack.c.h.bf16 %v2260
        %v2412 = vunpack.c.l.bf16 %v2261
        %v2413 = vunpack.c.h.bf16 %v2261
        %v2414 = vunpack.c.l.bf16 %v2262
        %v2415 = vunpack.c.h.bf16 %v2262
        %v2416 = vunpack.c.l.bf16 %v2263
        %v2417 = vunpack.c.h.bf16 %v2263
        %v2418 = vunpack.c.l.bf16 %v2264
        %v2419 = vunpack.c.h.bf16 %v2264
        %v2420 = vunpack.c.l.bf16 %v2265
        %v2421 = vunpack.c.h.bf16 %v2265
        %v2422 = vunpack.c.l.bf16 %v2266
        %v2423 = vunpack.c.h.bf16 %v2266
        %v2424 = vunpack.c.l.bf16 %v2267
        %v2425 = vunpack.c.h.bf16 %v2267
        %v2426 = vunpack.c.l.bf16 %v2268
        %v2427 = vunpack.c.h.bf16 %v2268
        %v2428 = vunpack.c.l.bf16 %v2269
        %v2429 = vunpack.c.h.bf16 %v2269
        %v2430 = vunpack.c.l.bf16 %v2270
        %v2431 = vunpack.c.h.bf16 %v2270
        %v2432 = vunpack.c.l.bf16 %v2271
        %v2433 = vunpack.c.h.bf16 %v2271
        %v2434 = vunpack.c.l.bf16 %v2272
        %v2435 = vunpack.c.h.bf16 %v2272
        %v2436 = vunpack.c.l.bf16 %v2273
        %v2437 = vunpack.c.h.bf16 %v2273
        %v2438 = vunpack.c.l.bf16 %v2274
        %v2439 = vunpack.c.h.bf16 %v2274
        %v2440 = vunpack.c.l.bf16 %v2275
        %v2441 = vunpack.c.h.bf16 %v2275
        %v2442 = vunpack.c.l.bf16 %v2276
        %v2443 = vunpack.c.h.bf16 %v2276
        %v2444 = vunpack.c.l.bf16 %v2277
        %v2445 = vunpack.c.h.bf16 %v2277
        %v2446 = vunpack.c.l.bf16 %v2278
        %v2447 = vunpack.c.h.bf16 %v2278
        %v2448 = vunpack.c.l.bf16 %v2279
        %v2449 = vunpack.c.h.bf16 %v2279
        %v2450 = vunpack.c.l.bf16 %v2280
        %v2451 = vunpack.c.h.bf16 %v2280
        %v2452 = vunpack.c.l.bf16 %v2281
        %v2453 = vunpack.c.h.bf16 %v2281
        %v2454 = vunpack.c.l.bf16 %v2282
        %v2455 = vunpack.c.h.bf16 %v2282
        %v2456 = vunpack.c.l.bf16 %v2283
        %v2457 = vunpack.c.h.bf16 %v2283
        %v2458 = vunpack.c.l.bf16 %v2284
        %v2459 = vunpack.c.h.bf16 %v2284
        %v2460 = vunpack.c.l.bf16 %v2285
        %v2461 = vunpack.c.h.bf16 %v2285
        %v2462 = vunpack.c.l.bf16 %v2286
        %v2463 = vunpack.c.h.bf16 %v2286
        %v2464 = vunpack.c.l.bf16 %v2287
        %v2465 = vunpack.c.h.bf16 %v2287
        %v2466 = vunpack.c.l.bf16 %v2288
        %v2467 = vunpack.c.h.bf16 %v2288
        %v2468 = vunpack.c.l.bf16 %v2289
        %v2469 = vunpack.c.h.bf16 %v2289
        %v2470 = vunpack.c.l.bf16 %v2290
        %v2471 = vunpack.c.h.bf16 %v2290
        %v2472 = vunpack.c.l.bf16 %v2291
        %v2473 = vunpack.c.h.bf16 %v2291
        %v2474 = vunpack.c.l.bf16 %v2292
        %v2475 = vunpack.c.h.bf16 %v2292
        %v2476 = vunpack.c.l.bf16 %v2293
        %v2477 = vunpack.c.h.bf16 %v2293
        %v2478 = vunpack.c.l.bf16 %v2294
        %v2479 = vunpack.c.h.bf16 %v2294
        %v2480 = vunpack.c.l.bf16 %v2295
        %v2481 = vunpack.c.h.bf16 %v2295
        %v2482 = vunpack.c.l.bf16 %v2296
        %v2483 = vunpack.c.h.bf16 %v2296
        %v2484 = vunpack.c.l.bf16 %v2297
        %v2485 = vunpack.c.h.bf16 %v2297
        %v2486 = vunpack.c.l.bf16 %v2298
        %v2487 = vunpack.c.h.bf16 %v2298
        %v2488 = vunpack.c.l.bf16 %v2299
        %v2489 = vunpack.c.h.bf16 %v2299
        %v2490 = vunpack.c.l.bf16 %v2300
        %v2491 = vunpack.c.h.bf16 %v2300
        %v2492 = vunpack.c.l.bf16 %v2301
        %v2493 = vunpack.c.h.bf16 %v2301
        %v2494 = vunpack.c.l.bf16 %v2302
        %v2495 = vunpack.c.h.bf16 %v2302
        %v2496 = vunpack.c.l.bf16 %v2303
        %v2497 = vunpack.c.h.bf16 %v2303
        %v2498 = vunpack.c.l.bf16 %v2304
        %v2499 = vunpack.c.h.bf16 %v2304
        %v2500 = vunpack.c.l.bf16 %v2305
        %v2501 = vunpack.c.h.bf16 %v2305
        %v2502 = vunpack.c.l.bf16 %v2306
        %v2503 = vunpack.c.h.bf16 %v2306
        %v2504 = vunpack.c.l.bf16 %v2307
        %v2505 = vunpack.c.h.bf16 %v2307
        %v2506 = vunpack.c.l.bf16 %v2308
        %v2507 = vunpack.c.h.bf16 %v2308
        %v2508 = vunpack.c.l.bf16 %v2309
        %v2509 = vunpack.c.h.bf16 %v2309
        %v2510 = vunpack.c.l.bf16 %v2310
        %v2511 = vunpack.c.h.bf16 %v2310
        %v2512 = vunpack.c.l.bf16 %v2311
        %v2513 = vunpack.c.h.bf16 %v2311
        %v2514 = vunpack.c.l.bf16 %v2312
        %v2515 = vunpack.c.h.bf16 %v2312
        %v2516 = vunpack.c.l.bf16 %v2313
        %v2517 = vunpack.c.h.bf16 %v2313
        %v2518 = vunpack.c.l.bf16 %v2314
        %v2519 = vunpack.c.h.bf16 %v2314
        %v2520 = vunpack.c.l.bf16 %v2315
        %v2521 = vunpack.c.h.bf16 %v2315
        %v2522 = vunpack.c.l.bf16 %v2316
        %v2523 = vunpack.c.h.bf16 %v2316
        %v2524 = vunpack.c.l.bf16 %v2317
        %v2525 = vunpack.c.h.bf16 %v2317
        %v2527 = vsel %vm1490, %v2518, 0
        %v2530 = vsel %vm1490, %v2519, 0
        %v2533 = vsel %vm1490, %v2520, 0
        %v2536 = vsel %vm1490, %v2521, 0
        %v2539 = vsel %vm1490, %v2522, 0
        %v2542 = vsel %vm1490, %v2523, 0
        %v2545 = vsel %vm1490, %v2524, 0
        %v2548 = vsel %vm1490, %v2525, 0
        %2550 = vmatprep.subr.mxu0 %v2439
        %2551 = vmatpush1.msra.mxu0 %v2438
        %2552 = vmatprep.subr.mxu0 %v2431
        %2553 = vmatpush1.msra.mxu0 %v2430
        %2554 = vmatprep.subr.mxu0 %v2423
        %2555 = vmatpush1.msra.mxu0 %v2422
        %2556 = vmatprep.subr.mxu0 %v2415
        %2557 = vmatpush1.msra.mxu0 %v2414
        %2558 = vmatprep.subr.mxu0 %v2407
        %2559 = vmatpush1.msra.mxu0 %v2406
        %2560 = vmatprep.subr.mxu0 %v2399
        %2561 = vmatpush1.msra.mxu0 %v2398
        %2562 = vmatprep.subr.mxu0 %v2391
        %2563 = vmatpush1.msra.mxu0 %v2390
        %2564 = vmatprep.subr.mxu0 %v2383
        %2565 = vmatpush1.msra.mxu0 %v2382
        %2566 = vmatprep.subr.mxu0 %v2375
        %2567 = vmatpush1.msra.mxu0 %v2374
        %2568 = vmatprep.subr.mxu0 %v2367
        %2569 = vmatpush1.msra.mxu0 %v2366
        %2570 = vmatprep.subr.mxu0 %v2359
        %2571 = vmatpush1.msra.mxu0 %v2358
        %2572 = vmatprep.subr.mxu0 %v2351
        %2573 = vmatpush1.msra.mxu0 %v2350
        %2574 = vmatprep.subr.mxu0 %v2343
        %2575 = vmatpush1.msra.mxu0 %v2342
        %2576 = vmatprep.subr.mxu0 %v2335
        %2577 = vmatpush1.msra.mxu0 %v2334
        %2578 = vmatprep.subr.mxu0 %v2327
        %2579 = vmatpush1.msra.mxu0 %v2326
        %2580 = vmatprep.subr.mxu0 %v2319
        %2581 = vmatpush1.msra.mxu0 %v2318
        %2582 = vmatprep.subr.mxu0 0.0
        %2583 = vmatpush2.msra.mxu0 0.0
        %2584 = vmatprep.subr.mxu0 0.0
        %2585 = vmatpush2.msra.mxu0 0.0
        %2586 = vmatprep.subr.mxu0 0.0
        %2587 = vmatpush2.msra.mxu0 0.0
        %2588 = vmatprep.subr.mxu0 0.0
        %2589 = vmatpush2.msra.mxu0 0.0
        %2590 = vmatprep.subr.mxu0 0.0
        %2591 = vmatpush2.msra.mxu0 0.0
        %2592 = vmatprep.subr.mxu0 0.0
        %2593 = vmatpush2.msra.mxu0 0.0
        %2594 = vmatprep.subr.mxu0 %v2530
        %2595 = vmatpush2.msra.mxu0 %v2527
        %2596 = vmatprep.subr.mxu0 %v2511
        %2597 = vmatpush2.msra.mxu0 %v2510
        %2598 = vmatprep.subr.mxu0 %v2503
        %2599 = vmatpush2.msra.mxu0 %v2502
        %2600 = vmatprep.subr.mxu0 %v2495
        %2601 = vmatpush2.msra.mxu0 %v2494
        %2602 = vmatprep.subr.mxu0 %v2487
        %2603 = vmatpush2.msra.mxu0 %v2486
        %2604 = vmatprep.subr.mxu0 %v2479
        %2605 = vmatpush2.msra.mxu0 %v2478
        %2606 = vmatprep.subr.mxu0 %v2471
        %2607 = vmatpush2.msra.mxu0 %v2470
        %2608 = vmatprep.subr.mxu0 %v2463
        %2609 = vmatpush2.msra.mxu0 %v2462
        %2610 = vmatprep.subr.mxu0 %v2455
        %2611 = vmatpush2.msra.mxu0 %v2454
        %2612 = vmatprep.subr.mxu0 %v2447
        %2613 = vmatpush2.msra.mxu0 %v2446
        %2614 = vmatprep.mubr.f32.mxu0 %v1488
        %2615 = vmatmul.mubr.f32.gmra.mxu0 %v1484
        %v2616 = vpop.f32.mrf.mxu0
        %v2617 = vadd.f32 0.0, %v2616
        %v2618 = vpop.f32.mrf.mxu0
        %v2619 = vadd.f32 0.0, %v2618
        %2620 = vdwg.mxu0
        %2621 = vmatprep.subr.mxu0 %v2441
        %2622 = vmatpush1.msra.mxu0 %v2440
        %2623 = vmatprep.subr.mxu0 %v2433
        %2624 = vmatpush1.msra.mxu0 %v2432
        %2625 = vmatprep.subr.mxu0 %v2425
        %2626 = vmatpush1.msra.mxu0 %v2424
        %2627 = vmatprep.subr.mxu0 %v2417
        %2628 = vmatpush1.msra.mxu0 %v2416
        %2629 = vmatprep.subr.mxu0 %v2409
        %2630 = vmatpush1.msra.mxu0 %v2408
        %2631 = vmatprep.subr.mxu0 %v2401
        %2632 = vmatpush1.msra.mxu0 %v2400
        %2633 = vmatprep.subr.mxu0 %v2393
        %2634 = vmatpush1.msra.mxu0 %v2392
        %2635 = vmatprep.subr.mxu0 %v2385
        %2636 = vmatpush1.msra.mxu0 %v2384
        %2637 = vmatprep.subr.mxu0 %v2377
        %2638 = vmatpush1.msra.mxu0 %v2376
        %2639 = vmatprep.subr.mxu0 %v2369
        %2640 = vmatpush1.msra.mxu0 %v2368
        %2641 = vmatprep.subr.mxu0 %v2361
        %2642 = vmatpush1.msra.mxu0 %v2360
        %2643 = vmatprep.subr.mxu0 %v2353
        %2644 = vmatpush1.msra.mxu0 %v2352
        %2645 = vmatprep.subr.mxu0 %v2345
        %2646 = vmatpush1.msra.mxu0 %v2344
        %2647 = vmatprep.subr.mxu0 %v2337
        %2648 = vmatpush1.msra.mxu0 %v2336
        %2649 = vmatprep.subr.mxu0 %v2329
        %2650 = vmatpush1.msra.mxu0 %v2328
        %2651 = vmatprep.subr.mxu0 %v2321
        %2652 = vmatpush1.msra.mxu0 %v2320
        %2653 = vmatprep.subr.mxu0 0.0
        %2654 = vmatpush2.msra.mxu0 0.0
        %2655 = vmatprep.subr.mxu0 0.0
        %2656 = vmatpush2.msra.mxu0 0.0
        %2657 = vmatprep.subr.mxu0 0.0
        %2658 = vmatpush2.msra.mxu0 0.0
        %2659 = vmatprep.subr.mxu0 0.0
        %2660 = vmatpush2.msra.mxu0 0.0
        %2661 = vmatprep.subr.mxu0 0.0
        %2662 = vmatpush2.msra.mxu0 0.0
        %2663 = vmatprep.subr.mxu0 0.0
        %2664 = vmatpush2.msra.mxu0 0.0
        %2665 = vmatprep.subr.mxu0 %v2536
        %2666 = vmatpush2.msra.mxu0 %v2533
        %2667 = vmatprep.subr.mxu0 %v2513
        %2668 = vmatpush2.msra.mxu0 %v2512
        %2669 = vmatprep.subr.mxu0 %v2505
        %2670 = vmatpush2.msra.mxu0 %v2504
        %2671 = vmatprep.subr.mxu0 %v2497
        %2672 = vmatpush2.msra.mxu0 %v2496
        %2673 = vmatprep.subr.mxu0 %v2489
        %2674 = vmatpush2.msra.mxu0 %v2488
        %2675 = vmatprep.subr.mxu0 %v2481
        %2676 = vmatpush2.msra.mxu0 %v2480
        %2677 = vmatprep.subr.mxu0 %v2473
        %2678 = vmatpush2.msra.mxu0 %v2472
        %2679 = vmatprep.subr.mxu0 %v2465
        %2680 = vmatpush2.msra.mxu0 %v2464
        %2681 = vmatprep.subr.mxu0 %v2457
        %2682 = vmatpush2.msra.mxu0 %v2456
        %2683 = vmatprep.subr.mxu0 %v2449
        %2684 = vmatpush2.msra.mxu0 %v2448
        %2685 = vmatprep.mubr.f32.mxu0 %v1488
        %2686 = vmatmul.mubr.f32.gmra.mxu0 %v1484
        %v2687 = vpop.f32.mrf.mxu0
        %v2688 = vadd.f32 0.0, %v2687
        %v2689 = vpop.f32.mrf.mxu0
        %v2690 = vadd.f32 0.0, %v2689
        %2691 = vdwg.mxu0
        %2692 = vmatprep.subr.mxu0 %v2443
        %2693 = vmatpush1.msra.mxu0 %v2442
        %2694 = vmatprep.subr.mxu0 %v2435
        %2695 = vmatpush1.msra.mxu0 %v2434
        %2696 = vmatprep.subr.mxu0 %v2427
        %2697 = vmatpush1.msra.mxu0 %v2426
        %2698 = vmatprep.subr.mxu0 %v2419
        %2699 = vmatpush1.msra.mxu0 %v2418
        %2700 = vmatprep.subr.mxu0 %v2411
        %2701 = vmatpush1.msra.mxu0 %v2410
        %2702 = vmatprep.subr.mxu0 %v2403
        %2703 = vmatpush1.msra.mxu0 %v2402
        %2704 = vmatprep.subr.mxu0 %v2395
        %2705 = vmatpush1.msra.mxu0 %v2394
        %2706 = vmatprep.subr.mxu0 %v2387
        %2707 = vmatpush1.msra.mxu0 %v2386
        %2708 = vmatprep.subr.mxu0 %v2379
        %2709 = vmatpush1.msra.mxu0 %v2378
        %2710 = vmatprep.subr.mxu0 %v2371
        %2711 = vmatpush1.msra.mxu0 %v2370
        %2712 = vmatprep.subr.mxu0 %v2363
        %2713 = vmatpush1.msra.mxu0 %v2362
        %2714 = vmatprep.subr.mxu0 %v2355
        %2715 = vmatpush1.msra.mxu0 %v2354
        %2716 = vmatprep.subr.mxu0 %v2347
        %2717 = vmatpush1.msra.mxu0 %v2346
        %2718 = vmatprep.subr.mxu0 %v2339
        %2719 = vmatpush1.msra.mxu0 %v2338
        %2720 = vmatprep.subr.mxu0 %v2331
        %2721 = vmatpush1.msra.mxu0 %v2330
        %2722 = vmatprep.subr.mxu0 %v2323
        %2723 = vmatpush1.msra.mxu0 %v2322
        %2724 = vmatprep.subr.mxu0 0.0
        %2725 = vmatpush2.msra.mxu0 0.0
        %2726 = vmatprep.subr.mxu0 0.0
        %2727 = vmatpush2.msra.mxu0 0.0
        %2728 = vmatprep.subr.mxu0 0.0
        %2729 = vmatpush2.msra.mxu0 0.0
        %2730 = vmatprep.subr.mxu0 0.0
        %2731 = vmatpush2.msra.mxu0 0.0
        %2732 = vmatprep.subr.mxu0 0.0
        %2733 = vmatpush2.msra.mxu0 0.0
        %2734 = vmatprep.subr.mxu0 0.0
        %2735 = vmatpush2.msra.mxu0 0.0
        %2736 = vmatprep.subr.mxu0 %v2542
        %2737 = vmatpush2.msra.mxu0 %v2539
        %2738 = vmatprep.subr.mxu0 %v2515
        %2739 = vmatpush2.msra.mxu0 %v2514
        %2740 = vmatprep.subr.mxu0 %v2507
        %2741 = vmatpush2.msra.mxu0 %v2506
        %2742 = vmatprep.subr.mxu0 %v2499
        %2743 = vmatpush2.msra.mxu0 %v2498
        %2744 = vmatprep.subr.mxu0 %v2491
        %2745 = vmatpush2.msra.mxu0 %v2490
        %2746 = vmatprep.subr.mxu0 %v2483
        %2747 = vmatpush2.msra.mxu0 %v2482
        %2748 = vmatprep.subr.mxu0 %v2475
        %2749 = vmatpush2.msra.mxu0 %v2474
        %2750 = vmatprep.subr.mxu0 %v2467
        %2751 = vmatpush2.msra.mxu0 %v2466
        %2752 = vmatprep.subr.mxu0 %v2459
        %2753 = vmatpush2.msra.mxu0 %v2458
        %2754 = vmatprep.subr.mxu0 %v2451
        %2755 = vmatpush2.msra.mxu0 %v2450
        %2756 = vmatprep.mubr.f32.mxu0 %v1488
        %2757 = vmatmul.mubr.f32.gmra.mxu0 %v1484
        %v2758 = vpop.f32.mrf.mxu0
        %v2759 = vadd.f32 0.0, %v2758
        %v2760 = vpop.f32.mrf.mxu0
        %v2761 = vadd.f32 0.0, %v2760
        %2762 = vdwg.mxu0
        %2763 = vmatprep.subr.mxu0 %v2445
        %2764 = vmatpush1.msra.mxu0 %v2444
        %2765 = vmatprep.subr.mxu0 %v2437
        %2766 = vmatpush1.msra.mxu0 %v2436
        %2767 = vmatprep.subr.mxu0 %v2429
        %2768 = vmatpush1.msra.mxu0 %v2428
        %2769 = vmatprep.subr.mxu0 %v2421
        %2770 = vmatpush1.msra.mxu0 %v2420
        %2771 = vmatprep.subr.mxu0 %v2413
        %2772 = vmatpush1.msra.mxu0 %v2412
        %2773 = vmatprep.subr.mxu0 %v2405
        %2774 = vmatpush1.msra.mxu0 %v2404
        %2775 = vmatprep.subr.mxu0 %v2397
        %2776 = vmatpush1.msra.mxu0 %v2396
        %2777 = vmatprep.subr.mxu0 %v2389
        %2778 = vmatpush1.msra.mxu0 %v2388
        %2779 = vmatprep.subr.mxu0 %v2381
        %2780 = vmatpush1.msra.mxu0 %v2380
        %2781 = vmatprep.subr.mxu0 %v2373
        %2782 = vmatpush1.msra.mxu0 %v2372
        %2783 = vmatprep.subr.mxu0 %v2365
        %2784 = vmatpush1.msra.mxu0 %v2364
        %2785 = vmatprep.subr.mxu0 %v2357
        %2786 = vmatpush1.msra.mxu0 %v2356
        %2787 = vmatprep.subr.mxu0 %v2349
        %2788 = vmatpush1.msra.mxu0 %v2348
        %2789 = vmatprep.subr.mxu0 %v2341
        %2790 = vmatpush1.msra.mxu0 %v2340
        %2791 = vmatprep.subr.mxu0 %v2333
        %2792 = vmatpush1.msra.mxu0 %v2332
        %2793 = vmatprep.subr.mxu0 %v2325
        %2794 = vmatpush1.msra.mxu0 %v2324
        %2795 = vmatprep.subr.mxu0 0.0
        %2796 = vmatpush2.msra.mxu0 0.0
        %2797 = vmatprep.subr.mxu0 0.0
        %2798 = vmatpush2.msra.mxu0 0.0
        %2799 = vmatprep.subr.mxu0 0.0
        %2800 = vmatpush2.msra.mxu0 0.0
        %2801 = vmatprep.subr.mxu0 0.0
        %2802 = vmatpush2.msra.mxu0 0.0
        %2803 = vmatprep.subr.mxu0 0.0
        %2804 = vmatpush2.msra.mxu0 0.0
        %2805 = vmatprep.subr.mxu0 0.0
        %2806 = vmatpush2.msra.mxu0 0.0
        %2807 = vmatprep.subr.mxu0 %v2548
        %2808 = vmatpush2.msra.mxu0 %v2545
        %2809 = vmatprep.subr.mxu0 %v2517
        %2810 = vmatpush2.msra.mxu0 %v2516
        %2811 = vmatprep.subr.mxu0 %v2509
        %2812 = vmatpush2.msra.mxu0 %v2508
        %2813 = vmatprep.subr.mxu0 %v2501
        %2814 = vmatpush2.msra.mxu0 %v2500
        %2815 = vmatprep.subr.mxu0 %v2493
        %2816 = vmatpush2.msra.mxu0 %v2492
        %2817 = vmatprep.subr.mxu0 %v2485
        %2818 = vmatpush2.msra.mxu0 %v2484
        %2819 = vmatprep.subr.mxu0 %v2477
        %2820 = vmatpush2.msra.mxu0 %v2476
        %2821 = vmatprep.subr.mxu0 %v2469
        %2822 = vmatpush2.msra.mxu0 %v2468
        %2823 = vmatprep.subr.mxu0 %v2461
        %2824 = vmatpush2.msra.mxu0 %v2460
        %2825 = vmatprep.subr.mxu0 %v2453
        %2826 = vmatpush2.msra.mxu0 %v2452
        %2827 = vmatprep.mubr.f32.mxu0 %v1488
        %2828 = vmatmul.mubr.f32.gmra.mxu0 %v1484
        %v2829 = vpop.f32.mrf.mxu0
        %v2830 = vadd.f32 0.0, %v2829
        %v2831 = vpop.f32.mrf.mxu0
        %v2832 = vadd.f32 0.0, %v2831
        %2833 = vdwg.mxu0
        %v2835 = vsel %vm1803, %v2205, 0
        %v2838 = vsel %vm1803, %v2206, 0
        %v2841 = vsel %vm1803, %v2207, 0
        %v2844 = vsel %vm1803, %v2208, 0
        %v2847 = vsel %vm1803, %v2209, 0
        %v2850 = vsel %vm1803, %v2210, 0
        %v2853 = vsel %vm1803, %v2211, 0
        %v2856 = vsel %vm1803, %v2212, 0
        %2858 = vmatprep.subr.mxu0 0.0
        %2859 = vmatpush1.msra.mxu0 0.0
        %2860 = vmatprep.subr.mxu0 0.0
        %2861 = vmatpush1.msra.mxu0 0.0
        %2862 = vmatprep.subr.mxu0 0.0
        %2863 = vmatpush1.msra.mxu0 0.0
        %2864 = vmatprep.subr.mxu0 0.0
        %2865 = vmatpush1.msra.mxu0 0.0
        %2866 = vmatprep.subr.mxu0 0.0
        %2867 = vmatpush1.msra.mxu0 0.0
        %2868 = vmatprep.subr.mxu0 0.0
        %2869 = vmatpush1.msra.mxu0 0.0
        %2870 = vmatprep.subr.mxu0 0.0
        %2871 = vmatpush1.msra.mxu0 0.0
        %2872 = vmatprep.subr.mxu0 0.0
        %2873 = vmatpush1.msra.mxu0 0.0
        %2874 = vmatprep.subr.mxu0 0.0
        %2875 = vmatpush1.msra.mxu0 0.0
        %2876 = vmatprep.subr.mxu0 0.0
        %2877 = vmatpush1.msra.mxu0 0.0
        %2878 = vmatprep.subr.mxu0 0.0
        %2879 = vmatpush1.msra.mxu0 0.0
        %2880 = vmatprep.subr.mxu0 0.0
        %2881 = vmatpush1.msra.mxu0 0.0
        %2882 = vmatprep.subr.mxu0 0.0
        %2883 = vmatpush1.msra.mxu0 0.0
        %2884 = vmatprep.subr.mxu0 0.0
        %2885 = vmatpush1.msra.mxu0 0.0
        %2886 = vmatprep.subr.mxu0 %v2838
        %2887 = vmatpush1.msra.mxu0 %v2835
        %2888 = vmatprep.subr.mxu0 %v2198
        %2889 = vmatpush1.msra.mxu0 %v2197
        %2890 = vmatprep.subr.mxu0 0.0
        %2891 = vmatpush2.msra.mxu0 0.0
        %2892 = vmatprep.subr.mxu0 0.0
        %2893 = vmatpush2.msra.mxu0 0.0
        %2894 = vmatprep.subr.mxu0 0.0
        %2895 = vmatpush2.msra.mxu0 0.0
        %2896 = vmatprep.subr.mxu0 0.0
        %2897 = vmatpush2.msra.mxu0 0.0
        %2898 = vmatprep.subr.mxu0 0.0
        %2899 = vmatpush2.msra.mxu0 0.0
        %2900 = vmatprep.subr.mxu0 0.0
        %2901 = vmatpush2.msra.mxu0 0.0
        %2902 = vmatprep.subr.mxu0 0.0
        %2903 = vmatpush2.msra.mxu0 0.0
        %2904 = vmatprep.subr.mxu0 0.0
        %2905 = vmatpush2.msra.mxu0 0.0
        %2906 = vmatprep.subr.mxu0 0.0
        %2907 = vmatpush2.msra.mxu0 0.0
        %2908 = vmatprep.subr.mxu0 0.0
        %2909 = vmatpush2.msra.mxu0 0.0
        %2910 = vmatprep.subr.mxu0 0.0
        %2911 = vmatpush2.msra.mxu0 0.0
        %2912 = vmatprep.subr.mxu0 0.0
        %2913 = vmatpush2.msra.mxu0 0.0
        %2914 = vmatprep.subr.mxu0 0.0
        %2915 = vmatpush2.msra.mxu0 0.0
        %2916 = vmatprep.subr.mxu0 0.0
        %2917 = vmatpush2.msra.mxu0 0.0
        %2918 = vmatprep.subr.mxu0 0.0
        %2919 = vmatpush2.msra.mxu0 0.0
        %2920 = vmatprep.subr.mxu0 0.0
        %2921 = vmatpush2.msra.mxu0 0.0
        %2922 = vmatprep.mubr.f32.mxu0 0.0
        %2923 = vmatmul.mubr.f32.gmra.mxu0 %v1801
        %v2924 = vpop.f32.mrf.mxu0
        %v2925 = vadd.f32 %v2617, %v2924
        %v2926 = vpop.f32.mrf.mxu0
        %v2927 = vadd.f32 %v2619, %v2926
        %2928 = vdwg.mxu0
        %2929 = vmatprep.subr.mxu0 0.0
        %2930 = vmatpush1.msra.mxu0 0.0
        %2931 = vmatprep.subr.mxu0 0.0
        %2932 = vmatpush1.msra.mxu0 0.0
        %2933 = vmatprep.subr.mxu0 0.0
        %2934 = vmatpush1.msra.mxu0 0.0
        %2935 = vmatprep.subr.mxu0 0.0
        %2936 = vmatpush1.msra.mxu0 0.0
        %2937 = vmatprep.subr.mxu0 0.0
        %2938 = vmatpush1.msra.mxu0 0.0
        %2939 = vmatprep.subr.mxu0 0.0
        %2940 = vmatpush1.msra.mxu0 0.0
        %2941 = vmatprep.subr.mxu0 0.0
        %2942 = vmatpush1.msra.mxu0 0.0
        %2943 = vmatprep.subr.mxu0 0.0
        %2944 = vmatpush1.msra.mxu0 0.0
        %2945 = vmatprep.subr.mxu0 0.0
        %2946 = vmatpush1.msra.mxu0 0.0
        %2947 = vmatprep.subr.mxu0 0.0
        %2948 = vmatpush1.msra.mxu0 0.0
        %2949 = vmatprep.subr.mxu0 0.0
        %2950 = vmatpush1.msra.mxu0 0.0
        %2951 = vmatprep.subr.mxu0 0.0
        %2952 = vmatpush1.msra.mxu0 0.0
        %2953 = vmatprep.subr.mxu0 0.0
        %2954 = vmatpush1.msra.mxu0 0.0
        %2955 = vmatprep.subr.mxu0 0.0
        %2956 = vmatpush1.msra.mxu0 0.0
        %2957 = vmatprep.subr.mxu0 %v2844
        %2958 = vmatpush1.msra.mxu0 %v2841
        %2959 = vmatprep.subr.mxu0 %v2200
        %2960 = vmatpush1.msra.mxu0 %v2199
        %2961 = vmatprep.subr.mxu0 0.0
        %2962 = vmatpush2.msra.mxu0 0.0
        %2963 = vmatprep.subr.mxu0 0.0
        %2964 = vmatpush2.msra.mxu0 0.0
        %2965 = vmatprep.subr.mxu0 0.0
        %2966 = vmatpush2.msra.mxu0 0.0
        %2967 = vmatprep.subr.mxu0 0.0
        %2968 = vmatpush2.msra.mxu0 0.0
        %2969 = vmatprep.subr.mxu0 0.0
        %2970 = vmatpush2.msra.mxu0 0.0
        %2971 = vmatprep.subr.mxu0 0.0
        %2972 = vmatpush2.msra.mxu0 0.0
        %2973 = vmatprep.subr.mxu0 0.0
        %2974 = vmatpush2.msra.mxu0 0.0
        %2975 = vmatprep.subr.mxu0 0.0
        %2976 = vmatpush2.msra.mxu0 0.0
        %2977 = vmatprep.subr.mxu0 0.0
        %2978 = vmatpush2.msra.mxu0 0.0
        %2979 = vmatprep.subr.mxu0 0.0
        %2980 = vmatpush2.msra.mxu0 0.0
        %2981 = vmatprep.subr.mxu0 0.0
        %2982 = vmatpush2.msra.mxu0 0.0
        %2983 = vmatprep.subr.mxu0 0.0
        %2984 = vmatpush2.msra.mxu0 0.0
        %2985 = vmatprep.subr.mxu0 0.0
        %2986 = vmatpush2.msra.mxu0 0.0
        %2987 = vmatprep.subr.mxu0 0.0
        %2988 = vmatpush2.msra.mxu0 0.0
        %2989 = vmatprep.subr.mxu0 0.0
        %2990 = vmatpush2.msra.mxu0 0.0
        %2991 = vmatprep.subr.mxu0 0.0
        %2992 = vmatpush2.msra.mxu0 0.0
        %2993 = vmatprep.mubr.f32.mxu0 0.0
        %2994 = vmatmul.mubr.f32.gmra.mxu0 %v1801
        %v2995 = vpop.f32.mrf.mxu0
        %v2996 = vadd.f32 %v2688, %v2995
        %v2997 = vpop.f32.mrf.mxu0
        %v2998 = vadd.f32 %v2690, %v2997
        %2999 = vdwg.mxu0
        %3000 = vmatprep.subr.mxu0 0.0
        %3001 = vmatpush1.msra.mxu0 0.0
        %3002 = vmatprep.subr.mxu0 0.0
        %3003 = vmatpush1.msra.mxu0 0.0
        %3004 = vmatprep.subr.mxu0 0.0
        %3005 = vmatpush1.msra.mxu0 0.0
        %3006 = vmatprep.subr.mxu0 0.0
        %3007 = vmatpush1.msra.mxu0 0.0
        %3008 = vmatprep.subr.mxu0 0.0
        %3009 = vmatpush1.msra.mxu0 0.0
        %3010 = vmatprep.subr.mxu0 0.0
        %3011 = vmatpush1.msra.mxu0 0.0
        %3012 = vmatprep.subr.mxu0 0.0
        %3013 = vmatpush1.msra.mxu0 0.0
        %3014 = vmatprep.subr.mxu0 0.0
        %3015 = vmatpush1.msra.mxu0 0.0
        %3016 = vmatprep.subr.mxu0 0.0
        %3017 = vmatpush1.msra.mxu0 0.0
        %3018 = vmatprep.subr.mxu0 0.0
        %3019 = vmatpush1.msra.mxu0 0.0
        %3020 = vmatprep.subr.mxu0 0.0
        %3021 = vmatpush1.msra.mxu0 0.0
        %3022 = vmatprep.subr.mxu0 0.0
        %3023 = vmatpush1.msra.mxu0 0.0
        %3024 = vmatprep.subr.mxu0 0.0
        %3025 = vmatpush1.msra.mxu0 0.0
        %3026 = vmatprep.subr.mxu0 0.0
        %3027 = vmatpush1.msra.mxu0 0.0
        %3028 = vmatprep.subr.mxu0 %v2850
        %3029 = vmatpush1.msra.mxu0 %v2847
        %3030 = vmatprep.subr.mxu0 %v2202
        %3031 = vmatpush1.msra.mxu0 %v2201
        %3032 = vmatprep.subr.mxu0 0.0
        %3033 = vmatpush2.msra.mxu0 0.0
        %3034 = vmatprep.subr.mxu0 0.0
        %3035 = vmatpush2.msra.mxu0 0.0
        %3036 = vmatprep.subr.mxu0 0.0
        %3037 = vmatpush2.msra.mxu0 0.0
        %3038 = vmatprep.subr.mxu0 0.0
        %3039 = vmatpush2.msra.mxu0 0.0
        %3040 = vmatprep.subr.mxu0 0.0
        %3041 = vmatpush2.msra.mxu0 0.0
        %3042 = vmatprep.subr.mxu0 0.0
        %3043 = vmatpush2.msra.mxu0 0.0
        %3044 = vmatprep.subr.mxu0 0.0
        %3045 = vmatpush2.msra.mxu0 0.0
        %3046 = vmatprep.subr.mxu0 0.0
        %3047 = vmatpush2.msra.mxu0 0.0
        %3048 = vmatprep.subr.mxu0 0.0
        %3049 = vmatpush2.msra.mxu0 0.0
        %3050 = vmatprep.subr.mxu0 0.0
        %3051 = vmatpush2.msra.mxu0 0.0
        %3052 = vmatprep.subr.mxu0 0.0
        %3053 = vmatpush2.msra.mxu0 0.0
        %3054 = vmatprep.subr.mxu0 0.0
        %3055 = vmatpush2.msra.mxu0 0.0
        %3056 = vmatprep.subr.mxu0 0.0
        %3057 = vmatpush2.msra.mxu0 0.0
        %3058 = vmatprep.subr.mxu0 0.0
        %3059 = vmatpush2.msra.mxu0 0.0
        %3060 = vmatprep.subr.mxu0 0.0
        %3061 = vmatpush2.msra.mxu0 0.0
        %3062 = vmatprep.subr.mxu0 0.0
        %3063 = vmatpush2.msra.mxu0 0.0
        %3064 = vmatprep.mubr.f32.mxu0 0.0
        %3065 = vmatmul.mubr.f32.gmra.mxu0 %v1801
        %v3066 = vpop.f32.mrf.mxu0
        %v3067 = vadd.f32 %v2759, %v3066
        %v3068 = vpop.f32.mrf.mxu0
        %v3069 = vadd.f32 %v2761, %v3068
        %3070 = vdwg.mxu0
        %3071 = vmatprep.subr.mxu0 0.0
        %3072 = vmatpush1.msra.mxu0 0.0
        %3073 = vmatprep.subr.mxu0 0.0
        %3074 = vmatpush1.msra.mxu0 0.0
        %3075 = vmatprep.subr.mxu0 0.0
        %3076 = vmatpush1.msra.mxu0 0.0
        %3077 = vmatprep.subr.mxu0 0.0
        %3078 = vmatpush1.msra.mxu0 0.0
        %3079 = vmatprep.subr.mxu0 0.0
        %3080 = vmatpush1.msra.mxu0 0.0
        %3081 = vmatprep.subr.mxu0 0.0
        %3082 = vmatpush1.msra.mxu0 0.0
        %3083 = vmatprep.subr.mxu0 0.0
        %3084 = vmatpush1.msra.mxu0 0.0
        %3085 = vmatprep.subr.mxu0 0.0
        %3086 = vmatpush1.msra.mxu0 0.0
        %3087 = vmatprep.subr.mxu0 0.0
        %3088 = vmatpush1.msra.mxu0 0.0
        %3089 = vmatprep.subr.mxu0 0.0
        %3090 = vmatpush1.msra.mxu0 0.0
        %3091 = vmatprep.subr.mxu0 0.0
        %3092 = vmatpush1.msra.mxu0 0.0
        %3093 = vmatprep.subr.mxu0 0.0
        %3094 = vmatpush1.msra.mxu0 0.0
        %3095 = vmatprep.subr.mxu0 0.0
        %3096 = vmatpush1.msra.mxu0 0.0
        %3097 = vmatprep.subr.mxu0 0.0
        %3098 = vmatpush1.msra.mxu0 0.0
        %3099 = vmatprep.subr.mxu0 %v2856
        %3100 = vmatpush1.msra.mxu0 %v2853
        %3101 = vmatprep.subr.mxu0 %v2204
        %3102 = vmatpush1.msra.mxu0 %v2203
        %3103 = vmatprep.subr.mxu0 0.0
        %3104 = vmatpush2.msra.mxu0 0.0
        %3105 = vmatprep.subr.mxu0 0.0
        %3106 = vmatpush2.msra.mxu0 0.0
        %3107 = vmatprep.subr.mxu0 0.0
        %3108 = vmatpush2.msra.mxu0 0.0
        %3109 = vmatprep.subr.mxu0 0.0
        %3110 = vmatpush2.msra.mxu0 0.0
        %3111 = vmatprep.subr.mxu0 0.0
        %3112 = vmatpush2.msra.mxu0 0.0
        %3113 = vmatprep.subr.mxu0 0.0
        %3114 = vmatpush2.msra.mxu0 0.0
        %3115 = vmatprep.subr.mxu0 0.0
        %3116 = vmatpush2.msra.mxu0 0.0
        %3117 = vmatprep.subr.mxu0 0.0
        %3118 = vmatpush2.msra.mxu0 0.0
        %3119 = vmatprep.subr.mxu0 0.0
        %3120 = vmatpush2.msra.mxu0 0.0
        %3121 = vmatprep.subr.mxu0 0.0
        %3122 = vmatpush2.msra.mxu0 0.0
        %3123 = vmatprep.subr.mxu0 0.0
        %3124 = vmatpush2.msra.mxu0 0.0
        %3125 = vmatprep.subr.mxu0 0.0
        %3126 = vmatpush2.msra.mxu0 0.0
        %3127 = vmatprep.subr.mxu0 0.0
        %3128 = vmatpush2.msra.mxu0 0.0
        %3129 = vmatprep.subr.mxu0 0.0
        %3130 = vmatpush2.msra.mxu0 0.0
        %3131 = vmatprep.subr.mxu0 0.0
        %3132 = vmatpush2.msra.mxu0 0.0
        %3133 = vmatprep.subr.mxu0 0.0
        %3134 = vmatpush2.msra.mxu0 0.0
        %3135 = vmatprep.mubr.f32.mxu0 0.0
        %3136 = vmatmul.mubr.f32.gmra.mxu0 %v1801
        %v3137 = vpop.f32.mrf.mxu0
        %v3138 = vadd.f32 %v2830, %v3137
        %v3139 = vpop.f32.mrf.mxu0
        %v3140 = vadd.f32 %v2832, %v3139
        %3141 = vdwg.mxu0
        %v3142 = vlaneseq
        %v3143 = vshrl.u32 %v3142, 7
        %v3144 = vsub.s32 1, %v3143
        %v3145 = vrot.slane %v1121, %v3144
        %v3146 = vlaneseq
        %v3147 = vshrl.u32 %v3146, 7
        %v3148 = vsub.s32 5, %v3147
        %v3149 = vrot.slane %v1121, %v3148
        %v3150 = vlaneseq
        %v3151 = vshrl.u32 %v3150, 7
        %v3152 = vsub.s32 1, %v3151
        %v3153 = vrot.slane %v1122, %v3152
        %v3154 = vlaneseq
        %v3155 = vshrl.u32 %v3154, 7
        %v3156 = vsub.s32 5, %v3155
        %v3157 = vrot.slane %v1122, %v3156
        %v3158 = vlaneseq
        %v3159 = vshrl.u32 %v3158, 7
        %v3160 = vsub.s32 1, %v3159
        %v3161 = vrot.slane %v1123, %v3160
        %v3162 = vlaneseq
        %v3163 = vshrl.u32 %v3162, 7
        %v3164 = vsub.s32 5, %v3163
        %v3165 = vrot.slane %v1123, %v3164
        %v3166 = vlaneseq
        %v3167 = vshrl.u32 %v3166, 7
        %v3168 = vsub.s32 1, %v3167
        %v3169 = vrot.slane %v1124, %v3168
        %v3170 = vlaneseq
        %v3171 = vshrl.u32 %v3170, 7
        %v3172 = vsub.s32 5, %v3171
        %v3173 = vrot.slane %v1124, %v3172
        %v3182 = vlaneseq
        %v3183 = vshrl.u32 %v3182, 7
        %v3184 = vsub.s32 1, %v3183
        %v3185 = vrot.slane %v3145, %v3184
        %v3186 = vlaneseq
        %v3187 = vshrl.u32 %v3186, 7
        %v3188 = vsub.s32 1, %v3187
        %v3189 = vrot.slane %v3149, %v3188
        %v3190 = vlaneseq
        %v3191 = vshrl.u32 %v3190, 7
        %v3192 = vsub.s32 1, %v3191
        %v3193 = vrot.slane %v3153, %v3192
        %v3194 = vlaneseq
        %v3195 = vshrl.u32 %v3194, 7
        %v3196 = vsub.s32 1, %v3195
        %v3197 = vrot.slane %v3157, %v3196
        %v3198 = vlaneseq
        %v3199 = vshrl.u32 %v3198, 7
        %v3200 = vsub.s32 1, %v3199
        %v3201 = vrot.slane %v3161, %v3200
        %v3202 = vlaneseq
        %v3203 = vshrl.u32 %v3202, 7
        %v3204 = vsub.s32 1, %v3203
        %v3205 = vrot.slane %v3165, %v3204
        %v3206 = vlaneseq
        %v3207 = vshrl.u32 %v3206, 7
        %v3208 = vsub.s32 1, %v3207
        %v3209 = vrot.slane %v3169, %v3208
        %v3210 = vlaneseq
        %v3211 = vshrl.u32 %v3210, 7
        %v3212 = vsub.s32 1, %v3211
        %v3213 = vrot.slane %v3173, %v3212
        %v3214 = vadd.f32 %v2925, %v3185
        %v3215 = vadd.f32 %v2927, %v3189
        %v3216 = vadd.f32 %v2996, %v3193
        %v3217 = vadd.f32 %v2998, %v3197
        %v3218 = vadd.f32 %v3067, %v3201
        %v3219 = vadd.f32 %v3069, %v3205
        %v3220 = vadd.f32 %v3138, %v3209
        %v3221 = vadd.f32 %v3140, %v3213
        %s3222 = scalar_lea.vmem %s1047, 256 [#allocation2]
        %v3223 = vld [vmem:[%s3222] sm:$0xff]
        %v3224 = vld [vmem:[%s3222 + $0x8] sm:$0xff]
        %v3225 = vld [vmem:[%s3222 + $0x10] sm:$0xff]
        %v3226 = vld [vmem:[%s3222 + $0x18] sm:$0xff]
        %v3227 = vld [vmem:[%s3222 + $0x20] sm:$0xff]
        %v3228 = vld [vmem:[%s3222 + $0x28] sm:$0xff]
        %v3229 = vld [vmem:[%s3222 + $0x30] sm:$0xff]
        %v3230 = vld [vmem:[%s3222 + $0x38] sm:$0xff]
        %v3231 = vld [vmem:[%s3222 + $0x40] sm:$0x3]
        %v3232 = vld [vmem:[%s3222 + $0x48] sm:$0x3]
        %v3233 = vld [vmem:[%s3222 + $0x50] sm:$0x3]
        %v3234 = vld [vmem:[%s3222 + $0x58] sm:$0x3]
        %v3235 = vld [vmem:[%s3222 + $0x60] sm:$0x3]
        %v3236 = vld [vmem:[%s3222 + $0x68] sm:$0x3]
        %v3237 = vld [vmem:[%s3222 + $0x70] sm:$0x3]
        %v3238 = vld [vmem:[%s3222 + $0x78] sm:$0x3]
        %s3239 = scalar_lea.vmem %s1054, 1664 [#allocation3]
        %v3240 = vld [vmem:[%s3239] sm:$0xff]
        %v3241 = vld [vmem:[%s3239 + $0x8] sm:$0xff]
        %v3242 = vld [vmem:[%s3239 + $0x10] sm:$0xff]
        %v3243 = vld [vmem:[%s3239 + $0x18] sm:$0xff]
        %v3244 = vld [vmem:[%s3239 + $0x20] sm:$0xff]
        %v3245 = vld [vmem:[%s3239 + $0x28] sm:$0xff]
        %v3246 = vld [vmem:[%s3239 + $0x30] sm:$0xff]
        %v3247 = vld [vmem:[%s3239 + $0x38] sm:$0xff]
        %v3248 = vld [vmem:[%s3239 + $0x40] sm:$0xff]
        %v3249 = vld [vmem:[%s3239 + $0x48] sm:$0xff]
        %v3250 = vld [vmem:[%s3239 + $0x50] sm:$0xff]
        %v3251 = vld [vmem:[%s3239 + $0x58] sm:$0xff]
        %v3252 = vld [vmem:[%s3239 + $0x60] sm:$0xff]
        %v3253 = vld [vmem:[%s3239 + $0x68] sm:$0xff]
        %v3254 = vld [vmem:[%s3239 + $0x70] sm:$0xff]
        %v3255 = vld [vmem:[%s3239 + $0x78] sm:$0xff]
        %v3256 = vld [vmem:[%s3239 + $0x80] sm:$0xff]
        %v3257 = vld [vmem:[%s3239 + $0x88] sm:$0xff]
        %v3258 = vld [vmem:[%s3239 + $0x90] sm:$0xff]
        %v3259 = vld [vmem:[%s3239 + $0x98] sm:$0xff]
        %v3260 = vld [vmem:[%s3239 + $0xa0] sm:$0xff]
        %v3261 = vld [vmem:[%s3239 + $0xa8] sm:$0xff]
        %v3262 = vld [vmem:[%s3239 + $0xb0] sm:$0xff]
        %v3263 = vld [vmem:[%s3239 + $0xb8] sm:$0xff]
        %v3264 = vld [vmem:[%s3239 + $0xc0] sm:$0xff]
        %v3265 = vld [vmem:[%s3239 + $0xc8] sm:$0xff]
        %v3266 = vld [vmem:[%s3239 + $0xd0] sm:$0xff]
        %v3267 = vld [vmem:[%s3239 + $0xd8] sm:$0xff]
        %v3268 = vld [vmem:[%s3239 + $0xe0] sm:$0xff]
        %v3269 = vld [vmem:[%s3239 + $0xe8] sm:$0xff]
        %v3270 = vld [vmem:[%s3239 + $0xf0] sm:$0xff]
        %v3271 = vld [vmem:[%s3239 + $0xf8] sm:$0xff]
        %v3272 = vld [vmem:[%s3239 + $0x100] sm:$0xff]
        %v3273 = vld [vmem:[%s3239 + $0x108] sm:$0xff]
        %v3274 = vld [vmem:[%s3239 + $0x110] sm:$0xff]
        %v3275 = vld [vmem:[%s3239 + $0x118] sm:$0xff]
        %v3276 = vld [vmem:[%s3239 + $0x120] sm:$0xff]
        %v3277 = vld [vmem:[%s3239 + $0x128] sm:$0xff]
        %v3278 = vld [vmem:[%s3239 + $0x130] sm:$0xff]
        %v3279 = vld [vmem:[%s3239 + $0x138] sm:$0xff]
        %v3280 = vld [vmem:[%s3239 + $0x140] sm:$0xff]
        %v3281 = vld [vmem:[%s3239 + $0x148] sm:$0xff]
        %v3282 = vld [vmem:[%s3239 + $0x150] sm:$0xff]
        %v3283 = vld [vmem:[%s3239 + $0x158] sm:$0xff]
        %v3284 = vld [vmem:[%s3239 + $0x160] sm:$0xff]
        %v3285 = vld [vmem:[%s3239 + $0x168] sm:$0xff]
        %v3286 = vld [vmem:[%s3239 + $0x170] sm:$0xff]
        %v3287 = vld [vmem:[%s3239 + $0x178] sm:$0xff]
        %v3288 = vld [vmem:[%s3239 + $0x180] sm:$0xff]
        %v3289 = vld [vmem:[%s3239 + $0x188] sm:$0xff]
        %v3290 = vld [vmem:[%s3239 + $0x190] sm:$0xff]
        %v3291 = vld [vmem:[%s3239 + $0x198] sm:$0xff]
        %v3292 = vld [vmem:[%s3239 + $0x1a0] sm:$0xff]
        %v3293 = vld [vmem:[%s3239 + $0x1a8] sm:$0xff]
        %v3294 = vld [vmem:[%s3239 + $0x1b0] sm:$0xff]
        %v3295 = vld [vmem:[%s3239 + $0x1b8] sm:$0xff]
        %v3296 = vld [vmem:[%s3239 + $0x1c0] sm:$0xff]
        %v3297 = vld [vmem:[%s3239 + $0x1c8] sm:$0xff]
        %v3298 = vld [vmem:[%s3239 + $0x1d0] sm:$0xff]
        %v3299 = vld [vmem:[%s3239 + $0x1d8] sm:$0xff]
        %v3300 = vld [vmem:[%s3239 + $0x1e0] sm:$0xff]
        %v3301 = vld [vmem:[%s3239 + $0x1e8] sm:$0xff]
        %v3302 = vld [vmem:[%s3239 + $0x1f0] sm:$0xff]
        %v3303 = vld [vmem:[%s3239 + $0x1f8] sm:$0xff]
        %v3304 = vld [vmem:[%s3239 + $0x200] sm:$0xff]
        %v3305 = vld [vmem:[%s3239 + $0x208] sm:$0xff]
        %v3306 = vld [vmem:[%s3239 + $0x210] sm:$0xff]
        %v3307 = vld [vmem:[%s3239 + $0x218] sm:$0xff]
        %v3308 = vld [vmem:[%s3239 + $0x220] sm:$0xff]
        %v3309 = vld [vmem:[%s3239 + $0x228] sm:$0xff]
        %v3310 = vld [vmem:[%s3239 + $0x230] sm:$0xff]
        %v3311 = vld [vmem:[%s3239 + $0x238] sm:$0xff]
        %v3312 = vld [vmem:[%s3239 + $0x240] sm:$0xff]
        %v3313 = vld [vmem:[%s3239 + $0x248] sm:$0xff]
        %v3314 = vld [vmem:[%s3239 + $0x250] sm:$0xff]
        %v3315 = vld [vmem:[%s3239 + $0x258] sm:$0xff]
        %v3316 = vld [vmem:[%s3239 + $0x260] sm:$0xff]
        %v3317 = vld [vmem:[%s3239 + $0x268] sm:$0xff]
        %v3318 = vld [vmem:[%s3239 + $0x270] sm:$0xff]
        %v3319 = vld [vmem:[%s3239 + $0x278] sm:$0xff]
        %v3320 = vld [vmem:[%s3239 + $0x280] sm:$0xff]
        %v3321 = vld [vmem:[%s3239 + $0x288] sm:$0xff]
        %v3322 = vld [vmem:[%s3239 + $0x290] sm:$0xff]
        %v3323 = vld [vmem:[%s3239 + $0x298] sm:$0xff]
        %v3324 = vld [vmem:[%s3239 + $0x2a0] sm:$0xff]
        %v3325 = vld [vmem:[%s3239 + $0x2a8] sm:$0xff]
        %v3326 = vld [vmem:[%s3239 + $0x2b0] sm:$0xff]
        %v3327 = vld [vmem:[%s3239 + $0x2b8] sm:$0xff]
        %v3328 = vld [vmem:[%s3239 + $0x2c0] sm:$0xff]
        %v3329 = vld [vmem:[%s3239 + $0x2c8] sm:$0xff]
        %v3330 = vld [vmem:[%s3239 + $0x2d0] sm:$0xff]
        %v3331 = vld [vmem:[%s3239 + $0x2d8] sm:$0xff]
        %v3332 = vld [vmem:[%s3239 + $0x2e0] sm:$0xff]
        %v3333 = vld [vmem:[%s3239 + $0x2e8] sm:$0xff]
        %v3334 = vld [vmem:[%s3239 + $0x2f0] sm:$0xff]
        %v3335 = vld [vmem:[%s3239 + $0x2f8] sm:$0xff]
        %v3336 = vld [vmem:[%s3239 + $0x300] sm:$0xff]
        %v3337 = vld [vmem:[%s3239 + $0x308] sm:$0xff]
        %v3338 = vld [vmem:[%s3239 + $0x310] sm:$0xff]
        %v3339 = vld [vmem:[%s3239 + $0x318] sm:$0xff]
        %v3340 = vld [vmem:[%s3239 + $0x320] sm:$0xff]
        %v3341 = vld [vmem:[%s3239 + $0x328] sm:$0xff]
        %v3342 = vld [vmem:[%s3239 + $0x330] sm:$0xff]
        %v3343 = vld [vmem:[%s3239 + $0x338] sm:$0xff]
        %v3344 = vunpack.c.l.bf16 %v3240
        %v3345 = vunpack.c.h.bf16 %v3240
        %v3346 = vunpack.c.l.bf16 %v3241
        %v3347 = vunpack.c.h.bf16 %v3241
        %v3348 = vunpack.c.l.bf16 %v3242
        %v3349 = vunpack.c.h.bf16 %v3242
        %v3350 = vunpack.c.l.bf16 %v3243
        %v3351 = vunpack.c.h.bf16 %v3243
        %v3352 = vunpack.c.l.bf16 %v3244
        %v3353 = vunpack.c.h.bf16 %v3244
        %v3354 = vunpack.c.l.bf16 %v3245
        %v3355 = vunpack.c.h.bf16 %v3245
        %v3356 = vunpack.c.l.bf16 %v3246
        %v3357 = vunpack.c.h.bf16 %v3246
        %v3358 = vunpack.c.l.bf16 %v3247
        %v3359 = vunpack.c.h.bf16 %v3247
        %v3360 = vunpack.c.l.bf16 %v3248
        %v3361 = vunpack.c.h.bf16 %v3248
        %v3362 = vunpack.c.l.bf16 %v3249
        %v3363 = vunpack.c.h.bf16 %v3249
        %v3364 = vunpack.c.l.bf16 %v3250
        %v3365 = vunpack.c.h.bf16 %v3250
        %v3366 = vunpack.c.l.bf16 %v3251
        %v3367 = vunpack.c.h.bf16 %v3251
        %v3368 = vunpack.c.l.bf16 %v3252
        %v3369 = vunpack.c.h.bf16 %v3252
        %v3370 = vunpack.c.l.bf16 %v3253
        %v3371 = vunpack.c.h.bf16 %v3253
        %v3372 = vunpack.c.l.bf16 %v3254
        %v3373 = vunpack.c.h.bf16 %v3254
        %v3374 = vunpack.c.l.bf16 %v3255
        %v3375 = vunpack.c.h.bf16 %v3255
        %v3376 = vunpack.c.l.bf16 %v3256
        %v3377 = vunpack.c.h.bf16 %v3256
        %v3378 = vunpack.c.l.bf16 %v3257
        %v3379 = vunpack.c.h.bf16 %v3257
        %v3380 = vunpack.c.l.bf16 %v3258
        %v3381 = vunpack.c.h.bf16 %v3258
        %v3382 = vunpack.c.l.bf16 %v3259
        %v3383 = vunpack.c.h.bf16 %v3259
        %v3384 = vunpack.c.l.bf16 %v3260
        %v3385 = vunpack.c.h.bf16 %v3260
        %v3386 = vunpack.c.l.bf16 %v3261
        %v3387 = vunpack.c.h.bf16 %v3261
        %v3388 = vunpack.c.l.bf16 %v3262
        %v3389 = vunpack.c.h.bf16 %v3262
        %v3390 = vunpack.c.l.bf16 %v3263
        %v3391 = vunpack.c.h.bf16 %v3263
        %v3392 = vunpack.c.l.bf16 %v3264
        %v3393 = vunpack.c.h.bf16 %v3264
        %v3394 = vunpack.c.l.bf16 %v3265
        %v3395 = vunpack.c.h.bf16 %v3265
        %v3396 = vunpack.c.l.bf16 %v3266
        %v3397 = vunpack.c.h.bf16 %v3266
        %v3398 = vunpack.c.l.bf16 %v3267
        %v3399 = vunpack.c.h.bf16 %v3267
        %v3400 = vunpack.c.l.bf16 %v3268
        %v3401 = vunpack.c.h.bf16 %v3268
        %v3402 = vunpack.c.l.bf16 %v3269
        %v3403 = vunpack.c.h.bf16 %v3269
        %v3404 = vunpack.c.l.bf16 %v3270
        %v3405 = vunpack.c.h.bf16 %v3270
        %v3406 = vunpack.c.l.bf16 %v3271
        %v3407 = vunpack.c.h.bf16 %v3271
        %v3408 = vunpack.c.l.bf16 %v3272
        %v3409 = vunpack.c.h.bf16 %v3272
        %v3410 = vunpack.c.l.bf16 %v3273
        %v3411 = vunpack.c.h.bf16 %v3273
        %v3412 = vunpack.c.l.bf16 %v3274
        %v3413 = vunpack.c.h.bf16 %v3274
        %v3414 = vunpack.c.l.bf16 %v3275
        %v3415 = vunpack.c.h.bf16 %v3275
        %v3416 = vunpack.c.l.bf16 %v3276
        %v3417 = vunpack.c.h.bf16 %v3276
        %v3418 = vunpack.c.l.bf16 %v3277
        %v3419 = vunpack.c.h.bf16 %v3277
        %v3420 = vunpack.c.l.bf16 %v3278
        %v3421 = vunpack.c.h.bf16 %v3278
        %v3422 = vunpack.c.l.bf16 %v3279
        %v3423 = vunpack.c.h.bf16 %v3279
        %v3424 = vunpack.c.l.bf16 %v3280
        %v3425 = vunpack.c.h.bf16 %v3280
        %v3426 = vunpack.c.l.bf16 %v3281
        %v3427 = vunpack.c.h.bf16 %v3281
        %v3428 = vunpack.c.l.bf16 %v3282
        %v3429 = vunpack.c.h.bf16 %v3282
        %v3430 = vunpack.c.l.bf16 %v3283
        %v3431 = vunpack.c.h.bf16 %v3283
        %v3432 = vunpack.c.l.bf16 %v3284
        %v3433 = vunpack.c.h.bf16 %v3284
        %v3434 = vunpack.c.l.bf16 %v3285
        %v3435 = vunpack.c.h.bf16 %v3285
        %v3436 = vunpack.c.l.bf16 %v3286
        %v3437 = vunpack.c.h.bf16 %v3286
        %v3438 = vunpack.c.l.bf16 %v3287
        %v3439 = vunpack.c.h.bf16 %v3287
        %v3440 = vunpack.c.l.bf16 %v3288
        %v3441 = vunpack.c.h.bf16 %v3288
        %v3442 = vunpack.c.l.bf16 %v3289
        %v3443 = vunpack.c.h.bf16 %v3289
        %v3444 = vunpack.c.l.bf16 %v3290
        %v3445 = vunpack.c.h.bf16 %v3290
        %v3446 = vunpack.c.l.bf16 %v3291
        %v3447 = vunpack.c.h.bf16 %v3291
        %v3448 = vunpack.c.l.bf16 %v3292
        %v3449 = vunpack.c.h.bf16 %v3292
        %v3450 = vunpack.c.l.bf16 %v3293
        %v3451 = vunpack.c.h.bf16 %v3293
        %v3452 = vunpack.c.l.bf16 %v3294
        %v3453 = vunpack.c.h.bf16 %v3294
        %v3454 = vunpack.c.l.bf16 %v3295
        %v3455 = vunpack.c.h.bf16 %v3295
        %v3456 = vunpack.c.l.bf16 %v3296
        %v3457 = vunpack.c.h.bf16 %v3296
        %v3458 = vunpack.c.l.bf16 %v3297
        %v3459 = vunpack.c.h.bf16 %v3297
        %v3460 = vunpack.c.l.bf16 %v3298
        %v3461 = vunpack.c.h.bf16 %v3298
        %v3462 = vunpack.c.l.bf16 %v3299
        %v3463 = vunpack.c.h.bf16 %v3299
        %v3464 = vunpack.c.l.bf16 %v3300
        %v3465 = vunpack.c.h.bf16 %v3300
        %v3466 = vunpack.c.l.bf16 %v3301
        %v3467 = vunpack.c.h.bf16 %v3301
        %v3468 = vunpack.c.l.bf16 %v3302
        %v3469 = vunpack.c.h.bf16 %v3302
        %v3470 = vunpack.c.l.bf16 %v3303
        %v3471 = vunpack.c.h.bf16 %v3303
        %v3472 = vunpack.c.l.bf16 %v3304
        %v3473 = vunpack.c.h.bf16 %v3304
        %v3474 = vunpack.c.l.bf16 %v3305
        %v3475 = vunpack.c.h.bf16 %v3305
        %v3476 = vunpack.c.l.bf16 %v3306
        %v3477 = vunpack.c.h.bf16 %v3306
        %v3478 = vunpack.c.l.bf16 %v3307
        %v3479 = vunpack.c.h.bf16 %v3307
        %v3480 = vunpack.c.l.bf16 %v3308
        %v3481 = vunpack.c.h.bf16 %v3308
        %v3482 = vunpack.c.l.bf16 %v3309
        %v3483 = vunpack.c.h.bf16 %v3309
        %v3484 = vunpack.c.l.bf16 %v3310
        %v3485 = vunpack.c.h.bf16 %v3310
        %v3486 = vunpack.c.l.bf16 %v3311
        %v3487 = vunpack.c.h.bf16 %v3311
        %v3488 = vunpack.c.l.bf16 %v3312
        %v3489 = vunpack.c.h.bf16 %v3312
        %v3490 = vunpack.c.l.bf16 %v3313
        %v3491 = vunpack.c.h.bf16 %v3313
        %v3492 = vunpack.c.l.bf16 %v3314
        %v3493 = vunpack.c.h.bf16 %v3314
        %v3494 = vunpack.c.l.bf16 %v3315
        %v3495 = vunpack.c.h.bf16 %v3315
        %v3496 = vunpack.c.l.bf16 %v3316
        %v3497 = vunpack.c.h.bf16 %v3316
        %v3498 = vunpack.c.l.bf16 %v3317
        %v3499 = vunpack.c.h.bf16 %v3317
        %v3500 = vunpack.c.l.bf16 %v3318
        %v3501 = vunpack.c.h.bf16 %v3318
        %v3502 = vunpack.c.l.bf16 %v3319
        %v3503 = vunpack.c.h.bf16 %v3319
        %v3504 = vunpack.c.l.bf16 %v3320
        %v3505 = vunpack.c.h.bf16 %v3320
        %v3506 = vunpack.c.l.bf16 %v3321
        %v3507 = vunpack.c.h.bf16 %v3321
        %v3508 = vunpack.c.l.bf16 %v3322
        %v3509 = vunpack.c.h.bf16 %v3322
        %v3510 = vunpack.c.l.bf16 %v3323
        %v3511 = vunpack.c.h.bf16 %v3323
        %v3512 = vunpack.c.l.bf16 %v3324
        %v3513 = vunpack.c.h.bf16 %v3324
        %v3514 = vunpack.c.l.bf16 %v3325
        %v3515 = vunpack.c.h.bf16 %v3325
        %v3516 = vunpack.c.l.bf16 %v3326
        %v3517 = vunpack.c.h.bf16 %v3326
        %v3518 = vunpack.c.l.bf16 %v3327
        %v3519 = vunpack.c.h.bf16 %v3327
        %v3520 = vunpack.c.l.bf16 %v3328
        %v3521 = vunpack.c.h.bf16 %v3328
        %v3522 = vunpack.c.l.bf16 %v3329
        %v3523 = vunpack.c.h.bf16 %v3329
        %v3524 = vunpack.c.l.bf16 %v3330
        %v3525 = vunpack.c.h.bf16 %v3330
        %v3526 = vunpack.c.l.bf16 %v3331
        %v3527 = vunpack.c.h.bf16 %v3331
        %v3528 = vunpack.c.l.bf16 %v3332
        %v3529 = vunpack.c.h.bf16 %v3332
        %v3530 = vunpack.c.l.bf16 %v3333
        %v3531 = vunpack.c.h.bf16 %v3333
        %v3532 = vunpack.c.l.bf16 %v3334
        %v3533 = vunpack.c.h.bf16 %v3334
        %v3534 = vunpack.c.l.bf16 %v3335
        %v3535 = vunpack.c.h.bf16 %v3335
        %v3536 = vunpack.c.l.bf16 %v3336
        %v3537 = vunpack.c.h.bf16 %v3336
        %v3538 = vunpack.c.l.bf16 %v3337
        %v3539 = vunpack.c.h.bf16 %v3337
        %v3540 = vunpack.c.l.bf16 %v3338
        %v3541 = vunpack.c.h.bf16 %v3338
        %v3542 = vunpack.c.l.bf16 %v3339
        %v3543 = vunpack.c.h.bf16 %v3339
        %v3544 = vunpack.c.l.bf16 %v3340
        %v3545 = vunpack.c.h.bf16 %v3340
        %v3546 = vunpack.c.l.bf16 %v3341
        %v3547 = vunpack.c.h.bf16 %v3341
        %v3548 = vunpack.c.l.bf16 %v3342
        %v3549 = vunpack.c.h.bf16 %v3342
        %v3550 = vunpack.c.l.bf16 %v3343
        %v3551 = vunpack.c.h.bf16 %v3343
        %v3553 = vsel %vm1490, %v3544, 0
        %v3556 = vsel %vm1490, %v3545, 0
        %v3559 = vsel %vm1490, %v3546, 0
        %v3562 = vsel %vm1490, %v3547, 0
        %v3565 = vsel %vm1490, %v3548, 0
        %v3568 = vsel %vm1490, %v3549, 0
        %v3571 = vsel %vm1490, %v3550, 0
        %v3574 = vsel %vm1490, %v3551, 0
        %3576 = vmatprep.subr.mxu0 %v3465
        %3577 = vmatpush1.msra.mxu0 %v3464
        %3578 = vmatprep.subr.mxu0 %v3457
        %3579 = vmatpush1.msra.mxu0 %v3456
        %3580 = vmatprep.subr.mxu0 %v3449
        %3581 = vmatpush1.msra.mxu0 %v3448
        %3582 = vmatprep.subr.mxu0 %v3441
        %3583 = vmatpush1.msra.mxu0 %v3440
        %3584 = vmatprep.subr.mxu0 %v3433
        %3585 = vmatpush1.msra.mxu0 %v3432
        %3586 = vmatprep.subr.mxu0 %v3425
        %3587 = vmatpush1.msra.mxu0 %v3424
        %3588 = vmatprep.subr.mxu0 %v3417
        %3589 = vmatpush1.msra.mxu0 %v3416
        %3590 = vmatprep.subr.mxu0 %v3409
        %3591 = vmatpush1.msra.mxu0 %v3408
        %3592 = vmatprep.subr.mxu0 %v3401
        %3593 = vmatpush1.msra.mxu0 %v3400
        %3594 = vmatprep.subr.mxu0 %v3393
        %3595 = vmatpush1.msra.mxu0 %v3392
        %3596 = vmatprep.subr.mxu0 %v3385
        %3597 = vmatpush1.msra.mxu0 %v3384
        %3598 = vmatprep.subr.mxu0 %v3377
        %3599 = vmatpush1.msra.mxu0 %v3376
        %3600 = vmatprep.subr.mxu0 %v3369
        %3601 = vmatpush1.msra.mxu0 %v3368
        %3602 = vmatprep.subr.mxu0 %v3361
        %3603 = vmatpush1.msra.mxu0 %v3360
        %3604 = vmatprep.subr.mxu0 %v3353
        %3605 = vmatpush1.msra.mxu0 %v3352
        %3606 = vmatprep.subr.mxu0 %v3345
        %3607 = vmatpush1.msra.mxu0 %v3344
        %3608 = vmatprep.subr.mxu0 0.0
        %3609 = vmatpush2.msra.mxu0 0.0
        %3610 = vmatprep.subr.mxu0 0.0
        %3611 = vmatpush2.msra.mxu0 0.0
        %3612 = vmatprep.subr.mxu0 0.0
        %3613 = vmatpush2.msra.mxu0 0.0
        %3614 = vmatprep.subr.mxu0 0.0
        %3615 = vmatpush2.msra.mxu0 0.0
        %3616 = vmatprep.subr.mxu0 0.0
        %3617 = vmatpush2.msra.mxu0 0.0
        %3618 = vmatprep.subr.mxu0 0.0
        %3619 = vmatpush2.msra.mxu0 0.0
        %3620 = vmatprep.subr.mxu0 %v3556
        %3621 = vmatpush2.msra.mxu0 %v3553
        %3622 = vmatprep.subr.mxu0 %v3537
        %3623 = vmatpush2.msra.mxu0 %v3536
        %3624 = vmatprep.subr.mxu0 %v3529
        %3625 = vmatpush2.msra.mxu0 %v3528
        %3626 = vmatprep.subr.mxu0 %v3521
        %3627 = vmatpush2.msra.mxu0 %v3520
        %3628 = vmatprep.subr.mxu0 %v3513
        %3629 = vmatpush2.msra.mxu0 %v3512
        %3630 = vmatprep.subr.mxu0 %v3505
        %3631 = vmatpush2.msra.mxu0 %v3504
        %3632 = vmatprep.subr.mxu0 %v3497
        %3633 = vmatpush2.msra.mxu0 %v3496
        %3634 = vmatprep.subr.mxu0 %v3489
        %3635 = vmatpush2.msra.mxu0 %v3488
        %3636 = vmatprep.subr.mxu0 %v3481
        %3637 = vmatpush2.msra.mxu0 %v3480
        %3638 = vmatprep.subr.mxu0 %v3473
        %3639 = vmatpush2.msra.mxu0 %v3472
        %3640 = vmatprep.mubr.f32.mxu0 %v1488
        %3641 = vmatmul.mubr.f32.gmra.mxu0 %v1484
        %v3642 = vpop.f32.mrf.mxu0
        %v3643 = vadd.f32 0.0, %v3642
        %v3644 = vpop.f32.mrf.mxu0
        %v3645 = vadd.f32 0.0, %v3644
        %3646 = vdwg.mxu0
        %3647 = vmatprep.subr.mxu0 %v3467
        %3648 = vmatpush1.msra.mxu0 %v3466
        %3649 = vmatprep.subr.mxu0 %v3459
        %3650 = vmatpush1.msra.mxu0 %v3458
        %3651 = vmatprep.subr.mxu0 %v3451
        %3652 = vmatpush1.msra.mxu0 %v3450
        %3653 = vmatprep.subr.mxu0 %v3443
        %3654 = vmatpush1.msra.mxu0 %v3442
        %3655 = vmatprep.subr.mxu0 %v3435
        %3656 = vmatpush1.msra.mxu0 %v3434
        %3657 = vmatprep.subr.mxu0 %v3427
        %3658 = vmatpush1.msra.mxu0 %v3426
        %3659 = vmatprep.subr.mxu0 %v3419
        %3660 = vmatpush1.msra.mxu0 %v3418
        %3661 = vmatprep.subr.mxu0 %v3411
        %3662 = vmatpush1.msra.mxu0 %v3410
        %3663 = vmatprep.subr.mxu0 %v3403
        %3664 = vmatpush1.msra.mxu0 %v3402
        %3665 = vmatprep.subr.mxu0 %v3395
        %3666 = vmatpush1.msra.mxu0 %v3394
        %3667 = vmatprep.subr.mxu0 %v3387
        %3668 = vmatpush1.msra.mxu0 %v3386
        %3669 = vmatprep.subr.mxu0 %v3379
        %3670 = vmatpush1.msra.mxu0 %v3378
        %3671 = vmatprep.subr.mxu0 %v3371
        %3672 = vmatpush1.msra.mxu0 %v3370
        %3673 = vmatprep.subr.mxu0 %v3363
        %3674 = vmatpush1.msra.mxu0 %v3362
        %3675 = vmatprep.subr.mxu0 %v3355
        %3676 = vmatpush1.msra.mxu0 %v3354
        %3677 = vmatprep.subr.mxu0 %v3347
        %3678 = vmatpush1.msra.mxu0 %v3346
        %3679 = vmatprep.subr.mxu0 0.0
        %3680 = vmatpush2.msra.mxu0 0.0
        %3681 = vmatprep.subr.mxu0 0.0
        %3682 = vmatpush2.msra.mxu0 0.0
        %3683 = vmatprep.subr.mxu0 0.0
        %3684 = vmatpush2.msra.mxu0 0.0
        %3685 = vmatprep.subr.mxu0 0.0
        %3686 = vmatpush2.msra.mxu0 0.0
        %3687 = vmatprep.subr.mxu0 0.0
        %3688 = vmatpush2.msra.mxu0 0.0
        %3689 = vmatprep.subr.mxu0 0.0
        %3690 = vmatpush2.msra.mxu0 0.0
        %3691 = vmatprep.subr.mxu0 %v3562
        %3692 = vmatpush2.msra.mxu0 %v3559
        %3693 = vmatprep.subr.mxu0 %v3539
        %3694 = vmatpush2.msra.mxu0 %v3538
        %3695 = vmatprep.subr.mxu0 %v3531
        %3696 = vmatpush2.msra.mxu0 %v3530
        %3697 = vmatprep.subr.mxu0 %v3523
        %3698 = vmatpush2.msra.mxu0 %v3522
        %3699 = vmatprep.subr.mxu0 %v3515
        %3700 = vmatpush2.msra.mxu0 %v3514
        %3701 = vmatprep.subr.mxu0 %v3507
        %3702 = vmatpush2.msra.mxu0 %v3506
        %3703 = vmatprep.subr.mxu0 %v3499
        %3704 = vmatpush2.msra.mxu0 %v3498
        %3705 = vmatprep.subr.mxu0 %v3491
        %3706 = vmatpush2.msra.mxu0 %v3490
        %3707 = vmatprep.subr.mxu0 %v3483
        %3708 = vmatpush2.msra.mxu0 %v3482
        %3709 = vmatprep.subr.mxu0 %v3475
        %3710 = vmatpush2.msra.mxu0 %v3474
        %3711 = vmatprep.mubr.f32.mxu0 %v1488
        %3712 = vmatmul.mubr.f32.gmra.mxu0 %v1484
        %v3713 = vpop.f32.mrf.mxu0
        %v3714 = vadd.f32 0.0, %v3713
        %v3715 = vpop.f32.mrf.mxu0
        %v3716 = vadd.f32 0.0, %v3715
        %3717 = vdwg.mxu0
        %3718 = vmatprep.subr.mxu0 %v3469
        %3719 = vmatpush1.msra.mxu0 %v3468
        %3720 = vmatprep.subr.mxu0 %v3461
        %3721 = vmatpush1.msra.mxu0 %v3460
        %3722 = vmatprep.subr.mxu0 %v3453
        %3723 = vmatpush1.msra.mxu0 %v3452
        %3724 = vmatprep.subr.mxu0 %v3445
        %3725 = vmatpush1.msra.mxu0 %v3444
        %3726 = vmatprep.subr.mxu0 %v3437
        %3727 = vmatpush1.msra.mxu0 %v3436
        %3728 = vmatprep.subr.mxu0 %v3429
        %3729 = vmatpush1.msra.mxu0 %v3428
        %3730 = vmatprep.subr.mxu0 %v3421
        %3731 = vmatpush1.msra.mxu0 %v3420
        %3732 = vmatprep.subr.mxu0 %v3413
        %3733 = vmatpush1.msra.mxu0 %v3412
        %3734 = vmatprep.subr.mxu0 %v3405
        %3735 = vmatpush1.msra.mxu0 %v3404
        %3736 = vmatprep.subr.mxu0 %v3397
        %3737 = vmatpush1.msra.mxu0 %v3396
        %3738 = vmatprep.subr.mxu0 %v3389
        %3739 = vmatpush1.msra.mxu0 %v3388
        %3740 = vmatprep.subr.mxu0 %v3381
        %3741 = vmatpush1.msra.mxu0 %v3380
        %3742 = vmatprep.subr.mxu0 %v3373
        %3743 = vmatpush1.msra.mxu0 %v3372
        %3744 = vmatprep.subr.mxu0 %v3365
        %3745 = vmatpush1.msra.mxu0 %v3364
        %3746 = vmatprep.subr.mxu0 %v3357
        %3747 = vmatpush1.msra.mxu0 %v3356
        %3748 = vmatprep.subr.mxu0 %v3349
        %3749 = vmatpush1.msra.mxu0 %v3348
        %3750 = vmatprep.subr.mxu0 0.0
        %3751 = vmatpush2.msra.mxu0 0.0
        %3752 = vmatprep.subr.mxu0 0.0
        %3753 = vmatpush2.msra.mxu0 0.0
        %3754 = vmatprep.subr.mxu0 0.0
        %3755 = vmatpush2.msra.mxu0 0.0
        %3756 = vmatprep.subr.mxu0 0.0
        %3757 = vmatpush2.msra.mxu0 0.0
        %3758 = vmatprep.subr.mxu0 0.0
        %3759 = vmatpush2.msra.mxu0 0.0
        %3760 = vmatprep.subr.mxu0 0.0
        %3761 = vmatpush2.msra.mxu0 0.0
        %3762 = vmatprep.subr.mxu0 %v3568
        %3763 = vmatpush2.msra.mxu0 %v3565
        %3764 = vmatprep.subr.mxu0 %v3541
        %3765 = vmatpush2.msra.mxu0 %v3540
        %3766 = vmatprep.subr.mxu0 %v3533
        %3767 = vmatpush2.msra.mxu0 %v3532
        %3768 = vmatprep.subr.mxu0 %v3525
        %3769 = vmatpush2.msra.mxu0 %v3524
        %3770 = vmatprep.subr.mxu0 %v3517
        %3771 = vmatpush2.msra.mxu0 %v3516
        %3772 = vmatprep.subr.mxu0 %v3509
        %3773 = vmatpush2.msra.mxu0 %v3508
        %3774 = vmatprep.subr.mxu0 %v3501
        %3775 = vmatpush2.msra.mxu0 %v3500
        %3776 = vmatprep.subr.mxu0 %v3493
        %3777 = vmatpush2.msra.mxu0 %v3492
        %3778 = vmatprep.subr.mxu0 %v3485
        %3779 = vmatpush2.msra.mxu0 %v3484
        %3780 = vmatprep.subr.mxu0 %v3477
        %3781 = vmatpush2.msra.mxu0 %v3476
        %3782 = vmatprep.mubr.f32.mxu0 %v1488
        %3783 = vmatmul.mubr.f32.gmra.mxu0 %v1484
        %v3784 = vpop.f32.mrf.mxu0
        %v3785 = vadd.f32 0.0, %v3784
        %v3786 = vpop.f32.mrf.mxu0
        %v3787 = vadd.f32 0.0, %v3786
        %3788 = vdwg.mxu0
        %3789 = vmatprep.subr.mxu0 %v3471
        %3790 = vmatpush1.msra.mxu0 %v3470
        %3791 = vmatprep.subr.mxu0 %v3463
        %3792 = vmatpush1.msra.mxu0 %v3462
        %3793 = vmatprep.subr.mxu0 %v3455
        %3794 = vmatpush1.msra.mxu0 %v3454
        %3795 = vmatprep.subr.mxu0 %v3447
        %3796 = vmatpush1.msra.mxu0 %v3446
        %3797 = vmatprep.subr.mxu0 %v3439
        %3798 = vmatpush1.msra.mxu0 %v3438
        %3799 = vmatprep.subr.mxu0 %v3431
        %3800 = vmatpush1.msra.mxu0 %v3430
        %3801 = vmatprep.subr.mxu0 %v3423
        %3802 = vmatpush1.msra.mxu0 %v3422
        %3803 = vmatprep.subr.mxu0 %v3415
        %3804 = vmatpush1.msra.mxu0 %v3414
        %3805 = vmatprep.subr.mxu0 %v3407
        %3806 = vmatpush1.msra.mxu0 %v3406
        %3807 = vmatprep.subr.mxu0 %v3399
        %3808 = vmatpush1.msra.mxu0 %v3398
        %3809 = vmatprep.subr.mxu0 %v3391
        %3810 = vmatpush1.msra.mxu0 %v3390
        %3811 = vmatprep.subr.mxu0 %v3383
        %3812 = vmatpush1.msra.mxu0 %v3382
        %3813 = vmatprep.subr.mxu0 %v3375
        %3814 = vmatpush1.msra.mxu0 %v3374
        %3815 = vmatprep.subr.mxu0 %v3367
        %3816 = vmatpush1.msra.mxu0 %v3366
        %3817 = vmatprep.subr.mxu0 %v3359
        %3818 = vmatpush1.msra.mxu0 %v3358
        %3819 = vmatprep.subr.mxu0 %v3351
        %3820 = vmatpush1.msra.mxu0 %v3350
        %3821 = vmatprep.subr.mxu0 0.0
        %3822 = vmatpush2.msra.mxu0 0.0
        %3823 = vmatprep.subr.mxu0 0.0
        %3824 = vmatpush2.msra.mxu0 0.0
        %3825 = vmatprep.subr.mxu0 0.0
        %3826 = vmatpush2.msra.mxu0 0.0
        %3827 = vmatprep.subr.mxu0 0.0
        %3828 = vmatpush2.msra.mxu0 0.0
        %3829 = vmatprep.subr.mxu0 0.0
        %3830 = vmatpush2.msra.mxu0 0.0
        %3831 = vmatprep.subr.mxu0 0.0
        %3832 = vmatpush2.msra.mxu0 0.0
        %3833 = vmatprep.subr.mxu0 %v3574
        %3834 = vmatpush2.msra.mxu0 %v3571
        %3835 = vmatprep.subr.mxu0 %v3543
        %3836 = vmatpush2.msra.mxu0 %v3542
        %3837 = vmatprep.subr.mxu0 %v3535
        %3838 = vmatpush2.msra.mxu0 %v3534
        %3839 = vmatprep.subr.mxu0 %v3527
        %3840 = vmatpush2.msra.mxu0 %v3526
        %3841 = vmatprep.subr.mxu0 %v3519
        %3842 = vmatpush2.msra.mxu0 %v3518
        %3843 = vmatprep.subr.mxu0 %v3511
        %3844 = vmatpush2.msra.mxu0 %v3510
        %3845 = vmatprep.subr.mxu0 %v3503
        %3846 = vmatpush2.msra.mxu0 %v3502
        %3847 = vmatprep.subr.mxu0 %v3495
        %3848 = vmatpush2.msra.mxu0 %v3494
        %3849 = vmatprep.subr.mxu0 %v3487
        %3850 = vmatpush2.msra.mxu0 %v3486
        %3851 = vmatprep.subr.mxu0 %v3479
        %3852 = vmatpush2.msra.mxu0 %v3478
        %3853 = vmatprep.mubr.f32.mxu0 %v1488
        %3854 = vmatmul.mubr.f32.gmra.mxu0 %v1484
        %v3855 = vpop.f32.mrf.mxu0
        %v3856 = vadd.f32 0.0, %v3855
        %v3857 = vpop.f32.mrf.mxu0
        %v3858 = vadd.f32 0.0, %v3857
        %3859 = vdwg.mxu0
        %v3861 = vsel %vm1803, %v3231, 0
        %v3864 = vsel %vm1803, %v3232, 0
        %v3867 = vsel %vm1803, %v3233, 0
        %v3870 = vsel %vm1803, %v3234, 0
        %v3873 = vsel %vm1803, %v3235, 0
        %v3876 = vsel %vm1803, %v3236, 0
        %v3879 = vsel %vm1803, %v3237, 0
        %v3882 = vsel %vm1803, %v3238, 0
        %3884 = vmatprep.subr.mxu0 0.0
        %3885 = vmatpush1.msra.mxu0 0.0
        %3886 = vmatprep.subr.mxu0 0.0
        %3887 = vmatpush1.msra.mxu0 0.0
        %3888 = vmatprep.subr.mxu0 0.0
        %3889 = vmatpush1.msra.mxu0 0.0
        %3890 = vmatprep.subr.mxu0 0.0
        %3891 = vmatpush1.msra.mxu0 0.0
        %3892 = vmatprep.subr.mxu0 0.0
        %3893 = vmatpush1.msra.mxu0 0.0
        %3894 = vmatprep.subr.mxu0 0.0
        %3895 = vmatpush1.msra.mxu0 0.0
        %3896 = vmatprep.subr.mxu0 0.0
        %3897 = vmatpush1.msra.mxu0 0.0
        %3898 = vmatprep.subr.mxu0 0.0
        %3899 = vmatpush1.msra.mxu0 0.0
        %3900 = vmatprep.subr.mxu0 0.0
        %3901 = vmatpush1.msra.mxu0 0.0
        %3902 = vmatprep.subr.mxu0 0.0
        %3903 = vmatpush1.msra.mxu0 0.0
        %3904 = vmatprep.subr.mxu0 0.0
        %3905 = vmatpush1.msra.mxu0 0.0
        %3906 = vmatprep.subr.mxu0 0.0
        %3907 = vmatpush1.msra.mxu0 0.0
        %3908 = vmatprep.subr.mxu0 0.0
        %3909 = vmatpush1.msra.mxu0 0.0
        %3910 = vmatprep.subr.mxu0 0.0
        %3911 = vmatpush1.msra.mxu0 0.0
        %3912 = vmatprep.subr.mxu0 %v3864
        %3913 = vmatpush1.msra.mxu0 %v3861
        %3914 = vmatprep.subr.mxu0 %v3224
        %3915 = vmatpush1.msra.mxu0 %v3223
        %3916 = vmatprep.subr.mxu0 0.0
        %3917 = vmatpush2.msra.mxu0 0.0
        %3918 = vmatprep.subr.mxu0 0.0
        %3919 = vmatpush2.msra.mxu0 0.0
        %3920 = vmatprep.subr.mxu0 0.0
        %3921 = vmatpush2.msra.mxu0 0.0
        %3922 = vmatprep.subr.mxu0 0.0
        %3923 = vmatpush2.msra.mxu0 0.0
        %3924 = vmatprep.subr.mxu0 0.0
        %3925 = vmatpush2.msra.mxu0 0.0
        %3926 = vmatprep.subr.mxu0 0.0
        %3927 = vmatpush2.msra.mxu0 0.0
        %3928 = vmatprep.subr.mxu0 0.0
        %3929 = vmatpush2.msra.mxu0 0.0
        %3930 = vmatprep.subr.mxu0 0.0
        %3931 = vmatpush2.msra.mxu0 0.0
        %3932 = vmatprep.subr.mxu0 0.0
        %3933 = vmatpush2.msra.mxu0 0.0
        %3934 = vmatprep.subr.mxu0 0.0
        %3935 = vmatpush2.msra.mxu0 0.0
        %3936 = vmatprep.subr.mxu0 0.0
        %3937 = vmatpush2.msra.mxu0 0.0
        %3938 = vmatprep.subr.mxu0 0.0
        %3939 = vmatpush2.msra.mxu0 0.0
        %3940 = vmatprep.subr.mxu0 0.0
        %3941 = vmatpush2.msra.mxu0 0.0
        %3942 = vmatprep.subr.mxu0 0.0
        %3943 = vmatpush2.msra.mxu0 0.0
        %3944 = vmatprep.subr.mxu0 0.0
        %3945 = vmatpush2.msra.mxu0 0.0
        %3946 = vmatprep.subr.mxu0 0.0
        %3947 = vmatpush2.msra.mxu0 0.0
        %3948 = vmatprep.mubr.f32.mxu0 0.0
        %3949 = vmatmul.mubr.f32.gmra.mxu0 %v1801
        %v3950 = vpop.f32.mrf.mxu0
        %v3951 = vadd.f32 %v3643, %v3950
        %v3952 = vpop.f32.mrf.mxu0
        %v3953 = vadd.f32 %v3645, %v3952
        %3954 = vdwg.mxu0
        %3955 = vmatprep.subr.mxu0 0.0
        %3956 = vmatpush1.msra.mxu0 0.0
        %3957 = vmatprep.subr.mxu0 0.0
        %3958 = vmatpush1.msra.mxu0 0.0
        %3959 = vmatprep.subr.mxu0 0.0
        %3960 = vmatpush1.msra.mxu0 0.0
        %3961 = vmatprep.subr.mxu0 0.0
        %3962 = vmatpush1.msra.mxu0 0.0
        %3963 = vmatprep.subr.mxu0 0.0
        %3964 = vmatpush1.msra.mxu0 0.0
        %3965 = vmatprep.subr.mxu0 0.0
        %3966 = vmatpush1.msra.mxu0 0.0
        %3967 = vmatprep.subr.mxu0 0.0
        %3968 = vmatpush1.msra.mxu0 0.0
        %3969 = vmatprep.subr.mxu0 0.0
        %3970 = vmatpush1.msra.mxu0 0.0
        %3971 = vmatprep.subr.mxu0 0.0
        %3972 = vmatpush1.msra.mxu0 0.0
        %3973 = vmatprep.subr.mxu0 0.0
        %3974 = vmatpush1.msra.mxu0 0.0
        %3975 = vmatprep.subr.mxu0 0.0
        %3976 = vmatpush1.msra.mxu0 0.0
        %3977 = vmatprep.subr.mxu0 0.0
        %3978 = vmatpush1.msra.mxu0 0.0
        %3979 = vmatprep.subr.mxu0 0.0
        %3980 = vmatpush1.msra.mxu0 0.0
        %3981 = vmatprep.subr.mxu0 0.0
        %3982 = vmatpush1.msra.mxu0 0.0
        %3983 = vmatprep.subr.mxu0 %v3870
        %3984 = vmatpush1.msra.mxu0 %v3867
        %3985 = vmatprep.subr.mxu0 %v3226
        %3986 = vmatpush1.msra.mxu0 %v3225
        %3987 = vmatprep.subr.mxu0 0.0
        %3988 = vmatpush2.msra.mxu0 0.0
        %3989 = vmatprep.subr.mxu0 0.0
        %3990 = vmatpush2.msra.mxu0 0.0
        %3991 = vmatprep.subr.mxu0 0.0
        %3992 = vmatpush2.msra.mxu0 0.0
        %3993 = vmatprep.subr.mxu0 0.0
        %3994 = vmatpush2.msra.mxu0 0.0
        %3995 = vmatprep.subr.mxu0 0.0
        %3996 = vmatpush2.msra.mxu0 0.0
        %3997 = vmatprep.subr.mxu0 0.0
        %3998 = vmatpush2.msra.mxu0 0.0
        %3999 = vmatprep.subr.mxu0 0.0
        %4000 = vmatpush2.msra.mxu0 0.0
        %4001 = vmatprep.subr.mxu0 0.0
        %4002 = vmatpush2.msra.mxu0 0.0
        %4003 = vmatprep.subr.mxu0 0.0
        %4004 = vmatpush2.msra.mxu0 0.0
        %4005 = vmatprep.subr.mxu0 0.0
        %4006 = vmatpush2.msra.mxu0 0.0
        %4007 = vmatprep.subr.mxu0 0.0
        %4008 = vmatpush2.msra.mxu0 0.0
        %4009 = vmatprep.subr.mxu0 0.0
        %4010 = vmatpush2.msra.mxu0 0.0
        %4011 = vmatprep.subr.mxu0 0.0
        %4012 = vmatpush2.msra.mxu0 0.0
        %4013 = vmatprep.subr.mxu0 0.0
        %4014 = vmatpush2.msra.mxu0 0.0
        %4015 = vmatprep.subr.mxu0 0.0
        %4016 = vmatpush2.msra.mxu0 0.0
        %4017 = vmatprep.subr.mxu0 0.0
        %4018 = vmatpush2.msra.mxu0 0.0
        %4019 = vmatprep.mubr.f32.mxu0 0.0
        %4020 = vmatmul.mubr.f32.gmra.mxu0 %v1801
        %v4021 = vpop.f32.mrf.mxu0
        %v4022 = vadd.f32 %v3714, %v4021
        %v4023 = vpop.f32.mrf.mxu0
        %v4024 = vadd.f32 %v3716, %v4023
        %4025 = vdwg.mxu0
        %4026 = vmatprep.subr.mxu0 0.0
        %4027 = vmatpush1.msra.mxu0 0.0
        %4028 = vmatprep.subr.mxu0 0.0
        %4029 = vmatpush1.msra.mxu0 0.0
        %4030 = vmatprep.subr.mxu0 0.0
        %4031 = vmatpush1.msra.mxu0 0.0
        %4032 = vmatprep.subr.mxu0 0.0
        %4033 = vmatpush1.msra.mxu0 0.0
        %4034 = vmatprep.subr.mxu0 0.0
        %4035 = vmatpush1.msra.mxu0 0.0
        %4036 = vmatprep.subr.mxu0 0.0
        %4037 = vmatpush1.msra.mxu0 0.0
        %4038 = vmatprep.subr.mxu0 0.0
        %4039 = vmatpush1.msra.mxu0 0.0
        %4040 = vmatprep.subr.mxu0 0.0
        %4041 = vmatpush1.msra.mxu0 0.0
        %4042 = vmatprep.subr.mxu0 0.0
        %4043 = vmatpush1.msra.mxu0 0.0
        %4044 = vmatprep.subr.mxu0 0.0
        %4045 = vmatpush1.msra.mxu0 0.0
        %4046 = vmatprep.subr.mxu0 0.0
        %4047 = vmatpush1.msra.mxu0 0.0
        %4048 = vmatprep.subr.mxu0 0.0
        %4049 = vmatpush1.msra.mxu0 0.0
        %4050 = vmatprep.subr.mxu0 0.0
        %4051 = vmatpush1.msra.mxu0 0.0
        %4052 = vmatprep.subr.mxu0 0.0
        %4053 = vmatpush1.msra.mxu0 0.0
        %4054 = vmatprep.subr.mxu0 %v3876
        %4055 = vmatpush1.msra.mxu0 %v3873
        %4056 = vmatprep.subr.mxu0 %v3228
        %4057 = vmatpush1.msra.mxu0 %v3227
        %4058 = vmatprep.subr.mxu0 0.0
        %4059 = vmatpush2.msra.mxu0 0.0
        %4060 = vmatprep.subr.mxu0 0.0
        %4061 = vmatpush2.msra.mxu0 0.0
        %4062 = vmatprep.subr.mxu0 0.0
        %4063 = vmatpush2.msra.mxu0 0.0
        %4064 = vmatprep.subr.mxu0 0.0
        %4065 = vmatpush2.msra.mxu0 0.0
        %4066 = vmatprep.subr.mxu0 0.0
        %4067 = vmatpush2.msra.mxu0 0.0
        %4068 = vmatprep.subr.mxu0 0.0
        %4069 = vmatpush2.msra.mxu0 0.0
        %4070 = vmatprep.subr.mxu0 0.0
        %4071 = vmatpush2.msra.mxu0 0.0
        %4072 = vmatprep.subr.mxu0 0.0
        %4073 = vmatpush2.msra.mxu0 0.0
        %4074 = vmatprep.subr.mxu0 0.0
        %4075 = vmatpush2.msra.mxu0 0.0
        %4076 = vmatprep.subr.mxu0 0.0
        %4077 = vmatpush2.msra.mxu0 0.0
        %4078 = vmatprep.subr.mxu0 0.0
        %4079 = vmatpush2.msra.mxu0 0.0
        %4080 = vmatprep.subr.mxu0 0.0
        %4081 = vmatpush2.msra.mxu0 0.0
        %4082 = vmatprep.subr.mxu0 0.0
        %4083 = vmatpush2.msra.mxu0 0.0
        %4084 = vmatprep.subr.mxu0 0.0
        %4085 = vmatpush2.msra.mxu0 0.0
        %4086 = vmatprep.subr.mxu0 0.0
        %4087 = vmatpush2.msra.mxu0 0.0
        %4088 = vmatprep.subr.mxu0 0.0
        %4089 = vmatpush2.msra.mxu0 0.0
        %4090 = vmatprep.mubr.f32.mxu0 0.0
        %4091 = vmatmul.mubr.f32.gmra.mxu0 %v1801
        %v4092 = vpop.f32.mrf.mxu0
        %v4093 = vadd.f32 %v3785, %v4092
        %v4094 = vpop.f32.mrf.mxu0
        %v4095 = vadd.f32 %v3787, %v4094
        %4096 = vdwg.mxu0
        %4097 = vmatprep.subr.mxu0 0.0
        %4098 = vmatpush1.msra.mxu0 0.0
        %4099 = vmatprep.subr.mxu0 0.0
        %4100 = vmatpush1.msra.mxu0 0.0
        %4101 = vmatprep.subr.mxu0 0.0
        %4102 = vmatpush1.msra.mxu0 0.0
        %4103 = vmatprep.subr.mxu0 0.0
        %4104 = vmatpush1.msra.mxu0 0.0
        %4105 = vmatprep.subr.mxu0 0.0
        %4106 = vmatpush1.msra.mxu0 0.0
        %4107 = vmatprep.subr.mxu0 0.0
        %4108 = vmatpush1.msra.mxu0 0.0
        %4109 = vmatprep.subr.mxu0 0.0
        %4110 = vmatpush1.msra.mxu0 0.0
        %4111 = vmatprep.subr.mxu0 0.0
        %4112 = vmatpush1.msra.mxu0 0.0
        %4113 = vmatprep.subr.mxu0 0.0
        %4114 = vmatpush1.msra.mxu0 0.0
        %4115 = vmatprep.subr.mxu0 0.0
        %4116 = vmatpush1.msra.mxu0 0.0
        %4117 = vmatprep.subr.mxu0 0.0
        %4118 = vmatpush1.msra.mxu0 0.0
        %4119 = vmatprep.subr.mxu0 0.0
        %4120 = vmatpush1.msra.mxu0 0.0
        %4121 = vmatprep.subr.mxu0 0.0
        %4122 = vmatpush1.msra.mxu0 0.0
        %4123 = vmatprep.subr.mxu0 0.0
        %4124 = vmatpush1.msra.mxu0 0.0
        %4125 = vmatprep.subr.mxu0 %v3882
        %4126 = vmatpush1.msra.mxu0 %v3879
        %4127 = vmatprep.subr.mxu0 %v3230
        %4128 = vmatpush1.msra.mxu0 %v3229
        %4129 = vmatprep.subr.mxu0 0.0
        %4130 = vmatpush2.msra.mxu0 0.0
        %4131 = vmatprep.subr.mxu0 0.0
        %4132 = vmatpush2.msra.mxu0 0.0
        %4133 = vmatprep.subr.mxu0 0.0
        %4134 = vmatpush2.msra.mxu0 0.0
        %4135 = vmatprep.subr.mxu0 0.0
        %4136 = vmatpush2.msra.mxu0 0.0
        %4137 = vmatprep.subr.mxu0 0.0
        %4138 = vmatpush2.msra.mxu0 0.0
        %4139 = vmatprep.subr.mxu0 0.0
        %4140 = vmatpush2.msra.mxu0 0.0
        %4141 = vmatprep.subr.mxu0 0.0
        %4142 = vmatpush2.msra.mxu0 0.0
        %4143 = vmatprep.subr.mxu0 0.0
        %4144 = vmatpush2.msra.mxu0 0.0
        %4145 = vmatprep.subr.mxu0 0.0
        %4146 = vmatpush2.msra.mxu0 0.0
        %4147 = vmatprep.subr.mxu0 0.0
        %4148 = vmatpush2.msra.mxu0 0.0
        %4149 = vmatprep.subr.mxu0 0.0
        %4150 = vmatpush2.msra.mxu0 0.0
        %4151 = vmatprep.subr.mxu0 0.0
        %4152 = vmatpush2.msra.mxu0 0.0
        %4153 = vmatprep.subr.mxu0 0.0
        %4154 = vmatpush2.msra.mxu0 0.0
        %4155 = vmatprep.subr.mxu0 0.0
        %4156 = vmatpush2.msra.mxu0 0.0
        %4157 = vmatprep.subr.mxu0 0.0
        %4158 = vmatpush2.msra.mxu0 0.0
        %4159 = vmatprep.subr.mxu0 0.0
        %4160 = vmatpush2.msra.mxu0 0.0
        %4161 = vmatprep.mubr.f32.mxu0 0.0
        %4162 = vmatmul.mubr.f32.gmra.mxu0 %v1801
        %v4163 = vpop.f32.mrf.mxu0
        %v4164 = vadd.f32 %v3856, %v4163
        %v4165 = vpop.f32.mrf.mxu0
        %v4166 = vadd.f32 %v3858, %v4165
        %4167 = vdwg.mxu0
        %v4168 = vlaneseq
        %v4169 = vshrl.u32 %v4168, 7
        %v4170 = vsub.s32 2, %v4169
        %v4171 = vrot.slane %v1121, %v4170
        %v4172 = vlaneseq
        %v4173 = vshrl.u32 %v4172, 7
        %v4174 = vsub.s32 6, %v4173
        %v4175 = vrot.slane %v1121, %v4174
        %v4176 = vlaneseq
        %v4177 = vshrl.u32 %v4176, 7
        %v4178 = vsub.s32 2, %v4177
        %v4179 = vrot.slane %v1122, %v4178
        %v4180 = vlaneseq
        %v4181 = vshrl.u32 %v4180, 7
        %v4182 = vsub.s32 6, %v4181
        %v4183 = vrot.slane %v1122, %v4182
        %v4184 = vlaneseq
        %v4185 = vshrl.u32 %v4184, 7
        %v4186 = vsub.s32 2, %v4185
        %v4187 = vrot.slane %v1123, %v4186
        %v4188 = vlaneseq
        %v4189 = vshrl.u32 %v4188, 7
        %v4190 = vsub.s32 6, %v4189
        %v4191 = vrot.slane %v1123, %v4190
        %v4192 = vlaneseq
        %v4193 = vshrl.u32 %v4192, 7
        %v4194 = vsub.s32 2, %v4193
        %v4195 = vrot.slane %v1124, %v4194
        %v4196 = vlaneseq
        %v4197 = vshrl.u32 %v4196, 7
        %v4198 = vsub.s32 6, %v4197
        %v4199 = vrot.slane %v1124, %v4198
        %v4208 = vlaneseq
        %v4209 = vshrl.u32 %v4208, 7
        %v4210 = vsub.s32 2, %v4209
        %v4211 = vrot.slane %v4171, %v4210
        %v4212 = vlaneseq
        %v4213 = vshrl.u32 %v4212, 7
        %v4214 = vsub.s32 2, %v4213
        %v4215 = vrot.slane %v4175, %v4214
        %v4216 = vlaneseq
        %v4217 = vshrl.u32 %v4216, 7
        %v4218 = vsub.s32 2, %v4217
        %v4219 = vrot.slane %v4179, %v4218
        %v4220 = vlaneseq
        %v4221 = vshrl.u32 %v4220, 7
        %v4222 = vsub.s32 2, %v4221
        %v4223 = vrot.slane %v4183, %v4222
        %v4224 = vlaneseq
        %v4225 = vshrl.u32 %v4224, 7
        %v4226 = vsub.s32 2, %v4225
        %v4227 = vrot.slane %v4187, %v4226
        %v4228 = vlaneseq
        %v4229 = vshrl.u32 %v4228, 7
        %v4230 = vsub.s32 2, %v4229
        %v4231 = vrot.slane %v4191, %v4230
        %v4232 = vlaneseq
        %v4233 = vshrl.u32 %v4232, 7
        %v4234 = vsub.s32 2, %v4233
        %v4235 = vrot.slane %v4195, %v4234
        %v4236 = vlaneseq
        %v4237 = vshrl.u32 %v4236, 7
        %v4238 = vsub.s32 2, %v4237
        %v4239 = vrot.slane %v4199, %v4238
        %v4240 = vadd.f32 %v3951, %v4211
        %v4241 = vadd.f32 %v3953, %v4215
        %v4242 = vadd.f32 %v4022, %v4219
        %v4243 = vadd.f32 %v4024, %v4223
        %v4244 = vadd.f32 %v4093, %v4227
        %v4245 = vadd.f32 %v4095, %v4231
        %v4246 = vadd.f32 %v4164, %v4235
        %v4247 = vadd.f32 %v4166, %v4239
        %vm4248 = vcmask 195584
        %v4250 = vsel %vm4248, %v1117, 0
        %v4253 = vsel %vm4248, %v1118, 0
        %v4256 = vsel %vm4248, %v1119, 0
        %v4259 = vsel %vm4248, %v1120, 0
        %4261 = vmatprep.subr.mxu0 0.0
        %4262 = vmatpush1.msra.mxu0 0.0
        %4263 = vmatprep.subr.mxu0 0.0
        %4264 = vmatpush1.msra.mxu0 0.0
        %4265 = vmatprep.subr.mxu0 0.0
        %4266 = vmatpush1.msra.mxu0 0.0
        %4267 = vmatprep.subr.mxu0 0.0
        %4268 = vmatpush1.msra.mxu0 0.0
        %4269 = vmatprep.subr.mxu0 0.0
        %4270 = vmatpush1.msra.mxu0 0.0
        %4271 = vmatprep.subr.mxu0 0.0
        %4272 = vmatpush1.msra.mxu0 0.0
        %4273 = vmatprep.subr.mxu0 0.0
        %4274 = vmatpush1.msra.mxu0 0.0
        %4275 = vmatprep.subr.mxu0 0.0
        %4276 = vmatpush1.msra.mxu0 0.0
        %4277 = vmatprep.subr.mxu0 0.0
        %4278 = vmatpush1.msra.mxu0 0.0
        %4279 = vmatprep.subr.mxu0 0.0
        %4280 = vmatpush1.msra.mxu0 0.0
        %4281 = vmatprep.subr.mxu0 0.0
        %4282 = vmatpush1.msra.mxu0 0.0
        %4283 = vmatprep.subr.mxu0 0.0
        %4284 = vmatpush1.msra.mxu0 0.0
        %4285 = vmatprep.subr.mxu0 0.0
        %4286 = vmatpush1.msra.mxu0 0.0
        %4287 = vmatprep.subr.mxu0 %v1142
        %4288 = vmatpush1.msra.mxu0 %v1141
        %4289 = vmatprep.subr.mxu0 %v1134
        %4290 = vmatpush1.msra.mxu0 %v1133
        %4291 = vmatprep.subr.mxu0 %v1126
        %4292 = vmatpush1.msra.mxu0 %v1125
        %4293 = vmatprep.subr.mxu0 0.0
        %4294 = vmatpush2.msra.mxu0 0.0
        %4295 = vmatprep.subr.mxu0 0.0
        %4296 = vmatpush2.msra.mxu0 0.0
        %4297 = vmatprep.subr.mxu0 0.0
        %4298 = vmatpush2.msra.mxu0 0.0
        %4299 = vmatprep.subr.mxu0 0.0
        %4300 = vmatpush2.msra.mxu0 0.0
        %4301 = vmatprep.subr.mxu0 0.0
        %4302 = vmatpush2.msra.mxu0 0.0
        %4303 = vmatprep.subr.mxu0 0.0
        %4304 = vmatpush2.msra.mxu0 0.0
        %4305 = vmatprep.subr.mxu0 0.0
        %4306 = vmatpush2.msra.mxu0 0.0
        %4307 = vmatprep.subr.mxu0 0.0
        %4308 = vmatpush2.msra.mxu0 0.0
        %4309 = vmatprep.subr.mxu0 0.0
        %4310 = vmatpush2.msra.mxu0 0.0
        %4311 = vmatprep.subr.mxu0 0.0
        %4312 = vmatpush2.msra.mxu0 0.0
        %4313 = vmatprep.subr.mxu0 0.0
        %4314 = vmatpush2.msra.mxu0 0.0
        %4315 = vmatprep.subr.mxu0 0.0
        %4316 = vmatpush2.msra.mxu0 0.0
        %4317 = vmatprep.subr.mxu0 0.0
        %4318 = vmatpush2.msra.mxu0 0.0
        %4319 = vmatprep.subr.mxu0 0.0
        %4320 = vmatpush2.msra.mxu0 0.0
        %4321 = vmatprep.subr.mxu0 0.0
        %4322 = vmatpush2.msra.mxu0 0.0
        %4323 = vmatprep.subr.mxu0 0.0
        %4324 = vmatpush2.msra.mxu0 0.0
        %4325 = vmatprep.mubr.f32.mxu0 0.0
        %4326 = vmatmul.mubr.f32.gmra.mxu0 %v4250
        %v4327 = vpop.f32.mrf.mxu0
        %v4328 = vadd.f32 0.0, %v4327
        %v4329 = vpop.f32.mrf.mxu0
        %v4330 = vadd.f32 0.0, %v4329
        %4331 = vmatprep.mubr.f32.mxu0 0.0
        %4332 = vmatmul.mubr.f32.gmra.mxu0 %v4253
        %v4333 = vpop.f32.mrf.mxu0
        %v4334 = vadd.f32 0.0, %v4333
        %v4335 = vpop.f32.mrf.mxu0
        %v4336 = vadd.f32 0.0, %v4335
        %4337 = vmatprep.mubr.f32.mxu0 0.0
        %4338 = vmatmul.mubr.f32.gmra.mxu0 %v4256
        %v4339 = vpop.f32.mrf.mxu0
        %v4340 = vadd.f32 0.0, %v4339
        %v4341 = vpop.f32.mrf.mxu0
        %v4342 = vadd.f32 0.0, %v4341
        %4343 = vmatprep.mubr.f32.mxu0 0.0
        %4344 = vmatmul.mubr.f32.gmra.mxu0 %v4259
        %v4345 = vpop.f32.mrf.mxu0
        %v4346 = vadd.f32 0.0, %v4345
        %v4347 = vpop.f32.mrf.mxu0
        %v4348 = vadd.f32 0.0, %v4347
        %4349 = vdwg.mxu0
        %4350 = vmatprep.subr.mxu0 0.0
        %4351 = vmatpush1.msra.mxu0 0.0
        %4352 = vmatprep.subr.mxu0 0.0
        %4353 = vmatpush1.msra.mxu0 0.0
        %4354 = vmatprep.subr.mxu0 0.0
        %4355 = vmatpush1.msra.mxu0 0.0
        %4356 = vmatprep.subr.mxu0 0.0
        %4357 = vmatpush1.msra.mxu0 0.0
        %4358 = vmatprep.subr.mxu0 0.0
        %4359 = vmatpush1.msra.mxu0 0.0
        %4360 = vmatprep.subr.mxu0 0.0
        %4361 = vmatpush1.msra.mxu0 0.0
        %4362 = vmatprep.subr.mxu0 0.0
        %4363 = vmatpush1.msra.mxu0 0.0
        %4364 = vmatprep.subr.mxu0 0.0
        %4365 = vmatpush1.msra.mxu0 0.0
        %4366 = vmatprep.subr.mxu0 0.0
        %4367 = vmatpush1.msra.mxu0 0.0
        %4368 = vmatprep.subr.mxu0 0.0
        %4369 = vmatpush1.msra.mxu0 0.0
        %4370 = vmatprep.subr.mxu0 0.0
        %4371 = vmatpush1.msra.mxu0 0.0
        %4372 = vmatprep.subr.mxu0 0.0
        %4373 = vmatpush1.msra.mxu0 0.0
        %4374 = vmatprep.subr.mxu0 0.0
        %4375 = vmatpush1.msra.mxu0 0.0
        %4376 = vmatprep.subr.mxu0 %v1144
        %4377 = vmatpush1.msra.mxu0 %v1143
        %4378 = vmatprep.subr.mxu0 %v1136
        %4379 = vmatpush1.msra.mxu0 %v1135
        %4380 = vmatprep.subr.mxu0 %v1128
        %4381 = vmatpush1.msra.mxu0 %v1127
        %4382 = vmatprep.subr.mxu0 0.0
        %4383 = vmatpush2.msra.mxu0 0.0
        %4384 = vmatprep.subr.mxu0 0.0
        %4385 = vmatpush2.msra.mxu0 0.0
        %4386 = vmatprep.subr.mxu0 0.0
        %4387 = vmatpush2.msra.mxu0 0.0
        %4388 = vmatprep.subr.mxu0 0.0
        %4389 = vmatpush2.msra.mxu0 0.0
        %4390 = vmatprep.subr.mxu0 0.0
        %4391 = vmatpush2.msra.mxu0 0.0
        %4392 = vmatprep.subr.mxu0 0.0
        %4393 = vmatpush2.msra.mxu0 0.0
        %4394 = vmatprep.subr.mxu0 0.0
        %4395 = vmatpush2.msra.mxu0 0.0
        %4396 = vmatprep.subr.mxu0 0.0
        %4397 = vmatpush2.msra.mxu0 0.0
        %4398 = vmatprep.subr.mxu0 0.0
        %4399 = vmatpush2.msra.mxu0 0.0
        %4400 = vmatprep.subr.mxu0 0.0
        %4401 = vmatpush2.msra.mxu0 0.0
        %4402 = vmatprep.subr.mxu0 0.0
        %4403 = vmatpush2.msra.mxu0 0.0
        %4404 = vmatprep.subr.mxu0 0.0
        %4405 = vmatpush2.msra.mxu0 0.0
        %4406 = vmatprep.subr.mxu0 0.0
        %4407 = vmatpush2.msra.mxu0 0.0
        %4408 = vmatprep.subr.mxu0 0.0
        %4409 = vmatpush2.msra.mxu0 0.0
        %4410 = vmatprep.subr.mxu0 0.0
        %4411 = vmatpush2.msra.mxu0 0.0
        %4412 = vmatprep.subr.mxu0 0.0
        %4413 = vmatpush2.msra.mxu0 0.0
        %4414 = vmatprep.mubr.f32.mxu0 0.0
        %4415 = vmatmul.mubr.f32.gmra.mxu0 %v4250
        %v4416 = vpop.f32.mrf.mxu0
        %v4417 = vadd.f32 0.0, %v4416
        %v4418 = vpop.f32.mrf.mxu0
        %v4419 = vadd.f32 0.0, %v4418
        %4420 = vmatprep.mubr.f32.mxu0 0.0
        %4421 = vmatmul.mubr.f32.gmra.mxu0 %v4253
        %v4422 = vpop.f32.mrf.mxu0
        %v4423 = vadd.f32 0.0, %v4422
        %v4424 = vpop.f32.mrf.mxu0
        %v4425 = vadd.f32 0.0, %v4424
        %4426 = vmatprep.mubr.f32.mxu0 0.0
        %4427 = vmatmul.mubr.f32.gmra.mxu0 %v4256
        %v4428 = vpop.f32.mrf.mxu0
        %v4429 = vadd.f32 0.0, %v4428
        %v4430 = vpop.f32.mrf.mxu0
        %v4431 = vadd.f32 0.0, %v4430
        %4432 = vmatprep.mubr.f32.mxu0 0.0
        %4433 = vmatmul.mubr.f32.gmra.mxu0 %v4259
        %v4434 = vpop.f32.mrf.mxu0
        %v4435 = vadd.f32 0.0, %v4434
        %v4436 = vpop.f32.mrf.mxu0
        %v4437 = vadd.f32 0.0, %v4436
        %4438 = vdwg.mxu0
        %4439 = vmatprep.subr.mxu0 0.0
        %4440 = vmatpush1.msra.mxu0 0.0
        %4441 = vmatprep.subr.mxu0 0.0
        %4442 = vmatpush1.msra.mxu0 0.0
        %4443 = vmatprep.subr.mxu0 0.0
        %4444 = vmatpush1.msra.mxu0 0.0
        %4445 = vmatprep.subr.mxu0 0.0
        %4446 = vmatpush1.msra.mxu0 0.0
        %4447 = vmatprep.subr.mxu0 0.0
        %4448 = vmatpush1.msra.mxu0 0.0
        %4449 = vmatprep.subr.mxu0 0.0
        %4450 = vmatpush1.msra.mxu0 0.0
        %4451 = vmatprep.subr.mxu0 0.0
        %4452 = vmatpush1.msra.mxu0 0.0
        %4453 = vmatprep.subr.mxu0 0.0
        %4454 = vmatpush1.msra.mxu0 0.0
        %4455 = vmatprep.subr.mxu0 0.0
        %4456 = vmatpush1.msra.mxu0 0.0
        %4457 = vmatprep.subr.mxu0 0.0
        %4458 = vmatpush1.msra.mxu0 0.0
        %4459 = vmatprep.subr.mxu0 0.0
        %4460 = vmatpush1.msra.mxu0 0.0
        %4461 = vmatprep.subr.mxu0 0.0
        %4462 = vmatpush1.msra.mxu0 0.0
        %4463 = vmatprep.subr.mxu0 0.0
        %4464 = vmatpush1.msra.mxu0 0.0
        %4465 = vmatprep.subr.mxu0 %v1146
        %4466 = vmatpush1.msra.mxu0 %v1145
        %4467 = vmatprep.subr.mxu0 %v1138
        %4468 = vmatpush1.msra.mxu0 %v1137
        %4469 = vmatprep.subr.mxu0 %v1130
        %4470 = vmatpush1.msra.mxu0 %v1129
        %4471 = vmatprep.subr.mxu0 0.0
        %4472 = vmatpush2.msra.mxu0 0.0
        %4473 = vmatprep.subr.mxu0 0.0
        %4474 = vmatpush2.msra.mxu0 0.0
        %4475 = vmatprep.subr.mxu0 0.0
        %4476 = vmatpush2.msra.mxu0 0.0
        %4477 = vmatprep.subr.mxu0 0.0
        %4478 = vmatpush2.msra.mxu0 0.0
        %4479 = vmatprep.subr.mxu0 0.0
        %4480 = vmatpush2.msra.mxu0 0.0
        %4481 = vmatprep.subr.mxu0 0.0
        %4482 = vmatpush2.msra.mxu0 0.0
        %4483 = vmatprep.subr.mxu0 0.0
        %4484 = vmatpush2.msra.mxu0 0.0
        %4485 = vmatprep.subr.mxu0 0.0
        %4486 = vmatpush2.msra.mxu0 0.0
        %4487 = vmatprep.subr.mxu0 0.0
        %4488 = vmatpush2.msra.mxu0 0.0
        %4489 = vmatprep.subr.mxu0 0.0
        %4490 = vmatpush2.msra.mxu0 0.0
        %4491 = vmatprep.subr.mxu0 0.0
        %4492 = vmatpush2.msra.mxu0 0.0
        %4493 = vmatprep.subr.mxu0 0.0
        %4494 = vmatpush2.msra.mxu0 0.0
        %4495 = vmatprep.subr.mxu0 0.0
        %4496 = vmatpush2.msra.mxu0 0.0
        %4497 = vmatprep.subr.mxu0 0.0
        %4498 = vmatpush2.msra.mxu0 0.0
        %4499 = vmatprep.subr.mxu0 0.0
        %4500 = vmatpush2.msra.mxu0 0.0
        %4501 = vmatprep.subr.mxu0 0.0
        %4502 = vmatpush2.msra.mxu0 0.0
        %4503 = vmatprep.mubr.f32.mxu0 0.0
        %4504 = vmatmul.mubr.f32.gmra.mxu0 %v4250
        %v4505 = vpop.f32.mrf.mxu0
        %v4506 = vadd.f32 0.0, %v4505
        %v4507 = vpop.f32.mrf.mxu0
        %v4508 = vadd.f32 0.0, %v4507
        %4509 = vmatprep.mubr.f32.mxu0 0.0
        %4510 = vmatmul.mubr.f32.gmra.mxu0 %v4253
        %v4511 = vpop.f32.mrf.mxu0
        %v4512 = vadd.f32 0.0, %v4511
        %v4513 = vpop.f32.mrf.mxu0
        %v4514 = vadd.f32 0.0, %v4513
        %4515 = vmatprep.mubr.f32.mxu0 0.0
        %4516 = vmatmul.mubr.f32.gmra.mxu0 %v4256
        %v4517 = vpop.f32.mrf.mxu0
        %v4518 = vadd.f32 0.0, %v4517
        %v4519 = vpop.f32.mrf.mxu0
        %v4520 = vadd.f32 0.0, %v4519
        %4521 = vmatprep.mubr.f32.mxu0 0.0
        %4522 = vmatmul.mubr.f32.gmra.mxu0 %v4259
        %v4523 = vpop.f32.mrf.mxu0
        %v4524 = vadd.f32 0.0, %v4523
        %v4525 = vpop.f32.mrf.mxu0
        %v4526 = vadd.f32 0.0, %v4525
        %4527 = vdwg.mxu0
        %4528 = vmatprep.subr.mxu0 0.0
        %4529 = vmatpush1.msra.mxu0 0.0
        %4530 = vmatprep.subr.mxu0 0.0
        %4531 = vmatpush1.msra.mxu0 0.0
        %4532 = vmatprep.subr.mxu0 0.0
        %4533 = vmatpush1.msra.mxu0 0.0
        %4534 = vmatprep.subr.mxu0 0.0
        %4535 = vmatpush1.msra.mxu0 0.0
        %4536 = vmatprep.subr.mxu0 0.0
        %4537 = vmatpush1.msra.mxu0 0.0
        %4538 = vmatprep.subr.mxu0 0.0
        %4539 = vmatpush1.msra.mxu0 0.0
        %4540 = vmatprep.subr.mxu0 0.0
        %4541 = vmatpush1.msra.mxu0 0.0
        %4542 = vmatprep.subr.mxu0 0.0
        %4543 = vmatpush1.msra.mxu0 0.0
        %4544 = vmatprep.subr.mxu0 0.0
        %4545 = vmatpush1.msra.mxu0 0.0
        %4546 = vmatprep.subr.mxu0 0.0
        %4547 = vmatpush1.msra.mxu0 0.0
        %4548 = vmatprep.subr.mxu0 0.0
        %4549 = vmatpush1.msra.mxu0 0.0
        %4550 = vmatprep.subr.mxu0 0.0
        %4551 = vmatpush1.msra.mxu0 0.0
        %4552 = vmatprep.subr.mxu0 0.0
        %4553 = vmatpush1.msra.mxu0 0.0
        %4554 = vmatprep.subr.mxu0 %v1148
        %4555 = vmatpush1.msra.mxu0 %v1147
        %4556 = vmatprep.subr.mxu0 %v1140
        %4557 = vmatpush1.msra.mxu0 %v1139
        %4558 = vmatprep.subr.mxu0 %v1132
        %4559 = vmatpush1.msra.mxu0 %v1131
        %4560 = vmatprep.subr.mxu0 0.0
        %4561 = vmatpush2.msra.mxu0 0.0
        %4562 = vmatprep.subr.mxu0 0.0
        %4563 = vmatpush2.msra.mxu0 0.0
        %4564 = vmatprep.subr.mxu0 0.0
        %4565 = vmatpush2.msra.mxu0 0.0
        %4566 = vmatprep.subr.mxu0 0.0
        %4567 = vmatpush2.msra.mxu0 0.0
        %4568 = vmatprep.subr.mxu0 0.0
        %4569 = vmatpush2.msra.mxu0 0.0
        %4570 = vmatprep.subr.mxu0 0.0
        %4571 = vmatpush2.msra.mxu0 0.0
        %4572 = vmatprep.subr.mxu0 0.0
        %4573 = vmatpush2.msra.mxu0 0.0
        %4574 = vmatprep.subr.mxu0 0.0
        %4575 = vmatpush2.msra.mxu0 0.0
        %4576 = vmatprep.subr.mxu0 0.0
        %4577 = vmatpush2.msra.mxu0 0.0
        %4578 = vmatprep.subr.mxu0 0.0
        %4579 = vmatpush2.msra.mxu0 0.0
        %4580 = vmatprep.subr.mxu0 0.0
        %4581 = vmatpush2.msra.mxu0 0.0
        %4582 = vmatprep.subr.mxu0 0.0
        %4583 = vmatpush2.msra.mxu0 0.0
        %4584 = vmatprep.subr.mxu0 0.0
        %4585 = vmatpush2.msra.mxu0 0.0
        %4586 = vmatprep.subr.mxu0 0.0
        %4587 = vmatpush2.msra.mxu0 0.0
        %4588 = vmatprep.subr.mxu0 0.0
        %4589 = vmatpush2.msra.mxu0 0.0
        %4590 = vmatprep.subr.mxu0 0.0
        %4591 = vmatpush2.msra.mxu0 0.0
        %4592 = vmatprep.mubr.f32.mxu0 0.0
        %4593 = vmatmul.mubr.f32.gmra.mxu0 %v4250
        %v4594 = vpop.f32.mrf.mxu0
        %v4595 = vadd.f32 0.0, %v4594
        %v4596 = vpop.f32.mrf.mxu0
        %v4597 = vadd.f32 0.0, %v4596
        %4598 = vmatprep.mubr.f32.mxu0 0.0
        %4599 = vmatmul.mubr.f32.gmra.mxu0 %v4253
        %v4600 = vpop.f32.mrf.mxu0
        %v4601 = vadd.f32 0.0, %v4600
        %v4602 = vpop.f32.mrf.mxu0
        %v4603 = vadd.f32 0.0, %v4602
        %4604 = vmatprep.mubr.f32.mxu0 0.0
        %4605 = vmatmul.mubr.f32.gmra.mxu0 %v4256
        %v4606 = vpop.f32.mrf.mxu0
        %v4607 = vadd.f32 0.0, %v4606
        %v4608 = vpop.f32.mrf.mxu0
        %v4609 = vadd.f32 0.0, %v4608
        %4610 = vmatprep.mubr.f32.mxu0 0.0
        %4611 = vmatmul.mubr.f32.gmra.mxu0 %v4259
        %v4612 = vpop.f32.mrf.mxu0
        %v4613 = vadd.f32 0.0, %v4612
        %v4614 = vpop.f32.mrf.mxu0
        %v4615 = vadd.f32 0.0, %v4614
        %4616 = vdwg.mxu0
        %v4649 = vcombine.low %v4328, %v4330
        %v4650 = vcombine.high %v4328, %v4330
        %v4651 = vcombine.low %v4417, %v4419
        %v4652 = vcombine.high %v4417, %v4419
        %v4653 = vcombine.low %v4506, %v4508
        %v4654 = vcombine.high %v4506, %v4508
        %v4655 = vcombine.low %v4595, %v4597
        %v4656 = vcombine.high %v4595, %v4597
        %v4657 = vcombine.low %v4334, %v4336
        %v4658 = vcombine.low %v4423, %v4425
        %v4659 = vcombine.low %v4512, %v4514
        %v4660 = vcombine.low %v4601, %v4603
        %v4661 = vcombine.low %v4340, %v4342
        %v4662 = vcombine.high %v4340, %v4342
        %v4663 = vcombine.low %v4429, %v4431
        %v4664 = vcombine.high %v4429, %v4431
        %v4665 = vcombine.low %v4518, %v4520
        %v4666 = vcombine.high %v4518, %v4520
        %v4667 = vcombine.low %v4607, %v4609
        %v4668 = vcombine.high %v4607, %v4609
        %v4669 = vcombine.low %v4346, %v4348
        %v4670 = vcombine.low %v4435, %v4437
        %v4671 = vcombine.low %v4524, %v4526
        %v4672 = vcombine.low %v4613, %v4615
        %v4705 = vcombine.low %v2188, %v2189
        %v4706 = vcombine.low %v2190, %v2191
        %v4707 = vcombine.low %v2192, %v2193
        %v4708 = vcombine.low %v2194, %v2195
        %v4710 = vunpack.c.l.s4 1966171168
        %v4711 = vunpack.c.0.s8 %v4710
        %v4712 = vlaneseq
        %v4713 = vshrl.u32 %v4712, 7
        %v4714 = vsub.s32 %v4711, %v4713
        %v4715 = vrot.slane %v4705, %v4714
        %v4717 = vunpack.c.l.s4 1966171168
        %v4718 = vunpack.c.0.s8 %v4717
        %v4719 = vlaneseq
        %v4720 = vshrl.u32 %v4719, 7
        %v4721 = vsub.s32 %v4718, %v4720
        %v4722 = vrot.slane %v4706, %v4721
        %v4724 = vunpack.c.l.s4 1966171168
        %v4725 = vunpack.c.0.s8 %v4724
        %v4726 = vlaneseq
        %v4727 = vshrl.u32 %v4726, 7
        %v4728 = vsub.s32 %v4725, %v4727
        %v4729 = vrot.slane %v4707, %v4728
        %v4731 = vunpack.c.l.s4 1966171168
        %v4732 = vunpack.c.0.s8 %v4731
        %v4733 = vlaneseq
        %v4734 = vshrl.u32 %v4733, 7
        %v4735 = vsub.s32 %v4732, %v4734
        %v4736 = vrot.slane %v4708, %v4735
        %v4737 = vcombine.low %v4715, %v4722
        %v4738 = vcombine.high %v4715, %v4722
        %v4739 = vcombine.low %v4729, %v4736
        %v4740 = vcombine.high %v4729, %v4736
        %v4742 = vunpack.c.l.s4 1966171168
        %v4743 = vunpack.c.0.s8 %v4742
        %v4744 = vlaneseq
        %v4745 = vshrl.u32 %v4744, 7
        %v4746 = vsub.s32 %v4743, %v4745
        %v4747 = vrot.slane %v4737, %v4746
        %v4749 = vunpack.c.l.s4 1966171168
        %v4750 = vunpack.c.0.s8 %v4749
        %v4751 = vlaneseq
        %v4752 = vshrl.u32 %v4751, 7
        %v4753 = vsub.s32 %v4750, %v4752
        %v4754 = vrot.slane %v4738, %v4753
        %v4756 = vunpack.c.l.s4 1966171168
        %v4757 = vunpack.c.0.s8 %v4756
        %v4758 = vlaneseq
        %v4759 = vshrl.u32 %v4758, 7
        %v4760 = vsub.s32 %v4757, %v4759
        %v4761 = vrot.slane %v4739, %v4760
        %v4763 = vunpack.c.l.s4 1966171168
        %v4764 = vunpack.c.0.s8 %v4763
        %v4765 = vlaneseq
        %v4766 = vshrl.u32 %v4765, 7
        %v4767 = vsub.s32 %v4764, %v4766
        %v4768 = vrot.slane %v4740, %v4767
        %v4769 = vcombine.low %v4747, %v4761
        %v4770 = vcombine.low %v4754, %v4768
        %v4771 = vlaneseq
        %v4772 = vshrl.u32 %v4771, 7
        %v4773 = vsub.s32 0, %v4772
        %v4774 = vrot.slane %v4769, %v4773
        %v4775 = vlaneseq
        %v4776 = vshrl.u32 %v4775, 7
        %v4777 = vsub.s32 1, %v4776
        %v4778 = vrot.slane %v4769, %v4777
        %v4779 = vlaneseq
        %v4780 = vshrl.u32 %v4779, 7
        %v4781 = vsub.s32 2, %v4780
        %v4782 = vrot.slane %v4769, %v4781
        %v4783 = vlaneseq
        %v4784 = vshrl.u32 %v4783, 7
        %v4785 = vsub.s32 3, %v4784
        %v4786 = vrot.slane %v4769, %v4785
        %v4787 = vlaneseq
        %v4788 = vshrl.u32 %v4787, 7
        %v4789 = vsub.s32 4, %v4788
        %v4790 = vrot.slane %v4769, %v4789
        %v4791 = vlaneseq
        %v4792 = vshrl.u32 %v4791, 7
        %v4793 = vsub.s32 5, %v4792
        %v4794 = vrot.slane %v4769, %v4793
        %v4795 = vlaneseq
        %v4796 = vshrl.u32 %v4795, 7
        %v4797 = vsub.s32 6, %v4796
        %v4798 = vrot.slane %v4769, %v4797
        %v4799 = vlaneseq
        %v4800 = vshrl.u32 %v4799, 7
        %v4801 = vsub.s32 7, %v4800
        %v4802 = vrot.slane %v4769, %v4801
        %v4803 = vlaneseq
        %v4804 = vshrl.u32 %v4803, 7
        %v4805 = vsub.s32 0, %v4804
        %v4806 = vrot.slane %v4770, %v4805
        %v4807 = vlaneseq
        %v4808 = vshrl.u32 %v4807, 7
        %v4809 = vsub.s32 1, %v4808
        %v4810 = vrot.slane %v4770, %v4809
        %v4811 = vlaneseq
        %v4812 = vshrl.u32 %v4811, 7
        %v4813 = vsub.s32 2, %v4812
        %v4814 = vrot.slane %v4770, %v4813
        %v4815 = vlaneseq
        %v4816 = vshrl.u32 %v4815, 7
        %v4817 = vsub.s32 3, %v4816
        %v4818 = vrot.slane %v4770, %v4817
        %v4819 = vlaneseq
        %v4820 = vshrl.u32 %v4819, 7
        %v4821 = vsub.s32 4, %v4820
        %v4822 = vrot.slane %v4770, %v4821
        %v4823 = vlaneseq
        %v4824 = vshrl.u32 %v4823, 7
        %v4825 = vsub.s32 5, %v4824
        %v4826 = vrot.slane %v4770, %v4825
        %v4827 = vlaneseq
        %v4828 = vshrl.u32 %v4827, 7
        %v4829 = vsub.s32 6, %v4828
        %v4830 = vrot.slane %v4770, %v4829
        %v4831 = vlaneseq
        %v4832 = vshrl.u32 %v4831, 7
        %v4833 = vsub.s32 7, %v4832
        %v4834 = vrot.slane %v4770, %v4833
        %v4835 = vcombine.low %v4774, %v4778
        %v4836 = vcombine.low %v4782, %v4786
        %v4837 = vcombine.low %v4790, %v4794
        %v4838 = vcombine.low %v4798, %v4802
        %v4839 = vcombine.low %v4806, %v4810
        %v4840 = vcombine.low %v4814, %v4818
        %v4841 = vcombine.low %v4822, %v4826
        %v4842 = vcombine.low %v4830, %v4834
        %v4843 = vrot.slane %v4835, 1
        %v4844 = vrot.slane %v4836, 1
        %v4845 = vrot.slane %v4837, 1
        %v4846 = vrot.slane %v4838, 1
        %v4847 = vrot.slane %v4835, 2
        %v4848 = vrot.slane %v4836, 2
        %v4849 = vrot.slane %v4837, 2
        %v4850 = vrot.slane %v4838, 2
        %v4851 = vrot.slane %v4839, 1
        %v4852 = vrot.slane %v4840, 1
        %v4853 = vrot.slane %v4841, 1
        %v4854 = vrot.slane %v4842, 1
        %v4855 = vrot.slane %v4839, 2
        %v4856 = vrot.slane %v4840, 2
        %v4857 = vrot.slane %v4841, 2
        %v4858 = vrot.slane %v4842, 2
        %v4883 = vmul.f32 %v4649, %v4835
        %v4884 = vmul.f32 %v4651, %v4836
        %v4885 = vmul.f32 %v4653, %v4837
        %v4886 = vmul.f32 %v4655, %v4838
        %v4887 = vmul.f32 %v4650, %v4843
        %v4888 = vmul.f32 %v4652, %v4844
        %v4889 = vmul.f32 %v4654, %v4845
        %v4890 = vmul.f32 %v4656, %v4846
        %v4891 = vmul.f32 %v4657, %v4847
        %v4892 = vmul.f32 %v4658, %v4848
        %v4893 = vmul.f32 %v4659, %v4849
        %v4894 = vmul.f32 %v4660, %v4850
        %v4895 = vmul.f32 %v4661, %v4839
        %v4896 = vmul.f32 %v4663, %v4840
        %v4897 = vmul.f32 %v4665, %v4841
        %v4898 = vmul.f32 %v4667, %v4842
        %v4899 = vmul.f32 %v4662, %v4851
        %v4900 = vmul.f32 %v4664, %v4852
        %v4901 = vmul.f32 %v4666, %v4853
        %v4902 = vmul.f32 %v4668, %v4854
        %v4903 = vmul.f32 %v4669, %v4855
        %v4904 = vmul.f32 %v4670, %v4856
        %v4905 = vmul.f32 %v4671, %v4857
        %v4906 = vmul.f32 %v4672, %v4858
        %v4915 = vcombine.low %v3214, %v3215
        %v4916 = vcombine.low %v3216, %v3217
        %v4917 = vcombine.low %v3218, %v3219
        %v4918 = vcombine.low %v3220, %v3221
        %v4920 = vunpack.c.l.s4 1966171168
        %v4921 = vunpack.c.0.s8 %v4920
        %v4922 = vlaneseq
        %v4923 = vshrl.u32 %v4922, 7
        %v4924 = vsub.s32 %v4921, %v4923
        %v4925 = vrot.slane %v4915, %v4924
        %v4927 = vunpack.c.l.s4 1966171168
        %v4928 = vunpack.c.0.s8 %v4927
        %v4929 = vlaneseq
        %v4930 = vshrl.u32 %v4929, 7
        %v4931 = vsub.s32 %v4928, %v4930
        %v4932 = vrot.slane %v4916, %v4931
        %v4934 = vunpack.c.l.s4 1966171168
        %v4935 = vunpack.c.0.s8 %v4934
        %v4936 = vlaneseq
        %v4937 = vshrl.u32 %v4936, 7
        %v4938 = vsub.s32 %v4935, %v4937
        %v4939 = vrot.slane %v4917, %v4938
        %v4941 = vunpack.c.l.s4 1966171168
        %v4942 = vunpack.c.0.s8 %v4941
        %v4943 = vlaneseq
        %v4944 = vshrl.u32 %v4943, 7
        %v4945 = vsub.s32 %v4942, %v4944
        %v4946 = vrot.slane %v4918, %v4945
        %v4947 = vcombine.low %v4925, %v4932
        %v4948 = vcombine.high %v4925, %v4932
        %v4949 = vcombine.low %v4939, %v4946
        %v4950 = vcombine.high %v4939, %v4946
        %v4952 = vunpack.c.l.s4 1966171168
        %v4953 = vunpack.c.0.s8 %v4952
        %v4954 = vlaneseq
        %v4955 = vshrl.u32 %v4954, 7
        %v4956 = vsub.s32 %v4953, %v4955
        %v4957 = vrot.slane %v4947, %v4956
        %v4959 = vunpack.c.l.s4 1966171168
        %v4960 = vunpack.c.0.s8 %v4959
        %v4961 = vlaneseq
        %v4962 = vshrl.u32 %v4961, 7
        %v4963 = vsub.s32 %v4960, %v4962
        %v4964 = vrot.slane %v4948, %v4963
        %v4966 = vunpack.c.l.s4 1966171168
        %v4967 = vunpack.c.0.s8 %v4966
        %v4968 = vlaneseq
        %v4969 = vshrl.u32 %v4968, 7
        %v4970 = vsub.s32 %v4967, %v4969
        %v4971 = vrot.slane %v4949, %v4970
        %v4973 = vunpack.c.l.s4 1966171168
        %v4974 = vunpack.c.0.s8 %v4973
        %v4975 = vlaneseq
        %v4976 = vshrl.u32 %v4975, 7
        %v4977 = vsub.s32 %v4974, %v4976
        %v4978 = vrot.slane %v4950, %v4977
        %v4979 = vcombine.low %v4957, %v4971
        %v4980 = vcombine.low %v4964, %v4978
        %v4981 = vlaneseq
        %v4982 = vshrl.u32 %v4981, 7
        %v4983 = vsub.s32 0, %v4982
        %v4984 = vrot.slane %v4979, %v4983
        %v4985 = vlaneseq
        %v4986 = vshrl.u32 %v4985, 7
        %v4987 = vsub.s32 1, %v4986
        %v4988 = vrot.slane %v4979, %v4987
        %v4989 = vlaneseq
        %v4990 = vshrl.u32 %v4989, 7
        %v4991 = vsub.s32 2, %v4990
        %v4992 = vrot.slane %v4979, %v4991
        %v4993 = vlaneseq
        %v4994 = vshrl.u32 %v4993, 7
        %v4995 = vsub.s32 3, %v4994
        %v4996 = vrot.slane %v4979, %v4995
        %v4997 = vlaneseq
        %v4998 = vshrl.u32 %v4997, 7
        %v4999 = vsub.s32 4, %v4998
        %v5000 = vrot.slane %v4979, %v4999
        %v5001 = vlaneseq
        %v5002 = vshrl.u32 %v5001, 7
        %v5003 = vsub.s32 5, %v5002
        %v5004 = vrot.slane %v4979, %v5003
        %v5005 = vlaneseq
        %v5006 = vshrl.u32 %v5005, 7
        %v5007 = vsub.s32 6, %v5006
        %v5008 = vrot.slane %v4979, %v5007
        %v5009 = vlaneseq
        %v5010 = vshrl.u32 %v5009, 7
        %v5011 = vsub.s32 7, %v5010
        %v5012 = vrot.slane %v4979, %v5011
        %v5013 = vlaneseq
        %v5014 = vshrl.u32 %v5013, 7
        %v5015 = vsub.s32 0, %v5014
        %v5016 = vrot.slane %v4980, %v5015
        %v5017 = vlaneseq
        %v5018 = vshrl.u32 %v5017, 7
        %v5019 = vsub.s32 1, %v5018
        %v5020 = vrot.slane %v4980, %v5019
        %v5021 = vlaneseq
        %v5022 = vshrl.u32 %v5021, 7
        %v5023 = vsub.s32 2, %v5022
        %v5024 = vrot.slane %v4980, %v5023
        %v5025 = vlaneseq
        %v5026 = vshrl.u32 %v5025, 7
        %v5027 = vsub.s32 3, %v5026
        %v5028 = vrot.slane %v4980, %v5027
        %v5029 = vlaneseq
        %v5030 = vshrl.u32 %v5029, 7
        %v5031 = vsub.s32 4, %v5030
        %v5032 = vrot.slane %v4980, %v5031
        %v5033 = vlaneseq
        %v5034 = vshrl.u32 %v5033, 7
        %v5035 = vsub.s32 5, %v5034
        %v5036 = vrot.slane %v4980, %v5035
        %v5037 = vlaneseq
        %v5038 = vshrl.u32 %v5037, 7
        %v5039 = vsub.s32 6, %v5038
        %v5040 = vrot.slane %v4980, %v5039
        %v5041 = vlaneseq
        %v5042 = vshrl.u32 %v5041, 7
        %v5043 = vsub.s32 7, %v5042
        %v5044 = vrot.slane %v4980, %v5043
        %v5045 = vcombine.low %v4984, %v4988
        %v5046 = vcombine.low %v4992, %v4996
        %v5047 = vcombine.low %v5000, %v5004
        %v5048 = vcombine.low %v5008, %v5012
        %v5049 = vcombine.low %v5016, %v5020
        %v5050 = vcombine.low %v5024, %v5028
        %v5051 = vcombine.low %v5032, %v5036
        %v5052 = vcombine.low %v5040, %v5044
        %v5053 = vrot.slane %v5045, 7
        %v5054 = vrot.slane %v5046, 7
        %v5055 = vrot.slane %v5047, 7
        %v5056 = vrot.slane %v5048, 7
        %v5057 = vrot.slane %v5045, 1
        %v5058 = vrot.slane %v5046, 1
        %v5059 = vrot.slane %v5047, 1
        %v5060 = vrot.slane %v5048, 1
        %v5061 = vrot.slane %v5049, 7
        %v5062 = vrot.slane %v5050, 7
        %v5063 = vrot.slane %v5051, 7
        %v5064 = vrot.slane %v5052, 7
        %v5065 = vrot.slane %v5049, 1
        %v5066 = vrot.slane %v5050, 1
        %v5067 = vrot.slane %v5051, 1
        %v5068 = vrot.slane %v5052, 1
        %v5093 = vmul.f32 %v4649, %v5053
        %v5094 = vmul.f32 %v4651, %v5054
        %v5095 = vmul.f32 %v4653, %v5055
        %v5096 = vmul.f32 %v4655, %v5056
        %v5097 = vmul.f32 %v4650, %v5045
        %v5098 = vmul.f32 %v4652, %v5046
        %v5099 = vmul.f32 %v4654, %v5047
        %v5100 = vmul.f32 %v4656, %v5048
        %v5101 = vmul.f32 %v4657, %v5057
        %v5102 = vmul.f32 %v4658, %v5058
        %v5103 = vmul.f32 %v4659, %v5059
        %v5104 = vmul.f32 %v4660, %v5060
        %v5105 = vmul.f32 %v4661, %v5061
        %v5106 = vmul.f32 %v4663, %v5062
        %v5107 = vmul.f32 %v4665, %v5063
        %v5108 = vmul.f32 %v4667, %v5064
        %v5109 = vmul.f32 %v4662, %v5049
        %v5110 = vmul.f32 %v4664, %v5050
        %v5111 = vmul.f32 %v4666, %v5051
        %v5112 = vmul.f32 %v4668, %v5052
        %v5113 = vmul.f32 %v4669, %v5065
        %v5114 = vmul.f32 %v4670, %v5066
        %v5115 = vmul.f32 %v4671, %v5067
        %v5116 = vmul.f32 %v4672, %v5068
        %v5141 = vrot.slane %v5093, 5
        %v5142 = vrot.slane %v5141, 4
        %v5143 = vrot.slane %v5094, 5
        %v5144 = vrot.slane %v5143, 4
        %v5145 = vrot.slane %v5095, 5
        %v5146 = vrot.slane %v5145, 4
        %v5147 = vrot.slane %v5096, 5
        %v5148 = vrot.slane %v5147, 4
        %v5149 = vrot.slane %v5097, 5
        %v5150 = vrot.slane %v5149, 4
        %v5151 = vrot.slane %v5098, 5
        %v5152 = vrot.slane %v5151, 4
        %v5153 = vrot.slane %v5099, 5
        %v5154 = vrot.slane %v5153, 4
        %v5155 = vrot.slane %v5100, 5
        %v5156 = vrot.slane %v5155, 4
        %v5157 = vrot.slane %v5101, 5
        %v5158 = vrot.slane %v5157, 4
        %v5159 = vrot.slane %v5102, 5
        %v5160 = vrot.slane %v5159, 4
        %v5161 = vrot.slane %v5103, 5
        %v5162 = vrot.slane %v5161, 4
        %v5163 = vrot.slane %v5104, 5
        %v5164 = vrot.slane %v5163, 4
        %v5165 = vrot.slane %v5105, 5
        %v5166 = vrot.slane %v5165, 4
        %v5167 = vrot.slane %v5106, 5
        %v5168 = vrot.slane %v5167, 4
        %v5169 = vrot.slane %v5107, 5
        %v5170 = vrot.slane %v5169, 4
        %v5171 = vrot.slane %v5108, 5
        %v5172 = vrot.slane %v5171, 4
        %v5173 = vrot.slane %v5109, 5
        %v5174 = vrot.slane %v5173, 4
        %v5175 = vrot.slane %v5110, 5
        %v5176 = vrot.slane %v5175, 4
        %v5177 = vrot.slane %v5111, 5
        %v5178 = vrot.slane %v5177, 4
        %v5179 = vrot.slane %v5112, 5
        %v5180 = vrot.slane %v5179, 4
        %v5181 = vrot.slane %v5113, 5
        %v5182 = vrot.slane %v5181, 4
        %v5183 = vrot.slane %v5114, 5
        %v5184 = vrot.slane %v5183, 4
        %v5185 = vrot.slane %v5115, 5
        %v5186 = vrot.slane %v5185, 4
        %v5187 = vrot.slane %v5116, 5
        %v5188 = vrot.slane %v5187, 4
        %v5213 = vadd.f32 %v4883, %v5142
        %v5214 = vadd.f32 %v4884, %v5144
        %v5215 = vadd.f32 %v4885, %v5146
        %v5216 = vadd.f32 %v4886, %v5148
        %v5217 = vadd.f32 %v4887, %v5150
        %v5218 = vadd.f32 %v4888, %v5152
        %v5219 = vadd.f32 %v4889, %v5154
        %v5220 = vadd.f32 %v4890, %v5156
        %v5221 = vadd.f32 %v4891, %v5158
        %v5222 = vadd.f32 %v4892, %v5160
        %v5223 = vadd.f32 %v4893, %v5162
        %v5224 = vadd.f32 %v4894, %v5164
        %v5225 = vadd.f32 %v4895, %v5166
        %v5226 = vadd.f32 %v4896, %v5168
        %v5227 = vadd.f32 %v4897, %v5170
        %v5228 = vadd.f32 %v4898, %v5172
        %v5229 = vadd.f32 %v4899, %v5174
        %v5230 = vadd.f32 %v4900, %v5176
        %v5231 = vadd.f32 %v4901, %v5178
        %v5232 = vadd.f32 %v4902, %v5180
        %v5233 = vadd.f32 %v4903, %v5182
        %v5234 = vadd.f32 %v4904, %v5184
        %v5235 = vadd.f32 %v4905, %v5186
        %v5236 = vadd.f32 %v4906, %v5188
        %v5245 = vcombine.low %v4240, %v4241
        %v5246 = vcombine.low %v4242, %v4243
        %v5247 = vcombine.low %v4244, %v4245
        %v5248 = vcombine.low %v4246, %v4247
        %v5250 = vunpack.c.l.s4 1966171168
        %v5251 = vunpack.c.0.s8 %v5250
        %v5252 = vlaneseq
        %v5253 = vshrl.u32 %v5252, 7
        %v5254 = vsub.s32 %v5251, %v5253
        %v5255 = vrot.slane %v5245, %v5254
        %v5257 = vunpack.c.l.s4 1966171168
        %v5258 = vunpack.c.0.s8 %v5257
        %v5259 = vlaneseq
        %v5260 = vshrl.u32 %v5259, 7
        %v5261 = vsub.s32 %v5258, %v5260
        %v5262 = vrot.slane %v5246, %v5261
        %v5264 = vunpack.c.l.s4 1966171168
        %v5265 = vunpack.c.0.s8 %v5264
        %v5266 = vlaneseq
        %v5267 = vshrl.u32 %v5266, 7
        %v5268 = vsub.s32 %v5265, %v5267
        %v5269 = vrot.slane %v5247, %v5268
        %v5271 = vunpack.c.l.s4 1966171168
        %v5272 = vunpack.c.0.s8 %v5271
        %v5273 = vlaneseq
        %v5274 = vshrl.u32 %v5273, 7
        %v5275 = vsub.s32 %v5272, %v5274
        %v5276 = vrot.slane %v5248, %v5275
        %v5277 = vcombine.low %v5255, %v5262
        %v5278 = vcombine.high %v5255, %v5262
        %v5279 = vcombine.low %v5269, %v5276
        %v5280 = vcombine.high %v5269, %v5276
        %v5282 = vunpack.c.l.s4 1966171168
        %v5283 = vunpack.c.0.s8 %v5282
        %v5284 = vlaneseq
        %v5285 = vshrl.u32 %v5284, 7
        %v5286 = vsub.s32 %v5283, %v5285
        %v5287 = vrot.slane %v5277, %v5286
        %v5289 = vunpack.c.l.s4 1966171168
        %v5290 = vunpack.c.0.s8 %v5289
        %v5291 = vlaneseq
        %v5292 = vshrl.u32 %v5291, 7
        %v5293 = vsub.s32 %v5290, %v5292
        %v5294 = vrot.slane %v5278, %v5293
        %v5296 = vunpack.c.l.s4 1966171168
        %v5297 = vunpack.c.0.s8 %v5296
        %v5298 = vlaneseq
        %v5299 = vshrl.u32 %v5298, 7
        %v5300 = vsub.s32 %v5297, %v5299
        %v5301 = vrot.slane %v5279, %v5300
        %v5303 = vunpack.c.l.s4 1966171168
        %v5304 = vunpack.c.0.s8 %v5303
        %v5305 = vlaneseq
        %v5306 = vshrl.u32 %v5305, 7
        %v5307 = vsub.s32 %v5304, %v5306
        %v5308 = vrot.slane %v5280, %v5307
        %v5309 = vcombine.low %v5287, %v5301
        %v5310 = vcombine.low %v5294, %v5308
        %v5311 = vlaneseq
        %v5312 = vshrl.u32 %v5311, 7
        %v5313 = vsub.s32 0, %v5312
        %v5314 = vrot.slane %v5309, %v5313
        %v5315 = vlaneseq
        %v5316 = vshrl.u32 %v5315, 7
        %v5317 = vsub.s32 1, %v5316
        %v5318 = vrot.slane %v5309, %v5317
        %v5319 = vlaneseq
        %v5320 = vshrl.u32 %v5319, 7
        %v5321 = vsub.s32 2, %v5320
        %v5322 = vrot.slane %v5309, %v5321
        %v5323 = vlaneseq
        %v5324 = vshrl.u32 %v5323, 7
        %v5325 = vsub.s32 3, %v5324
        %v5326 = vrot.slane %v5309, %v5325
        %v5327 = vlaneseq
        %v5328 = vshrl.u32 %v5327, 7
        %v5329 = vsub.s32 4, %v5328
        %v5330 = vrot.slane %v5309, %v5329
        %v5331 = vlaneseq
        %v5332 = vshrl.u32 %v5331, 7
        %v5333 = vsub.s32 5, %v5332
        %v5334 = vrot.slane %v5309, %v5333
        %v5335 = vlaneseq
        %v5336 = vshrl.u32 %v5335, 7
        %v5337 = vsub.s32 6, %v5336
        %v5338 = vrot.slane %v5309, %v5337
        %v5339 = vlaneseq
        %v5340 = vshrl.u32 %v5339, 7
        %v5341 = vsub.s32 7, %v5340
        %v5342 = vrot.slane %v5309, %v5341
        %v5343 = vlaneseq
        %v5344 = vshrl.u32 %v5343, 7
        %v5345 = vsub.s32 0, %v5344
        %v5346 = vrot.slane %v5310, %v5345
        %v5347 = vlaneseq
        %v5348 = vshrl.u32 %v5347, 7
        %v5349 = vsub.s32 1, %v5348
        %v5350 = vrot.slane %v5310, %v5349
        %v5351 = vlaneseq
        %v5352 = vshrl.u32 %v5351, 7
        %v5353 = vsub.s32 2, %v5352
        %v5354 = vrot.slane %v5310, %v5353
        %v5355 = vlaneseq
        %v5356 = vshrl.u32 %v5355, 7
        %v5357 = vsub.s32 3, %v5356
        %v5358 = vrot.slane %v5310, %v5357
        %v5359 = vlaneseq
        %v5360 = vshrl.u32 %v5359, 7
        %v5361 = vsub.s32 4, %v5360
        %v5362 = vrot.slane %v5310, %v5361
        %v5363 = vlaneseq
        %v5364 = vshrl.u32 %v5363, 7
        %v5365 = vsub.s32 5, %v5364
        %v5366 = vrot.slane %v5310, %v5365
        %v5367 = vlaneseq
        %v5368 = vshrl.u32 %v5367, 7
        %v5369 = vsub.s32 6, %v5368
        %v5370 = vrot.slane %v5310, %v5369
        %v5371 = vlaneseq
        %v5372 = vshrl.u32 %v5371, 7
        %v5373 = vsub.s32 7, %v5372
        %v5374 = vrot.slane %v5310, %v5373
        %v5375 = vcombine.low %v5314, %v5318
        %v5376 = vcombine.low %v5322, %v5326
        %v5377 = vcombine.low %v5330, %v5334
        %v5378 = vcombine.low %v5338, %v5342
        %v5379 = vcombine.low %v5346, %v5350
        %v5380 = vcombine.low %v5354, %v5358
        %v5381 = vcombine.low %v5362, %v5366
        %v5382 = vcombine.low %v5370, %v5374
        %v5383 = vrot.slane %v5375, 6
        %v5384 = vrot.slane %v5376, 6
        %v5385 = vrot.slane %v5377, 6
        %v5386 = vrot.slane %v5378, 6
        %v5387 = vrot.slane %v5375, 7
        %v5388 = vrot.slane %v5376, 7
        %v5389 = vrot.slane %v5377, 7
        %v5390 = vrot.slane %v5378, 7
        %v5391 = vrot.slane %v5379, 6
        %v5392 = vrot.slane %v5380, 6
        %v5393 = vrot.slane %v5381, 6
        %v5394 = vrot.slane %v5382, 6
        %v5395 = vrot.slane %v5379, 7
        %v5396 = vrot.slane %v5380, 7
        %v5397 = vrot.slane %v5381, 7
        %v5398 = vrot.slane %v5382, 7
        %v5423 = vmul.f32 %v4649, %v5383
        %v5424 = vmul.f32 %v4651, %v5384
        %v5425 = vmul.f32 %v4653, %v5385
        %v5426 = vmul.f32 %v4655, %v5386
        %v5427 = vmul.f32 %v4650, %v5387
        %v5428 = vmul.f32 %v4652, %v5388
        %v5429 = vmul.f32 %v4654, %v5389
        %v5430 = vmul.f32 %v4656, %v5390
        %v5431 = vmul.f32 %v4657, %v5375
        %v5432 = vmul.f32 %v4658, %v5376
        %v5433 = vmul.f32 %v4659, %v5377
        %v5434 = vmul.f32 %v4660, %v5378
        %v5435 = vmul.f32 %v4661, %v5391
        %v5436 = vmul.f32 %v4663, %v5392
        %v5437 = vmul.f32 %v4665, %v5393
        %v5438 = vmul.f32 %v4667, %v5394
        %v5439 = vmul.f32 %v4662, %v5395
        %v5440 = vmul.f32 %v4664, %v5396
        %v5441 = vmul.f32 %v4666, %v5397
        %v5442 = vmul.f32 %v4668, %v5398
        %v5443 = vmul.f32 %v4669, %v5379
        %v5444 = vmul.f32 %v4670, %v5380
        %v5445 = vmul.f32 %v4671, %v5381
        %v5446 = vmul.f32 %v4672, %v5382
        %v5471 = vrot.slane %v5423, 6
        %v5472 = vrot.slane %v5471, 4
        %v5473 = vrot.slane %v5424, 6
        %v5474 = vrot.slane %v5473, 4
        %v5475 = vrot.slane %v5425, 6
        %v5476 = vrot.slane %v5475, 4
        %v5477 = vrot.slane %v5426, 6
        %v5478 = vrot.slane %v5477, 4
        %v5479 = vrot.slane %v5427, 6
        %v5480 = vrot.slane %v5479, 4
        %v5481 = vrot.slane %v5428, 6
        %v5482 = vrot.slane %v5481, 4
        %v5483 = vrot.slane %v5429, 6
        %v5484 = vrot.slane %v5483, 4
        %v5485 = vrot.slane %v5430, 6
        %v5486 = vrot.slane %v5485, 4
        %v5487 = vrot.slane %v5431, 6
        %v5488 = vrot.slane %v5487, 4
        %v5489 = vrot.slane %v5432, 6
        %v5490 = vrot.slane %v5489, 4
        %v5491 = vrot.slane %v5433, 6
        %v5492 = vrot.slane %v5491, 4
        %v5493 = vrot.slane %v5434, 6
        %v5494 = vrot.slane %v5493, 4
        %v5495 = vrot.slane %v5435, 6
        %v5496 = vrot.slane %v5495, 4
        %v5497 = vrot.slane %v5436, 6
        %v5498 = vrot.slane %v5497, 4
        %v5499 = vrot.slane %v5437, 6
        %v5500 = vrot.slane %v5499, 4
        %v5501 = vrot.slane %v5438, 6
        %v5502 = vrot.slane %v5501, 4
        %v5503 = vrot.slane %v5439, 6
        %v5504 = vrot.slane %v5503, 4
        %v5505 = vrot.slane %v5440, 6
        %v5506 = vrot.slane %v5505, 4
        %v5507 = vrot.slane %v5441, 6
        %v5508 = vrot.slane %v5507, 4
        %v5509 = vrot.slane %v5442, 6
        %v5510 = vrot.slane %v5509, 4
        %v5511 = vrot.slane %v5443, 6
        %v5512 = vrot.slane %v5511, 4
        %v5513 = vrot.slane %v5444, 6
        %v5514 = vrot.slane %v5513, 4
        %v5515 = vrot.slane %v5445, 6
        %v5516 = vrot.slane %v5515, 4
        %v5517 = vrot.slane %v5446, 6
        %v5518 = vrot.slane %v5517, 4
        %v5543 = vadd.f32 %v5213, %v5472
        %v5544 = vadd.f32 %v5214, %v5474
        %v5545 = vadd.f32 %v5215, %v5476
        %v5546 = vadd.f32 %v5216, %v5478
        %v5547 = vadd.f32 %v5217, %v5480
        %v5548 = vadd.f32 %v5218, %v5482
        %v5549 = vadd.f32 %v5219, %v5484
        %v5550 = vadd.f32 %v5220, %v5486
        %v5551 = vadd.f32 %v5221, %v5488
        %v5552 = vadd.f32 %v5222, %v5490
        %v5553 = vadd.f32 %v5223, %v5492
        %v5554 = vadd.f32 %v5224, %v5494
        %v5555 = vadd.f32 %v5225, %v5496
        %v5556 = vadd.f32 %v5226, %v5498
        %v5557 = vadd.f32 %v5227, %v5500
        %v5558 = vadd.f32 %v5228, %v5502
        %v5559 = vadd.f32 %v5229, %v5504
        %v5560 = vadd.f32 %v5230, %v5506
        %v5561 = vadd.f32 %v5231, %v5508
        %v5562 = vadd.f32 %v5232, %v5510
        %v5563 = vadd.f32 %v5233, %v5512
        %v5564 = vadd.f32 %v5234, %v5514
        %v5565 = vadd.f32 %v5235, %v5516
        %v5566 = vadd.f32 %v5236, %v5518
        %v5567 = vrot.slane %v4649, 7
        %v5568 = vrot.slane %v5567, 4
        %v5569 = vrot.slane %v4651, 7
        %v5570 = vrot.slane %v5569, 4
        %v5571 = vrot.slane %v4653, 7
        %v5572 = vrot.slane %v5571, 4
        %v5573 = vrot.slane %v4655, 7
        %v5574 = vrot.slane %v5573, 4
        %v5575 = vrot.slane %v4650, 7
        %v5576 = vrot.slane %v5575, 4
        %v5577 = vrot.slane %v4652, 7
        %v5578 = vrot.slane %v5577, 4
        %v5579 = vrot.slane %v4654, 7
        %v5580 = vrot.slane %v5579, 4
        %v5581 = vrot.slane %v4656, 7
        %v5582 = vrot.slane %v5581, 4
        %v5583 = vrot.slane %v4657, 7
        %v5584 = vrot.slane %v5583, 4
        %v5585 = vrot.slane %v4658, 7
        %v5586 = vrot.slane %v5585, 4
        %v5587 = vrot.slane %v4659, 7
        %v5588 = vrot.slane %v5587, 4
        %v5589 = vrot.slane %v4660, 7
        %v5590 = vrot.slane %v5589, 4
        %v5591 = vrot.slane %v4661, 7
        %v5592 = vrot.slane %v5591, 4
        %v5593 = vrot.slane %v4663, 7
        %v5594 = vrot.slane %v5593, 4
        %v5595 = vrot.slane %v4665, 7
        %v5596 = vrot.slane %v5595, 4
        %v5597 = vrot.slane %v4667, 7
        %v5598 = vrot.slane %v5597, 4
        %v5599 = vrot.slane %v4662, 7
        %v5600 = vrot.slane %v5599, 4
        %v5601 = vrot.slane %v4664, 7
        %v5602 = vrot.slane %v5601, 4
        %v5603 = vrot.slane %v4666, 7
        %v5604 = vrot.slane %v5603, 4
        %v5605 = vrot.slane %v4668, 7
        %v5606 = vrot.slane %v5605, 4
        %v5607 = vrot.slane %v4669, 7
        %v5608 = vrot.slane %v5607, 4
        %v5609 = vrot.slane %v4670, 7
        %v5610 = vrot.slane %v5609, 4
        %v5611 = vrot.slane %v4671, 7
        %v5612 = vrot.slane %v5611, 4
        %v5613 = vrot.slane %v4672, 7
        %v5614 = vrot.slane %v5613, 4
        %v5639 = vadd.f32 %v5543, %v5568
        %v5640 = vadd.f32 %v5544, %v5570
        %v5641 = vadd.f32 %v5545, %v5572
        %v5642 = vadd.f32 %v5546, %v5574
        %v5643 = vadd.f32 %v5547, %v5576
        %v5644 = vadd.f32 %v5548, %v5578
        %v5645 = vadd.f32 %v5549, %v5580
        %v5646 = vadd.f32 %v5550, %v5582
        %v5647 = vadd.f32 %v5551, %v5584
        %v5648 = vadd.f32 %v5552, %v5586
        %v5649 = vadd.f32 %v5553, %v5588
        %v5650 = vadd.f32 %v5554, %v5590
        %v5651 = vadd.f32 %v5555, %v5592
        %v5652 = vadd.f32 %v5556, %v5594
        %v5653 = vadd.f32 %v5557, %v5596
        %v5654 = vadd.f32 %v5558, %v5598
        %v5655 = vadd.f32 %v5559, %v5600
        %v5656 = vadd.f32 %v5560, %v5602
        %v5657 = vadd.f32 %v5561, %v5604
        %v5658 = vadd.f32 %v5562, %v5606
        %v5659 = vadd.f32 %v5563, %v5608
        %v5660 = vadd.f32 %v5564, %v5610
        %v5661 = vadd.f32 %v5565, %v5612
        %v5662 = vadd.f32 %v5566, %v5614
        %v5687 = vrot.slane %v5643, 7
        %vm5688 = vcmask 1041409
        %v5689 = vsel %vm5688, %v5687, %v5639
        %vm5690 = vcmask 1045509
        %v5691 = vsel %vm5690, %v5687, %v5689
        %v5692 = vrot.slane %v5647, 6
        %vm5693 = vcmask 1042434
        %v5694 = vsel %vm5693, %v5692, %v5691
        %vm5695 = vcmask 1046534
        %v5696 = vsel %vm5695, %v5692, %v5694
        %v5697 = vrot.slane %v5644, 7
        %v5698 = vsel %vm5688, %v5697, %v5640
        %v5699 = vsel %vm5690, %v5697, %v5698
        %v5700 = vrot.slane %v5648, 6
        %v5701 = vsel %vm5693, %v5700, %v5699
        %v5702 = vsel %vm5695, %v5700, %v5701
        %v5703 = vrot.slane %v5645, 7
        %v5704 = vsel %vm5688, %v5703, %v5641
        %v5705 = vsel %vm5690, %v5703, %v5704
        %v5706 = vrot.slane %v5649, 6
        %v5707 = vsel %vm5693, %v5706, %v5705
        %v5708 = vsel %vm5695, %v5706, %v5707
        %v5709 = vrot.slane %v5646, 7
        %v5710 = vsel %vm5688, %v5709, %v5642
        %v5711 = vsel %vm5690, %v5709, %v5710
        %v5712 = vrot.slane %v5650, 6
        %v5713 = vsel %vm5693, %v5712, %v5711
        %v5714 = vsel %vm5695, %v5712, %v5713
        %v5715 = vrot.slane %v5655, 7
        %v5716 = vsel %vm5688, %v5715, %v5651
        %v5717 = vsel %vm5690, %v5715, %v5716
        %v5718 = vrot.slane %v5659, 6
        %v5719 = vsel %vm5693, %v5718, %v5717
        %v5720 = vsel %vm5695, %v5718, %v5719
        %v5721 = vrot.slane %v5656, 7
        %v5722 = vsel %vm5688, %v5721, %v5652
        %v5723 = vsel %vm5690, %v5721, %v5722
        %v5724 = vrot.slane %v5660, 6
        %v5725 = vsel %vm5693, %v5724, %v5723
        %v5726 = vsel %vm5695, %v5724, %v5725
        %v5727 = vrot.slane %v5657, 7
        %v5728 = vsel %vm5688, %v5727, %v5653
        %v5729 = vsel %vm5690, %v5727, %v5728
        %v5730 = vrot.slane %v5661, 6
        %v5731 = vsel %vm5693, %v5730, %v5729
        %v5732 = vsel %vm5695, %v5730, %v5731
        %v5733 = vrot.slane %v5658, 7
        %v5734 = vsel %vm5688, %v5733, %v5654
        %v5735 = vsel %vm5690, %v5733, %v5734
        %v5736 = vrot.slane %v5662, 6
        %v5737 = vsel %vm5693, %v5736, %v5735
        %v5738 = vsel %vm5695, %v5736, %v5737
        %5747 = vst [vmem:[%s1104] sm:$0x77] %v5696
        %5748 = vst [vmem:[%s1104 + $0x8] sm:$0x77] %v5702
        %5749 = vst [vmem:[%s1104 + $0x10] sm:$0x77] %v5708
        %5750 = vst [vmem:[%s1104 + $0x18] sm:$0x77] %v5714
        %5751 = vst [vmem:[%s1104 + $0x20] sm:$0x77] %v5720
        %5752 = vst [vmem:[%s1104 + $0x28] sm:$0x77] %v5726
        %5753 = vst [vmem:[%s1104 + $0x30] sm:$0x77] %v5732
        %5754 = vst [vmem:[%s1104 + $0x38] sm:$0x77] %v5738
        %s5755 = sand.u32 %s196, 1
        %s5756 = sand.u32 %s196, 1
        %s5757 = smul.addr %s5756, 64
        %s5758 = scalar_lea.vmem [#allocation6], %s5757
        // Predicated region
        $region99: #{smpl_forward.1} parent=85 // pred_check
          %p5759 = pneg %p206
        $region100: #{smpl_forward.1} parent=85 // pred_check_branch
          %5761 = sbr.rel (%p5759) target = $region102
        $region101: #{smpl_forward.1} parent=85 // pred_region
          %s5762 = smul.u32 8, %s21
          %s5763 = smul.addr %s5762, 4
          %s5764 = scalar_lea.vmem %s7, %s5763
          // Predicated region
          $region103: #{smpl_forward.1} parent=101 // pred_check
            _
          $region104: #{smpl_forward.1} parent=101 // pred_check_branch
            %5766 = sbr.rel (0) target = $region106
          $region105: #{smpl_forward.1} parent=101 // pred_region
            // Predicated region
            $region107: #{smpl_forward.1} parent=105 // pred_check
              _
            $region108: #{smpl_forward.1} parent=105 // pred_check_branch
              %5768 = sbr.rel (0) target = $region110
            $region109: #{smpl_forward.1} parent=105 // pred_region
              loop: start=0, step=1, limit=1
              $region111: #{smpl_forward.1} parent=109 // loop_pre_header
                _
              $region112: #{smpl_forward.1} parent=109 // loop_header
                %s5770 = sphi 0, %s5774
                %p5771 = scmp.ge.s32.totalorder %s5770, 1
                %s5775 = sphi %s5758, %s5758
                %s5776 = sphi %s5764, %s5764
              $region113: #{smpl_forward.1} parent=109 // loop_header_branch
                %5773 = sbr.rel (%p5771) target = $region117
              $region114: #{smpl_forward.1} parent=109 // loop_body
                %v5777 = vld [vmem:[%s5775] sm:$0xff]
                %5778 = vst [vmem:[%s5776] sm:$0xff] %v5777
                %v5779 = vld [vmem:[%s5775 + $0x8] sm:$0xff]
                %5780 = vst [vmem:[%s5776 + $0x8] sm:$0xff] %v5779
                %v5781 = vld [vmem:[%s5775 + $0x10] sm:$0xff]
                %5782 = vst [vmem:[%s5776 + $0x10] sm:$0xff] %v5781
                %v5783 = vld [vmem:[%s5775 + $0x18] sm:$0xff]
                %5784 = vst [vmem:[%s5776 + $0x18] sm:$0xff] %v5783
                %v5785 = vld [vmem:[%s5775 + $0x20] sm:$0xff]
                %5786 = vst [vmem:[%s5776 + $0x40] sm:$0xff] %v5785
                %v5787 = vld [vmem:[%s5775 + $0x28] sm:$0xff]
                %5788 = vst [vmem:[%s5776 + $0x48] sm:$0xff] %v5787
                %v5789 = vld [vmem:[%s5775 + $0x30] sm:$0xff]
                %5790 = vst [vmem:[%s5776 + $0x50] sm:$0xff] %v5789
                %v5791 = vld [vmem:[%s5775 + $0x38] sm:$0xff]
                %5792 = vst [vmem:[%s5776 + $0x58] sm:$0xff] %v5791
              $region115: #{smpl_forward.1} parent=109 // loop_footer
                %s5774 = sadd.s32 1, %s5770
              $region116: #{smpl_forward.1} parent=109 // loop_footer_branch
                %5769 = sbr.rel target = $region112
              $region117: #{smpl_forward.1} parent=109 // loop_exit
                _
            $region110: #{smpl_forward.1} parent=105 // pred_fallthru
              _
            // Predicated region
            $region118: #{smpl_forward.1} parent=105 // pred_check
              _
            $region119: #{smpl_forward.1} parent=105 // pred_check_branch
              %5794 = sbr.rel target = $region121
            $region120: #{smpl_forward.1} parent=105 // pred_region
              _
            $region121: #{smpl_forward.1} parent=105 // pred_fallthru
              _
          $region106: #{smpl_forward.1} parent=101 // pred_fallthru
            _
          %5795 = vnop
        $region102: #{smpl_forward.1} parent=85 // pred_fallthru
          _
      $region86: #{smpl_forward.1} parent=5 // pred_fallthru
        _
      %p5796 = scmp.le.s32.totalorder 2, %s16
      // Predicated region
      $region122: #{smpl_forward.1} parent=5 // pred_check
        %p5797 = pneg %p5796
      $region123: #{smpl_forward.1} parent=5 // pred_check_branch
        %5799 = sbr.rel (%p5797) target = $region125
      $region124: #{smpl_forward.1} parent=5 // pred_region
        %s5800 = ssub.s32 %s16, 2
        // Predicated region
        $region126: #{smpl_forward.1} parent=124 // pred_check
          %p5801 = pneg %p212
        $region127: #{smpl_forward.1} parent=124 // pred_check_branch
          %5803 = sbr.rel (%p5801) target = $region129
        $region128: #{smpl_forward.1} parent=124 // pred_region
          %s5804 = sand.u32 %s197, 1
          %s5805 = sand.u32 %s197, 1
          %s5806 = smul.addr %s5805, 64
          %s5807 = scalar_lea.vmem [#allocation6], %s5806
        $region129: #{smpl_forward.1} parent=124 // pred_fallthru
          _
      $region125: #{smpl_forward.1} parent=5 // pred_fallthru
        _
    $region6: #{smpl_forward.1} parent=1 // loop_footer
      %s20 = sadd.s32 1, %s16
    $region7: #{smpl_forward.1} parent=1 // loop_footer_branch
      %15 = sbr.rel target = $region3
    $region8: #{smpl_forward.1} parent=1 // loop_exit
      _
    %5808 = vsyncpa [#allocation5], 1
    %s5809 = scalar_lea.sflag [#allocation5], 1
    %5810 = vsyncpa %s5809, 1

</llo_original>
